<compile_context>
chip_gen: v7x
topology: tpu7x:2x2x1
jax: 0.10.0
libtpu: 0.0.40
codegen_flags: <defaults>
</compile_context>

<pallas_src>
import functools

import jax
import jax.numpy as jnp
import numpy as np
from jax.experimental import pallas as pl
from jax.experimental.pallas import tpu as pltpu


# ----------------------------- in-kernel helpers -----------------------------

def _fast_recip(x):
    # EUP approximate reciprocal + one Newton-Raphson step: avoids a full-precision VALU divide
    # while keeping ~f32 accuracy (the approximation runs in the otherwise-idle EUP slot).
    r = pl.reciprocal(x, approx=True)
    return r * (2.0 - x * r)


def _erf(x):
    # Abramowitz & Stegun 7.1.26 rational approximation (max abs err ~1.5e-7).
    a1, a2, a3, a4, a5 = 0.254829592, -0.284496736, 1.421413741, -1.453152027, 1.061405429
    p = 0.3275911
    sgn = jnp.where(x >= 0.0, 1.0, -1.0)
    ax = jnp.abs(x)
    t = _fast_recip(1.0 + p * ax)
    poly = ((((a5 * t + a4) * t + a3) * t + a2) * t + a1) * t
    return sgn * (1.0 - poly * jnp.exp(-ax * ax))


def _gelu(x):
    return 0.5 * x * (1.0 + _erf(x * 0.7071067811865476))


def _layernorm(v, g, b, eps=1e-5):
    mu = jnp.mean(v, axis=-1, keepdims=True)
    var = jnp.mean((v - mu) ** 2, axis=-1, keepdims=True)
    return (v - mu) * jax.lax.rsqrt(var + eps) * g + b


# ------------------------- head split / merge relayouts -----------------------

def _heads_split(t, Bt, S, H, hd, mode):
    """(Bt*S, H*hd) -> (Bt*H, S, hd).  Columns are '(head c)' ordered, rows are batch-major."""
    M = Bt * S
    if mode == "slice":          # proven fallback: per-(b,h) lane slices + stack
        blocks = [t[b * S:(b + 1) * S, h * hd:(h + 1) * hd]
                  for b in range(Bt) for h in range(H)]
        return jnp.stack(blocks, axis=0)
    if mode == "einshape":
        th = pltpu.einshape("m(hc)->hmc", t, h=H, c=hd)                 # (H, M, hd)
    else:                        # "transpose"
        th = jnp.transpose(t.reshape(M, H, hd), (1, 0, 2))              # (H, M, hd)
    th = th.reshape(H, Bt, S, hd)                                       # free (S % 8 == 0)
    return jnp.transpose(th, (1, 0, 2, 3)).reshape(Bt * H, S, hd)       # leading-dim swap only


def _heads_merge(o, Bt, S, H, hd, mode):
    """(Bt*H, S, hd) -> (Bt*S, H*hd), '(head c)' column order."""
    M = Bt * S
    if mode == "slice":
        rows = [jnp.concatenate([o[b * H + h] for h in range(H)], axis=-1) for b in range(Bt)]
        return jnp.concatenate(rows, axis=0)
    oh = jnp.transpose(o.reshape(Bt, H, S, hd), (1, 0, 2, 3)).reshape(H, M, hd)
    if mode == "einshape":
        return pltpu.einshape("hmc->m(hc)", oh)
    return jnp.transpose(oh, (1, 0, 2)).reshape(M, H * hd)


# --------------------------------- kernel ------------------------------------

def btc_subblock_kernel(x_ref, n1g_ref, n1b_ref, wqkv_ref, bqkv_ref,
                        wout_ref, bout_ref, n2g_ref, n2b_ref,
                        w1_ref, b1_ref, w2_ref, b2_ref, o_ref,
                        *, n_heads, direction, head_mode, roll_shifts):
    Bt, S, D = x_ref.shape
    H = n_heads
    hd = D // H
    M = Bt * S
    cdt = wqkv_ref.dtype                                   # MXU operand dtype (bf16 in prod)
    factor = 1.0 / float(hd) ** 0.5

    x = x_ref[...].astype(jnp.float32).reshape(M, D)       # flat (rows, dim); reshape is free

    # ---------------- norm1 -> multi-head self-attention -> residual ----------------
    xn = _layernorm(x, n1g_ref[0], n1b_ref[0])
    qkv = jnp.dot(xn.astype(cdt), wqkv_ref[...],
                  preferred_element_type=jnp.float32) + bqkv_ref[0]     # (M, 3D) f32

    # wrapper permuted the projection columns to [Q_allheads | K_allheads | V_allheads]
    q = qkv[:, :D].astype(cdt)                             # lane-aligned (D multiple of 128)
    k = qkv[:, D:2 * D].astype(cdt)
    v = qkv[:, 2 * D:].astype(cdt)
    qh = _heads_split(q, Bt, S, H, hd, head_mode)          # (Bt*H, S, hd)
    kh = _heads_split(k, Bt, S, H, hd, head_mode)
    vh = _heads_split(v, Bt, S, H, hd, head_mode)

    # head-batched QK^T / softmax / PV (single dot_general per stage).
    # TODO(synk): flash-style query-tile + online-softmax over K blocks for long S (v7x 64 MiB).
    s = jax.lax.dot_general(qh, kh, (((2,), (2,)), ((0,), (0,))),
                            preferred_element_type=jnp.float32) * factor          # (G, S, S)
    if direction in ("left", "right"):
        row = jax.lax.broadcasted_iota(jnp.int32, (S, S), 0)
        col = jax.lax.broadcasted_iota(jnp.int32, (S, S), 1)
        hide = (col > row) if direction == "right" else (col < row)
        s = s + jnp.where(hide, jnp.float32(-1e30), jnp.float32(0.0))  # broadcast over (b, h)
    s = s - jnp.max(s, axis=-1, keepdims=True)
    p = jnp.exp(s)
    p = p * _fast_recip(jnp.sum(p, axis=-1, keepdims=True))
    o = jax.lax.dot_general(p.astype(cdt), vh, (((2,), (1,)), ((0,), (0,))),
                            preferred_element_type=jnp.float32)                    # (G, S, hd)

    attn = _heads_merge(o.astype(cdt), Bt, S, H, hd, head_mode)                    # (M, D)
    msa = jnp.dot(attn, wout_ref[...], preferred_element_type=jnp.float32) + bout_ref[0]
    x = msa + x
    # TODO(synk): dropout1 / dropout2 / cnn Dropout act as identity (inference semantics).

    # --------- norm2 -> Conv1d(k=3,pad=1) -> GELU -> Conv1d -> GELU -> residual ---------
    xn2 = _layernorm(x, n2g_ref[0], n2b_ref[0])

    # per-sequence boundary masks (Bt sequences of length S laid out back-to-back in M rows)
    pos = jax.lax.broadcasted_iota(jnp.int32, (M, 1), 0)
    is_first = functools.reduce(jnp.logical_or, [pos == b * S for b in range(Bt)])
    is_last = functools.reduce(jnp.logical_or, [pos == b * S + (S - 1) for b in range(Bt)])
    not_first = jnp.logical_not(is_first)
    not_last = jnp.logical_not(is_last)

    def shift_rows(vv):
        # v_prev[t] = vv[t-1] (0 at each sequence start); v_next[t] = vv[t+1] (0 at each end).
        if roll_shifts is not None:
            ps, ns = roll_shifts
            v_prev = pltpu.roll(vv, shift=ps, axis=0)
            v_next = pltpu.roll(vv, shift=ns, axis=0)
        else:
            zrow = jnp.zeros((1, D), vv.dtype)
            v_prev = jnp.concatenate([zrow, vv[:M - 1, :]], axis=0)
            v_next = jnp.concatenate([vv[1:, :], zrow], axis=0)
        v_prev = jnp.where(not_first, v_prev, jnp.zeros_like(v_prev))
        v_next = jnp.where(not_last, v_next, jnp.zeros_like(v_next))
        return v_prev, v_next

    def conv3(vv_f32, w_ref, b_ref):
        # fused 3-tap conv: (M,3D)@(3D,D); taps cast to the compute dtype BEFORE shift/concat
        vv = vv_f32.astype(cdt)
        v_prev, v_next = shift_rows(vv)
        v3 = jnp.concatenate([v_prev, vv, v_next], axis=-1)
        return jnp.dot(v3, w_ref[...], preferred_element_type=jnp.float32) + b_ref[0]

    h1 = _gelu(conv3(xn2, w1_ref, b1_ref))
    h2 = _gelu(conv3(h1, w2_ref, b2_ref))

    o_ref[...] = (h2 + x).reshape(Bt, S, D).astype(o_ref.dtype)


# ------------------------------ feature probes --------------------------------
# Each probe is a tiny, cached pallas_call wrapped in its OWN try/except so only the specific
# optional feature can fall back; the real kernel launch is never exception-guarded.

@functools.lru_cache(maxsize=None)
def _roll_row_shifts(length, dtype_name):
    """Pin down pltpu.roll's sublane-rotation convention for the given dtype.  Returns
    (prev_shift, next_shift) such that roll(v, prev, 0)[t]==v[t-1] and roll(v, next, 0)[t]==v[t+1]
    (mod length), or None -> fall back to zero-padded slice+concat shifts."""
    dt = jnp.dtype(dtype_name)
    try:
        def probe(o_ref):
            rows = jax.lax.broadcasted_iota(jnp.int32, (8, 128), 0).astype(dt)
            o_ref[...] = pltpu.roll(rows, shift=1, axis=0)

        rolled = pl.pallas_call(probe, out_shape=jax.ShapeDtypeStruct((8, 128), dt))()
        row1 = float(np.asarray(jax.device_get(rolled)).astype(np.float32)[1, 0])
    except Exception:
        return None
    if row1 == 0.0:      # jnp.roll convention: out[t] = in[t - shift]
        return 1, length - 1
    if row1 == 2.0:      # opposite convention:  out[t] = in[t + shift]
        return length - 1, 1
    return None


@functools.lru_cache(maxsize=None)
def _head_layout_mode(Bt, S, H, hd, dtype_name):
    """Pick the cheapest head split/merge that lowers AND is numerically correct on this
    jax/Mosaic build: einshape > reshape+leading-dim transpose > per-head lane slices."""
    dt = jnp.dtype(dtype_name)
    M, G = Bt * S, Bt * H
    xf = np.random.RandomState(0).randn(M, H * hd).astype(np.float32)
    xf = np.asarray(jax.device_get(jnp.asarray(xf, dtype=dt))).astype(np.float32)  # round to dt
    want = xf.reshape(Bt, S, H, hd).transpose(0, 2, 1, 3).reshape(G, S, hd)
    x_in = jnp.asarray(xf, dtype=dt)
    for mode in ("einshape", "transpose"):
        try:
            def probe(x_ref, s_ref, m_ref, mode=mode):
                sh = _heads_split(x_ref[...], Bt, S, H, hd, mode)
                s_ref[...] = sh
                m_ref[...] = _heads_merge(sh, Bt, S, H, hd, mode)

            split, merged = jax.block_until_ready(pl.pallas_call(
                probe,
                out_shape=(jax.ShapeDtypeStruct((G, S, hd), dt),
                           jax.ShapeDtypeStruct((M, H * hd), dt)))(x_in))
            got_s = np.asarray(jax.device_get(split)).astype(np.float32)
            got_m = np.asarray(jax.device_get(merged)).astype(np.float32)
            if np.array_equal(got_s, want) and np.array_equal(got_m, xf):
                return mode
        except Exception:
            pass
    return "slice"


@functools.lru_cache(maxsize=None)
def _single_buffer_ok():
    """Can constant-index operands be single-buffered via pipeline_mode=pl.Buffered(1)?"""
    if not hasattr(pl, "Buffered"):
        return False
    try:
        def probe(c_ref, o_ref):
            o_ref[...] = c_ref[...] + 1.0

        out = pl.pallas_call(
            probe,
            grid=(2,),
            in_specs=[pl.BlockSpec((8, 128), lambda i: (0, 0),
                                   pipeline_mode=pl.Buffered(buffer_count=1))],
            out_specs=pl.BlockSpec((8, 128), lambda i: (i, 0)),
            out_shape=jax.ShapeDtypeStruct((16, 128), jnp.float32),
        )(np.ones((8, 128), np.float32))
        jax.block_until_ready(out)
        return True
    except Exception:
        return False


@functools.lru_cache(maxsize=None)
def _vmem_capacity_bytes():
    try:
        return int(pltpu.get_tpu_info().vmem_capacity_bytes)
    except Exception:
        return 64 * 1024 * 1024          # conservative: v7x per-TensorCore VMEM


# --------------------------------- wrapper -----------------------------------

def make_params(raw, n_heads, compute_dtype=jnp.bfloat16):
    """Pre-transpose / permute / stack the PyTorch-layout weights for the kernel.
    bf16 MXU operands are the production default; pass jnp.float32 for strict numerics."""
    D = raw["n1_g"].shape[0]
    hd = D // n_heads
    # permute qkv outputs: torch '(head qkv c)' columns -> '[Q_allheads | K_allheads | V_allheads]'
    perm = np.concatenate([np.arange(h * 3 * hd + j * hd, h * 3 * hd + (j + 1) * hd)
                           for j in range(3) for h in range(n_heads)])
    wdt = compute_dtype
    f32 = jnp.float32

    def conv_w(w):  # (Co, Ci, 3) -> (3*Ci, Co) = [W[:,:,0].T ; W[:,:,1].T ; W[:,:,2].T]
        return jnp.transpose(w, (2, 1, 0)).reshape(3 * D, D).astype(wdt)

    return {
        "n1_g": raw["n1_g"].reshape(1, D).astype(f32),
        "n1_b": raw["n1_b"].reshape(1, D).astype(f32),
        "wqkv_t": raw["wqkv"].T[:, perm].astype(wdt),
        "bqkv": raw["bqkv"][perm].reshape(1, 3 * D).astype(f32),
        "wout_t": raw["wout"].T.astype(wdt),
        "bout": raw["bout"].reshape(1, D).astype(f32),
        "n2_g": raw["n2_g"].reshape(1, D).astype(f32),
        "n2_b": raw["n2_b"].reshape(1, D).astype(f32),
        "w1_t": conv_w(raw["w1"]),
        "b1": raw["b1"].reshape(1, D).astype(f32),
        "w2_t": conv_w(raw["w2"]),
        "b2": raw["b2"].reshape(1, D).astype(f32),
    }


def _estimate_vmem_bytes(Bt, S, D, H, cdt_bytes, x_bytes):
    M, G = Bt * S, Bt * H
    f32 = 4
    weights = 8 * D * D * cdt_bytes + 11 * D * f32          # single-buffered constant operands
    io = 2 * 2 * Bt * S * D * x_bytes                       # double-buffered x / out blocks
    inter = (M * 3 * D * (f32 + 2 * cdt_bytes)              # qkv + q/k/v splits + conv-tap concat
             + 3 * G * S * S * f32                          # scores / probs headroom
             + 12 * M * D * f32)                            # ln / heads / attn / residuals / h1,h2
    return weights + io + inter


def _pick_batch_block(B, S, fits):
    """Largest batch tile (divisor of B) keeping M=Bt*S in an MXU-friendly range within VMEM."""
    best = 1
    for bt in range(1, B + 1):
        if B % bt != 0 or not fits(bt):
            continue
        if bt * S <= 512 or best == 1:
            best = bt
        if bt * S >= 256:        # enough rows to fill the MXU; keep grid parallelism beyond this
            break
    return best


def btc_subblock(x, params, *, n_heads, direction, batch_block=None):
    B, S, D = x.shape
    H = n_heads
    hd = D // H
    cdt = params["wqkv_t"].dtype
    cdt_name = jnp.dtype(cdt).name
    cdt_bytes = jnp.dtype(cdt).itemsize
    x_bytes = jnp.dtype(x.dtype).itemsize

    cap = _vmem_capacity_bytes()
    headroom = 8 * 1024 * 1024
    budget = int(0.6 * (cap - headroom))

    def fits(bt):
        return _estimate_vmem_bytes(bt, S, D, H, cdt_bytes, x_bytes) <= budget

    Bt = batch_block if batch_block is not None else _pick_batch_block(B, S, fits)
    assert B % Bt == 0, (B, Bt)
    # NOTE: on v7x prefer an even grid length (2 TensorCores) when it does not shrink M below 128.

    roll_shifts = _roll_row_shifts(Bt * S, cdt_name)
    head_mode = _head_layout_mode(Bt, S, H, hd, cdt_name)
    single_buffer = _single_buffer_ok()

    kern = functools.partial(btc_subblock_kernel, n_heads=H, direction=direction,
                             head_mode=head_mode, roll_shifts=roll_shifts)

    flops = B * (2 * S * D * 3 * D + 4 * H * S * S * hd + 2 * S * D * D + 2 * 2 * S * 3 * D * D)
    transcendentals = B * (H * S * S + 4 * S * D)
    weight_bytes = sum(int(v.size) * int(v.dtype.itemsize) for v in params.values())
    cost = pl.CostEstimate(flops=int(flops), transcendentals=int(transcendentals),
                           bytes_accessed=int(2 * x.size * x_bytes + weight_bytes))

    vmem_limit = int(min(cap - headroom,
                         max(32 * 1024 * 1024,
                             2 * _estimate_vmem_bytes(Bt, S, D, H, cdt_bytes, x_bytes))))

    def const_spec(shape):
        nd = len(shape)
        idx = lambda *_: (0,) * nd
        if single_buffer:        # constant operands: fetched once, no need for a double buffer
            return pl.BlockSpec(shape, idx, pipeline_mode=pl.Buffered(buffer_count=1))
        return pl.BlockSpec(shape, idx)

    in_specs = [
        pl.BlockSpec((Bt, S, D), lambda b: (b, 0, 0)),     # x, pipelined over the batch grid
        const_spec((1, D)), const_spec((1, D)),            # norm1 gamma / beta
        const_spec((D, 3 * D)), const_spec((1, 3 * D)),    # qkv weight^T (permuted) / bias
        const_spec((D, D)), const_spec((1, D)),            # out weight^T / bias
        const_spec((1, D)), const_spec((1, D)),            # norm2 gamma / beta
        const_spec((3 * D, D)), const_spec((1, D)),        # conv1 fused-tap weight / bias
        const_spec((3 * D, D)), const_spec((1, D)),        # conv2 fused-tap weight / bias
    ]

    return pl.pallas_call(
        kern,
        out_shape=jax.ShapeDtypeStruct((B, S, D), x.dtype),
        grid=(B // Bt,),
        in_specs=in_specs,
        out_specs=pl.BlockSpec((Bt, S, D), lambda b: (b, 0, 0)),
        compiler_params=pltpu.CompilerParams(
            dimension_semantics=("parallel",),
            vmem_limit_bytes=vmem_limit),
        cost_estimate=cost,
    )(x, params["n1_g"], params["n1_b"], params["wqkv_t"], params["bqkv"],
      params["wout_t"], params["bout"], params["n2_g"], params["n2_b"],
      params["w1_t"], params["b1"], params["w2_t"], params["b2"])


# ------------------------- pure-JAX reference (check) -------------------------

def reference(x, raw, n_heads, direction):
    B, S, D = x.shape
    hd = D // n_heads

    def ln(v, g, b, eps=1e-5):
        mu = jnp.mean(v, axis=-1, keepdims=True)
        var = jnp.mean((v - mu) ** 2, axis=-1, keepdims=True)
        return (v - mu) / jnp.sqrt(var + eps) * g + b

    xn = ln(x, raw["n1_g"], raw["n1_b"])
    qkv = xn @ raw["wqkv"].T + raw["bqkv"]
    qkv = qkv.reshape(B, S, n_heads, 3, hd)
    q = qkv[:, :, :, 0].transpose(0, 2, 1, 3)
    k = qkv[:, :, :, 1].transpose(0, 2, 1, 3)
    v = qkv[:, :, :, 2].transpose(0, 2, 1, 3)
    scores = jnp.einsum("bhsc,bhtc->bhst", q, k) / jnp.sqrt(float(hd))
    r = jnp.arange(S)[:, None]
    c = jnp.arange(S)[None, :]
    if direction == "right":
        scores = jnp.where(c > r, -jnp.inf, scores)
    elif direction == "left":
        scores = jnp.where(c < r, -jnp.inf, scores)
    p = jax.nn.softmax(scores, axis=-1)
    o = jnp.einsum("bhst,bhtc->bhsc", p, v).transpose(0, 2, 1, 3).reshape(B, S, D)
    x = o @ raw["wout"].T + raw["bout"] + x

    xn2 = ln(x, raw["n2_g"], raw["n2_b"])

    def conv1d(vv, w, b):   # vv: (B, S, C),  w: (Co, Ci, 3)
        vp = jnp.pad(vv, ((0, 0), (1, 1), (0, 0)))
        return (jnp.einsum("bsc,oc->bso", vp[:, :-2], w[:, :, 0])
                + jnp.einsum("bsc,oc->bso", vp[:, 1:-1], w[:, :, 1])
                + jnp.einsum("bsc,oc->bso", vp[:, 2:], w[:, :, 2]) + b)

    h1 = jax.nn.gelu(conv1d(xn2, raw["w1"], raw["b1"]), approximate=False)
    h2 = jax.nn.gelu(conv1d(h1, raw["w2"], raw["b2"]), approximate=False)
    return h2 + x


# ----------------------------------- main -------------------------------------

if __name__ == "__main__":
    B, S, D, H = 2, 16, 128, 4          # lane-dense: D multiple of 128, S multiple of 8
    direction = "right"

    key = jax.random.PRNGKey(0)
    ks = jax.random.split(key, 13)
    sc = 0.1
    raw = {
        "n1_g": 1.0 + sc * jax.random.normal(ks[0], (D,), jnp.float32),
        "n1_b": sc * jax.random.normal(ks[1], (D,), jnp.float32),
        "wqkv": sc * jax.random.normal(ks[2], (3 * D, D), jnp.float32),   # torch Linear (out, in)
        "bqkv": sc * jax.random.normal(ks[3], (3 * D,), jnp.float32),
        "wout": sc * jax.random.normal(ks[4], (D, D), jnp.float32),
        "bout": sc * jax.random.normal(ks[5], (D,), jnp.float32),
        "n2_g": 1.0 + sc * jax.random.normal(ks[6], (D,), jnp.float32),
        "n2_b": sc * jax.random.normal(ks[7], (D,), jnp.float32),
        "w1": sc * jax.random.normal(ks[8], (D, D, 3), jnp.float32),      # torch Conv1d (Co, Ci, K)
        "b1": sc * jax.random.normal(ks[9], (D,), jnp.float32),
        "w2": sc * jax.random.normal(ks[10], (D, D, 3), jnp.float32),
        "b2": sc * jax.random.normal(ks[11], (D,), jnp.float32),
    }
    x = jax.random.normal(ks[12], (B, S, D), jnp.float32)

    ref = reference(x, raw, H, direction)

    # strict check: f32 MXU operands (matches the PyTorch module numerics)
    params_f32 = make_params(raw, H, jnp.float32)
    out = jax.block_until_ready(btc_subblock(x, params_f32, n_heads=H, direction=direction))
    assert out.shape == (B, S, D)
    assert bool(jnp.all(jnp.isfinite(out)))
    np.testing.assert_allclose(np.asarray(out), np.asarray(ref), rtol=1e-3, atol=1e-3)

    # production default: bf16 MXU operands, f32 accumulation / LayerNorm / softmax / residuals
    params_bf16 = make_params(raw, H)
    out_bf16 = jax.block_until_ready(btc_subblock(x, params_bf16, n_heads=H, direction=direction))
    assert bool(jnp.all(jnp.isfinite(out_bf16)))
    np.testing.assert_allclose(np.asarray(out_bf16), np.asarray(ref), rtol=1e-1, atol=1e-1)

    print("KERNEL_OK")
</pallas_src>

<mosaic_0001>
module attributes {stable_mosaic.version = 11 : i64} {
  func.func @probe(%arg0: memref<32x128xf32, #tpu.memory_space<vmem>>, %arg1: memref<8x16x32xf32, #tpu.memory_space<vmem>>, %arg2: memref<32x128xf32, #tpu.memory_space<vmem>>) attributes {dimension_semantics = [], scalar_prefetch = 0 : i64, scratch_operands = 0 : i64, tpu.core_type = #tpu.core_type<tc>} {
    %c0 = arith.constant 0 : index
    %c0_0 = arith.constant 0 : index
    %0 = vector.load %arg0[%c0, %c0_0] : memref<32x128xf32, #tpu.memory_space<vmem>>, vector<32x128xf32>
    %1 = vector.shape_cast %0 : vector<32x128xf32> to vector<32x4x32xf32>
    %2 = tpu.transpose %1, [1, 0, 2] : vector<32x4x32xf32> -> vector<4x32x32xf32>
    %3 = vector.shape_cast %2 : vector<4x32x32xf32> to vector<4x2x16x32xf32>
    %4 = tpu.transpose %3, [1, 0, 2, 3] : vector<4x2x16x32xf32> -> vector<2x4x16x32xf32>
    %5 = vector.shape_cast %4 : vector<2x4x16x32xf32> to vector<8x16x32xf32>
    %c0_1 = arith.constant 0 : index
    %c0_2 = arith.constant 0 : index
    %c0_3 = arith.constant 0 : index
    %6 = vector.load %arg1[%c0_1, %c0_2, %c0_3] : memref<8x16x32xf32, #tpu.memory_space<vmem>>, vector<8x16x32xf32>
    tpu.vector_store %arg1[%c0_1, %c0_2, %c0_3], %5 {strides = array<i32>} : memref<8x16x32xf32, #tpu.memory_space<vmem>>, vector<8x16x32xf32>,
    %7 = vector.shape_cast %5 : vector<8x16x32xf32> to vector<2x4x16x32xf32>
    %8 = tpu.transpose %7, [1, 0, 2, 3] : vector<2x4x16x32xf32> -> vector<4x2x16x32xf32>
    %9 = vector.shape_cast %8 : vector<4x2x16x32xf32> to vector<4x32x32xf32>
    %10 = tpu.transpose %9, [1, 0, 2] : vector<4x32x32xf32> -> vector<32x4x32xf32>
    %11 = vector.shape_cast %10 : vector<32x4x32xf32> to vector<32x128xf32>
    %c0_4 = arith.constant 0 : index
    %c0_5 = arith.constant 0 : index
    %12 = vector.load %arg2[%c0_4, %c0_5] : memref<32x128xf32, #tpu.memory_space<vmem>>, vector<32x128xf32>
    tpu.vector_store %arg2[%c0_4, %c0_5], %11 {strides = array<i32>} : memref<32x128xf32, #tpu.memory_space<vmem>>, vector<32x128xf32>,
    return
  }
}

module attributes {stable_mosaic.version = 11 : i64} {
  func.func @probe(%arg0: i32, %arg1: memref<8x128xf32, #tpu.memory_space<vmem>>, %arg2: memref<8x128xf32, #tpu.memory_space<vmem>>) attributes {dimension_semantics = [#tpu.dimension_semantics<arbitrary>], iteration_bounds = array<i64: 2>, scalar_prefetch = 0 : i64, scratch_operands = 0 : i64, tpu.core_type = #tpu.core_type<tc>, window_params = [{pipeline_mode = #tpu.pipeline_mode<synchronous>, transform_indices = @transform_0, window_bounds = array<i64: 8, 128>}, {transform_indices = @transform_1, window_bounds = array<i64: 8, 128>}]} {
    %c0 = arith.constant 0 : index
    %c0_0 = arith.constant 0 : index
    %0 = vector.load %arg1[%c0, %c0_0] : memref<8x128xf32, #tpu.memory_space<vmem>>, vector<8x128xf32>
    %cst = arith.constant 1.000000e+00 : f32
    %1 = vector.broadcast %cst : f32 to vector<8x128xf32>
    %2 = arith.addf %0, %1 : vector<8x128xf32>
    %c0_1 = arith.constant 0 : index
    %c0_2 = arith.constant 0 : index
    %3 = vector.load %arg2[%c0_1, %c0_2] : memref<8x128xf32, #tpu.memory_space<vmem>>, vector<8x128xf32>
    tpu.vector_store %arg2[%c0_1, %c0_2], %2 {strides = array<i32>} : memref<8x128xf32, #tpu.memory_space<vmem>>, vector<8x128xf32>,
    return
  }
  func.func @transform_0(%arg0: i32) -> (i32, i32) {
    %c0_i32 = arith.constant 0 : i32
    %c0_i32_0 = arith.constant 0 : i32
    %c0_i32_1 = arith.constant 0 : i32
    return %c0_i32, %c0_i32_0 : i32, i32
  }
  func.func @transform_1(%arg0: i32) -> (i32, i32) {
    %c0_i32 = arith.constant 0 : i32
    %c0_i32_0 = arith.constant 0 : i32
    return %arg0, %c0_i32 : i32, i32
  }
}

module attributes {stable_mosaic.version = 11 : i64} {
  func.func @btc_subblock_kernel(%arg0: i32, %arg1: memref<2x16x128xf32, #tpu.memory_space<vmem>>, %arg2: memref<1x128xf32, #tpu.memory_space<vmem>>, %arg3: memref<1x128xf32, #tpu.memory_space<vmem>>, %arg4: memref<128x384xf32, #tpu.memory_space<vmem>>, %arg5: memref<1x384xf32, #tpu.memory_space<vmem>>, %arg6: memref<128x128xf32, #tpu.memory_space<vmem>>, %arg7: memref<1x128xf32, #tpu.memory_space<vmem>>, %arg8: memref<1x128xf32, #tpu.memory_space<vmem>>, %arg9: memref<1x128xf32, #tpu.memory_space<vmem>>, %arg10: memref<384x128xf32, #tpu.memory_space<vmem>>, %arg11: memref<1x128xf32, #tpu.memory_space<vmem>>, %arg12: memref<384x128xf32, #tpu.memory_space<vmem>>, %arg13: memref<1x128xf32, #tpu.memory_space<vmem>>, %arg14: memref<2x16x128xf32, #tpu.memory_space<vmem>>) attributes {dimension_semantics = [#tpu.dimension_semantics<parallel>], iteration_bounds = array<i64: 1>, scalar_prefetch = 0 : i64, scratch_operands = 0 : i64, tpu.core_type = #tpu.core_type<tc>, window_params = [{transform_indices = @transform_0, window_bounds = array<i64: 2, 16, 128>}, {pipeline_mode = #tpu.pipeline_mode<synchronous>, transform_indices = @transform_1, window_bounds = array<i64: 1, 128>}, {pipeline_mode = #tpu.pipeline_mode<synchronous>, transform_indices = @transform_2, window_bounds = array<i64: 1, 128>}, {pipeline_mode = #tpu.pipeline_mode<synchronous>, transform_indices = @transform_3, window_bounds = array<i64: 128, 384>}, {pipeline_mode = #tpu.pipeline_mode<synchronous>, transform_indices = @transform_4, window_bounds = array<i64: 1, 384>}, {pipeline_mode = #tpu.pipeline_mode<synchronous>, transform_indices = @transform_5, window_bounds = array<i64: 128, 128>}, {pipeline_mode = #tpu.pipeline_mode<synchronous>, transform_indices = @transform_6, window_bounds = array<i64: 1, 128>}, {pipeline_mode = #tpu.pipeline_mode<synchronous>, transform_indices = @transform_7, window_bounds = array<i64: 1, 128>}, {pipeline_mode = #tpu.pipeline_mode<synchronous>, transform_indices = @transform_8, window_bounds = array<i64: 1, 128>}, {pipeline_mode = #tpu.pipeline_mode<synchronous>, transform_indices = @transform_9, window_bounds = array<i64: 384, 128>}, {pipeline_mode = #tpu.pipeline_mode<synchronous>, transform_indices = @transform_10, window_bounds = array<i64: 1, 128>}, {pipeline_mode = #tpu.pipeline_mode<synchronous>, transform_indices = @transform_11, window_bounds = array<i64: 384, 128>}, {pipeline_mode = #tpu.pipeline_mode<synchronous>, transform_indices = @transform_12, window_bounds = array<i64: 1, 128>}, {transform_indices = @transform_13, window_bounds = array<i64: 2, 16, 128>}]} {
    %c0 = arith.constant 0 : index
    %c0_0 = arith.constant 0 : index
    %c0_1 = arith.constant 0 : index
    %0 = vector.load %arg1[%c0, %c0_0, %c0_1] : memref<2x16x128xf32, #tpu.memory_space<vmem>>, vector<2x16x128xf32>
    %1 = vector.shape_cast %0 : vector<2x16x128xf32> to vector<32x128xf32>
    %c0_2 = arith.constant 0 : index
    %c0_3 = arith.constant 0 : index
    %2 = vector.load %arg2[%c0_2, %c0_3] : memref<1x128xf32, #tpu.memory_space<vmem>>, vector<1x128xf32>
    %3 = vector.shape_cast %2 : vector<1x128xf32> to vector<128xf32>
    %c0_4 = arith.constant 0 : index
    %c0_5 = arith.constant 0 : index
    %4 = vector.load %arg3[%c0_4, %c0_5] : memref<1x128xf32, #tpu.memory_space<vmem>>, vector<1x128xf32>
    %5 = vector.shape_cast %4 : vector<1x128xf32> to vector<128xf32>
    %cst = arith.constant dense<0.000000e+00> : vector<32xf32>
    %6 = vector.multi_reduction <add>, %1, %cst [1] : vector<32x128xf32> to vector<32xf32>
    %7 = vector.shape_cast %6 : vector<32xf32> to vector<32x1xf32>
    %cst_6 = arith.constant 1.280000e+02 : f32
    %8 = vector.broadcast %cst_6 : f32 to vector<32x1xf32>
    %9 = arith.divf %7, %8 : vector<32x1xf32>
    %10 = vector.broadcast %9 : vector<32x1xf32> to vector<32x128xf32>
    %11 = arith.subf %1, %10 : vector<32x128xf32>
    %12 = arith.mulf %11, %11 : vector<32x128xf32>
    %cst_7 = arith.constant dense<0.000000e+00> : vector<32xf32>
    %13 = vector.multi_reduction <add>, %12, %cst_7 [1] : vector<32x128xf32> to vector<32xf32>
    %14 = vector.shape_cast %13 : vector<32xf32> to vector<32x1xf32>
    %cst_8 = arith.constant 1.280000e+02 : f32
    %15 = vector.broadcast %cst_8 : f32 to vector<32x1xf32>
    %16 = arith.divf %14, %15 : vector<32x1xf32>
    %17 = vector.broadcast %9 : vector<32x1xf32> to vector<32x128xf32>
    %18 = arith.subf %1, %17 : vector<32x128xf32>
    %cst_9 = arith.constant 9.99999974E-6 : f32
    %19 = vector.broadcast %cst_9 : f32 to vector<32x1xf32>
    %20 = arith.addf %16, %19 : vector<32x1xf32>
    %21 = math.rsqrt %20 : vector<32x1xf32>
    %22 = vector.broadcast %21 : vector<32x1xf32> to vector<32x128xf32>
    %23 = arith.mulf %18, %22 : vector<32x128xf32>
    %24 = vector.shape_cast %3 : vector<128xf32> to vector<1x128xf32>
    %25 = vector.broadcast %24 : vector<1x128xf32> to vector<32x128xf32>
    %26 = arith.mulf %23, %25 : vector<32x128xf32>
    %27 = vector.shape_cast %5 : vector<128xf32> to vector<1x128xf32>
    %28 = vector.broadcast %27 : vector<1x128xf32> to vector<32x128xf32>
    %29 = arith.addf %26, %28 : vector<32x128xf32>
    %c0_10 = arith.constant 0 : index
    %c0_11 = arith.constant 0 : index
    %30 = vector.load %arg4[%c0_10, %c0_11] : memref<128x384xf32, #tpu.memory_space<vmem>>, vector<128x384xf32>
    %cst_12 = arith.constant dense<0.000000e+00> : vector<32x384xf32>
    %31 = tpu.matmul %29, %30, %cst_12 {dimension_numbers = #tpu.dot_dimension_numbers<[1], [0], [0], [1], [0, 0, 1, 1], [], []>} : vector<32x128xf32>, vector<128x384xf32>, vector<32x384xf32> -> vector<32x384xf32>
    %c0_13 = arith.constant 0 : index
    %c0_14 = arith.constant 0 : index
    %32 = vector.load %arg5[%c0_13, %c0_14] : memref<1x384xf32, #tpu.memory_space<vmem>>, vector<1x384xf32>
    %33 = vector.shape_cast %32 : vector<1x384xf32> to vector<384xf32>
    %34 = vector.shape_cast %33 : vector<384xf32> to vector<1x384xf32>
    %35 = vector.broadcast %34 : vector<1x384xf32> to vector<32x384xf32>
    %36 = arith.addf %31, %35 : vector<32x384xf32>
    %37 = vector.extract_strided_slice %36 {offsets = [0, 0], sizes = [32, 128], strides = [1, 1]} : vector<32x384xf32> to vector<32x128xf32>
    %38 = vector.extract_strided_slice %36 {offsets = [0, 128], sizes = [32, 128], strides = [1, 1]} : vector<32x384xf32> to vector<32x128xf32>
    %39 = vector.extract_strided_slice %36 {offsets = [0, 256], sizes = [32, 128], strides = [1, 1]} : vector<32x384xf32> to vector<32x128xf32>
    %40 = vector.extract_strided_slice %37 {offsets = [0, 0], sizes = [16, 32], strides = [1, 1]} : vector<32x128xf32> to vector<16x32xf32>
    %41 = vector.extract_strided_slice %37 {offsets = [0, 32], sizes = [16, 32], strides = [1, 1]} : vector<32x128xf32> to vector<16x32xf32>
    %42 = vector.extract_strided_slice %37 {offsets = [0, 64], sizes = [16, 32], strides = [1, 1]} : vector<32x128xf32> to vector<16x32xf32>
    %43 = vector.extract_strided_slice %37 {offsets = [0, 96], sizes = [16, 32], strides = [1, 1]} : vector<32x128xf32> to vector<16x32xf32>
    %44 = vector.extract_strided_slice %37 {offsets = [16, 0], sizes = [16, 32], strides = [1, 1]} : vector<32x128xf32> to vector<16x32xf32>
    %45 = vector.extract_strided_slice %37 {offsets = [16, 32], sizes = [16, 32], strides = [1, 1]} : vector<32x128xf32> to vector<16x32xf32>
    %46 = vector.extract_strided_slice %37 {offsets = [16, 64], sizes = [16, 32], strides = [1, 1]} : vector<32x128xf32> to vector<16x32xf32>
    %47 = vector.extract_strided_slice %37 {offsets = [16, 96], sizes = [16, 32], strides = [1, 1]} : vector<32x128xf32> to vector<16x32xf32>
    %48 = vector.shape_cast %40 : vector<16x32xf32> to vector<1x16x32xf32>
    %49 = vector.shape_cast %41 : vector<16x32xf32> to vector<1x16x32xf32>
    %50 = vector.shape_cast %42 : vector<16x32xf32> to vector<1x16x32xf32>
    %51 = vector.shape_cast %43 : vector<16x32xf32> to vector<1x16x32xf32>
    %52 = vector.shape_cast %44 : vector<16x32xf32> to vector<1x16x32xf32>
    %53 = vector.shape_cast %45 : vector<16x32xf32> to vector<1x16x32xf32>
    %54 = vector.shape_cast %46 : vector<16x32xf32> to vector<1x16x32xf32>
    %55 = vector.shape_cast %47 : vector<16x32xf32> to vector<1x16x32xf32>
    %56 = tpu.concatenate %48, %49, %50, %51, %52, %53, %54, %55 in 0 : vector<1x16x32xf32>, vector<1x16x32xf32>, vector<1x16x32xf32>, vector<1x16x32xf32>, vector<1x16x32xf32>, vector<1x16x32xf32>, vector<1x16x32xf32>, vector<1x16x32xf32> -> vector<8x16x32xf32>
    %57 = vector.extract_strided_slice %38 {offsets = [0, 0], sizes = [16, 32], strides = [1, 1]} : vector<32x128xf32> to vector<16x32xf32>
    %58 = vector.extract_strided_slice %38 {offsets = [0, 32], sizes = [16, 32], strides = [1, 1]} : vector<32x128xf32> to vector<16x32xf32>
    %59 = vector.extract_strided_slice %38 {offsets = [0, 64], sizes = [16, 32], strides = [1, 1]} : vector<32x128xf32> to vector<16x32xf32>
    %60 = vector.extract_strided_slice %38 {offsets = [0, 96], sizes = [16, 32], strides = [1, 1]} : vector<32x128xf32> to vector<16x32xf32>
    %61 = vector.extract_strided_slice %38 {offsets = [16, 0], sizes = [16, 32], strides = [1, 1]} : vector<32x128xf32> to vector<16x32xf32>
    %62 = vector.extract_strided_slice %38 {offsets = [16, 32], sizes = [16, 32], strides = [1, 1]} : vector<32x128xf32> to vector<16x32xf32>
    %63 = vector.extract_strided_slice %38 {offsets = [16, 64], sizes = [16, 32], strides = [1, 1]} : vector<32x128xf32> to vector<16x32xf32>
    %64 = vector.extract_strided_slice %38 {offsets = [16, 96], sizes = [16, 32], strides = [1, 1]} : vector<32x128xf32> to vector<16x32xf32>
    %65 = vector.shape_cast %57 : vector<16x32xf32> to vector<1x16x32xf32>
    %66 = vector.shape_cast %58 : vector<16x32xf32> to vector<1x16x32xf32>
    %67 = vector.shape_cast %59 : vector<16x32xf32> to vector<1x16x32xf32>
    %68 = vector.shape_cast %60 : vector<16x32xf32> to vector<1x16x32xf32>
    %69 = vector.shape_cast %61 : vector<16x32xf32> to vector<1x16x32xf32>
    %70 = vector.shape_cast %62 : vector<16x32xf32> to vector<1x16x32xf32>
    %71 = vector.shape_cast %63 : vector<16x32xf32> to vector<1x16x32xf32>
    %72 = vector.shape_cast %64 : vector<16x32xf32> to vector<1x16x32xf32>
    %73 = tpu.concatenate %65, %66, %67, %68, %69, %70, %71, %72 in 0 : vector<1x16x32xf32>, vector<1x16x32xf32>, vector<1x16x32xf32>, vector<1x16x32xf32>, vector<1x16x32xf32>, vector<1x16x32xf32>, vector<1x16x32xf32>, vector<1x16x32xf32> -> vector<8x16x32xf32>
    %74 = vector.extract_strided_slice %39 {offsets = [0, 0], sizes = [16, 32], strides = [1, 1]} : vector<32x128xf32> to vector<16x32xf32>
    %75 = vector.extract_strided_slice %39 {offsets = [0, 32], sizes = [16, 32], strides = [1, 1]} : vector<32x128xf32> to vector<16x32xf32>
    %76 = vector.extract_strided_slice %39 {offsets = [0, 64], sizes = [16, 32], strides = [1, 1]} : vector<32x128xf32> to vector<16x32xf32>
    %77 = vector.extract_strided_slice %39 {offsets = [0, 96], sizes = [16, 32], strides = [1, 1]} : vector<32x128xf32> to vector<16x32xf32>
    %78 = vector.extract_strided_slice %39 {offsets = [16, 0], sizes = [16, 32], strides = [1, 1]} : vector<32x128xf32> to vector<16x32xf32>
    %79 = vector.extract_strided_slice %39 {offsets = [16, 32], sizes = [16, 32], strides = [1, 1]} : vector<32x128xf32> to vector<16x32xf32>
    %80 = vector.extract_strided_slice %39 {offsets = [16, 64], sizes = [16, 32], strides = [1, 1]} : vector<32x128xf32> to vector<16x32xf32>
    %81 = vector.extract_strided_slice %39 {offsets = [16, 96], sizes = [16, 32], strides = [1, 1]} : vector<32x128xf32> to vector<16x32xf32>
    %82 = vector.shape_cast %74 : vector<16x32xf32> to vector<1x16x32xf32>
    %83 = vector.shape_cast %75 : vector<16x32xf32> to vector<1x16x32xf32>
    %84 = vector.shape_cast %76 : vector<16x32xf32> to vector<1x16x32xf32>
    %85 = vector.shape_cast %77 : vector<16x32xf32> to vector<1x16x32xf32>
    %86 = vector.shape_cast %78 : vector<16x32xf32> to vector<1x16x32xf32>
    %87 = vector.shape_cast %79 : vector<16x32xf32> to vector<1x16x32xf32>
    %88 = vector.shape_cast %80 : vector<16x32xf32> to vector<1x16x32xf32>
    %89 = vector.shape_cast %81 : vector<16x32xf32> to vector<1x16x32xf32>
    %90 = tpu.concatenate %82, %83, %84, %85, %86, %87, %88, %89 in 0 : vector<1x16x32xf32>, vector<1x16x32xf32>, vector<1x16x32xf32>, vector<1x16x32xf32>, vector<1x16x32xf32>, vector<1x16x32xf32>, vector<1x16x32xf32>, vector<1x16x32xf32> -> vector<8x16x32xf32>
    %cst_15 = arith.constant dense<0.000000e+00> : vector<8x16x16xf32>
    %91 = tpu.matmul %56, %73, %cst_15 {dimension_numbers = #tpu.dot_dimension_numbers<[2], [2], [1], [1], [0, 0, 0, 1, 1, 1], [0], [0]>} : vector<8x16x32xf32>, vector<8x16x32xf32>, vector<8x16x16xf32> -> vector<8x16x16xf32>
    %cst_16 = arith.constant 0.176776692 : f32
    %92 = vector.broadcast %cst_16 : f32 to vector<8x16x16xf32>
    %93 = arith.mulf %91, %92 : vector<8x16x16xf32>
    %94 = tpu.iota {dimensions = array<i32: 0>} : vector<16x16xi32>
    %95 = tpu.iota {dimensions = array<i32: 1>} : vector<16x16xi32>
    %96 = arith.cmpi sgt, %95, %94 : vector<16x16xi32>
    %cst_17 = arith.constant -1.000000e+30 : f32
    %cst_18 = arith.constant 0.000000e+00 : f32
    %97 = vector.broadcast %cst_17 : f32 to vector<16x16xf32>
    %98 = vector.broadcast %cst_18 : f32 to vector<16x16xf32>
    %99 = arith.select %96, %97, %98 : vector<16x16xi1>, vector<16x16xf32>
    %100 = vector.shape_cast %99 : vector<16x16xf32> to vector<1x16x16xf32>
    %101 = vector.broadcast %100 : vector<1x16x16xf32> to vector<8x16x16xf32>
    %102 = arith.addf %93, %101 : vector<8x16x16xf32>
    %cst_19 = arith.constant dense<0xFF800000> : vector<8x16xf32>
    %103 = vector.multi_reduction <maximumf>, %102, %cst_19 [2] : vector<8x16x16xf32> to vector<8x16xf32>
    %104 = vector.shape_cast %103 : vector<8x16xf32> to vector<8x16x1xf32>
    %105 = vector.broadcast %104 : vector<8x16x1xf32> to vector<8x16x16xf32>
    %106 = arith.subf %102, %105 : vector<8x16x16xf32>
    %107 = math.exp %106 : vector<8x16x16xf32>
    %cst_20 = arith.constant dense<0.000000e+00> : vector<8x16xf32>
    %108 = vector.multi_reduction <add>, %107, %cst_20 [2] : vector<8x16x16xf32> to vector<8x16xf32>
    %109 = vector.shape_cast %108 : vector<8x16xf32> to vector<8x16x1xf32>
    %110 = tpu.reciprocal %109 {approx = true} : vector<8x16x1xf32> -> vector<8x16x1xf32>
    %111 = arith.mulf %109, %110 : vector<8x16x1xf32>
    %cst_21 = arith.constant 2.000000e+00 : f32
    %112 = vector.broadcast %cst_21 : f32 to vector<8x16x1xf32>
    %113 = arith.subf %112, %111 : vector<8x16x1xf32>
    %114 = arith.mulf %110, %113 : vector<8x16x1xf32>
    %115 = vector.broadcast %114 : vector<8x16x1xf32> to vector<8x16x16xf32>
    %116 = arith.mulf %107, %115 : vector<8x16x16xf32>
    %cst_22 = arith.constant dense<0.000000e+00> : vector<8x16x32xf32>
    %117 = tpu.matmul %116, %90, %cst_22 {dimension_numbers = #tpu.dot_dimension_numbers<[2], [1], [1], [2], [0, 0, 0, 1, 1, 2], [0], [0]>} : vector<8x16x16xf32>, vector<8x16x32xf32>, vector<8x16x32xf32> -> vector<8x16x32xf32>
    %118 = vector.extract_strided_slice %117 {offsets = [0, 0, 0], sizes = [1, 16, 32], strides = [1, 1, 1]} : vector<8x16x32xf32> to vector<1x16x32xf32>
    %119 = vector.shape_cast %118 : vector<1x16x32xf32> to vector<16x32xf32>
    %120 = vector.extract_strided_slice %117 {offsets = [1, 0, 0], sizes = [1, 16, 32], strides = [1, 1, 1]} : vector<8x16x32xf32> to vector<1x16x32xf32>
    %121 = vector.shape_cast %120 : vector<1x16x32xf32> to vector<16x32xf32>
    %122 = vector.extract_strided_slice %117 {offsets = [2, 0, 0], sizes = [1, 16, 32], strides = [1, 1, 1]} : vector<8x16x32xf32> to vector<1x16x32xf32>
    %123 = vector.shape_cast %122 : vector<1x16x32xf32> to vector<16x32xf32>
    %124 = vector.extract_strided_slice %117 {offsets = [3, 0, 0], sizes = [1, 16, 32], strides = [1, 1, 1]} : vector<8x16x32xf32> to vector<1x16x32xf32>
    %125 = vector.shape_cast %124 : vector<1x16x32xf32> to vector<16x32xf32>
    %126 = tpu.concatenate %119, %121, %123, %125 in 1 : vector<16x32xf32>, vector<16x32xf32>, vector<16x32xf32>, vector<16x32xf32> -> vector<16x128xf32>
    %127 = vector.extract_strided_slice %117 {offsets = [4, 0, 0], sizes = [1, 16, 32], strides = [1, 1, 1]} : vector<8x16x32xf32> to vector<1x16x32xf32>
    %128 = vector.shape_cast %127 : vector<1x16x32xf32> to vector<16x32xf32>
    %129 = vector.extract_strided_slice %117 {offsets = [5, 0, 0], sizes = [1, 16, 32], strides = [1, 1, 1]} : vector<8x16x32xf32> to vector<1x16x32xf32>
    %130 = vector.shape_cast %129 : vector<1x16x32xf32> to vector<16x32xf32>
    %131 = vector.extract_strided_slice %117 {offsets = [6, 0, 0], sizes = [1, 16, 32], strides = [1, 1, 1]} : vector<8x16x32xf32> to vector<1x16x32xf32>
    %132 = vector.shape_cast %131 : vector<1x16x32xf32> to vector<16x32xf32>
    %133 = vector.extract_strided_slice %117 {offsets = [7, 0, 0], sizes = [1, 16, 32], strides = [1, 1, 1]} : vector<8x16x32xf32> to vector<1x16x32xf32>
    %134 = vector.shape_cast %133 : vector<1x16x32xf32> to vector<16x32xf32>
    %135 = tpu.concatenate %128, %130, %132, %134 in 1 : vector<16x32xf32>, vector<16x32xf32>, vector<16x32xf32>, vector<16x32xf32> -> vector<16x128xf32>
    %136 = tpu.concatenate %126, %135 in 0 : vector<16x128xf32>, vector<16x128xf32> -> vector<32x128xf32>
    %c0_23 = arith.constant 0 : index
    %c0_24 = arith.constant 0 : index
    %137 = vector.load %arg6[%c0_23, %c0_24] : memref<128x128xf32, #tpu.memory_space<vmem>>, vector<128x128xf32>
    %cst_25 = arith.constant dense<0.000000e+00> : vector<32x128xf32>
    %138 = tpu.matmul %136, %137, %cst_25 {dimension_numbers = #tpu.dot_dimension_numbers<[1], [0], [0], [1], [0, 0, 1, 1], [], []>} : vector<32x128xf32>, vector<128x128xf32>, vector<32x128xf32> -> vector<32x128xf32>
    %c0_26 = arith.constant 0 : index
    %c0_27 = arith.constant 0 : index
    %139 = vector.load %arg7[%c0_26, %c0_27] : memref<1x128xf32, #tpu.memory_space<vmem>>, vector<1x128xf32>
    %140 = vector.shape_cast %139 : vector<1x128xf32> to vector<128xf32>
    %141 = vector.shape_cast %140 : vector<128xf32> to vector<1x128xf32>
    %142 = vector.broadcast %141 : vector<1x128xf32> to vector<32x128xf32>
    %143 = arith.addf %138, %142 : vector<32x128xf32>
    %144 = arith.addf %143, %1 : vector<32x128xf32>
    %c0_28 = arith.constant 0 : index
    %c0_29 = arith.constant 0 : index
    %145 = vector.load %arg8[%c0_28, %c0_29] : memref<1x128xf32, #tpu.memory_space<vmem>>, vector<1x128xf32>
    %146 = vector.shape_cast %145 : vector<1x128xf32> to vector<128xf32>
    %c0_30 = arith.constant 0 : index
    %c0_31 = arith.constant 0 : index
    %147 = vector.load %arg9[%c0_30, %c0_31] : memref<1x128xf32, #tpu.memory_space<vmem>>, vector<1x128xf32>
    %148 = vector.shape_cast %147 : vector<1x128xf32> to vector<128xf32>
    %cst_32 = arith.constant dense<0.000000e+00> : vector<32xf32>
    %149 = vector.multi_reduction <add>, %144, %cst_32 [1] : vector<32x128xf32> to vector<32xf32>
    %150 = vector.shape_cast %149 : vector<32xf32> to vector<32x1xf32>
    %cst_33 = arith.constant 1.280000e+02 : f32
    %151 = vector.broadcast %cst_33 : f32 to vector<32x1xf32>
    %152 = arith.divf %150, %151 : vector<32x1xf32>
    %153 = vector.broadcast %152 : vector<32x1xf32> to vector<32x128xf32>
    %154 = arith.subf %144, %153 : vector<32x128xf32>
    %155 = arith.mulf %154, %154 : vector<32x128xf32>
    %cst_34 = arith.constant dense<0.000000e+00> : vector<32xf32>
    %156 = vector.multi_reduction <add>, %155, %cst_34 [1] : vector<32x128xf32> to vector<32xf32>
    %157 = vector.shape_cast %156 : vector<32xf32> to vector<32x1xf32>
    %cst_35 = arith.constant 1.280000e+02 : f32
    %158 = vector.broadcast %cst_35 : f32 to vector<32x1xf32>
    %159 = arith.divf %157, %158 : vector<32x1xf32>
    %160 = vector.broadcast %152 : vector<32x1xf32> to vector<32x128xf32>
    %161 = arith.subf %144, %160 : vector<32x128xf32>
    %cst_36 = arith.constant 9.99999974E-6 : f32
    %162 = vector.broadcast %cst_36 : f32 to vector<32x1xf32>
    %163 = arith.addf %159, %162 : vector<32x1xf32>
    %164 = math.rsqrt %163 : vector<32x1xf32>
    %165 = vector.broadcast %164 : vector<32x1xf32> to vector<32x128xf32>
    %166 = arith.mulf %161, %165 : vector<32x128xf32>
    %167 = vector.shape_cast %146 : vector<128xf32> to vector<1x128xf32>
    %168 = vector.broadcast %167 : vector<1x128xf32> to vector<32x128xf32>
    %169 = arith.mulf %166, %168 : vector<32x128xf32>
    %170 = vector.shape_cast %148 : vector<128xf32> to vector<1x128xf32>
    %171 = vector.broadcast %170 : vector<1x128xf32> to vector<32x128xf32>
    %172 = arith.addf %169, %171 : vector<32x128xf32>
    %173 = tpu.iota {dimensions = array<i32: 0>} : vector<32x1xi32>
    %c0_i32 = arith.constant 0 : i32
    %174 = vector.broadcast %c0_i32 : i32 to vector<32x1xi32>
    %175 = arith.cmpi eq, %173, %174 : vector<32x1xi32>
    %c16_i32 = arith.constant 16 : i32
    %176 = vector.broadcast %c16_i32 : i32 to vector<32x1xi32>
    %177 = arith.cmpi eq, %173, %176 : vector<32x1xi32>
    %178 = arith.ori %175, %177 : vector<32x1xi1>
    %c15_i32 = arith.constant 15 : i32
    %179 = vector.broadcast %c15_i32 : i32 to vector<32x1xi32>
    %180 = arith.cmpi eq, %173, %179 : vector<32x1xi32>
    %c31_i32 = arith.constant 31 : i32
    %181 = vector.broadcast %c31_i32 : i32 to vector<32x1xi32>
    %182 = arith.cmpi eq, %173, %181 : vector<32x1xi32>
    %183 = arith.ori %180, %182 : vector<32x1xi1>
    %cst_37 = arith.constant dense<true> : vector<32x1xi1>
    %184 = arith.xori %178, %cst_37 : vector<32x1xi1>
    %cst_38 = arith.constant dense<true> : vector<32x1xi1>
    %185 = arith.xori %183, %cst_38 : vector<32x1xi1>
    %cst_39 = arith.constant 0.000000e+00 : f32
    %186 = vector.broadcast %cst_39 : f32 to vector<1x128xf32>
    %187 = vector.extract_strided_slice %172 {offsets = [0, 0], sizes = [31, 128], strides = [1, 1]} : vector<32x128xf32> to vector<31x128xf32>
    %188 = tpu.concatenate %186, %187 in 0 : vector<1x128xf32>, vector<31x128xf32> -> vector<32x128xf32>
    %189 = vector.extract_strided_slice %172 {offsets = [1, 0], sizes = [31, 128], strides = [1, 1]} : vector<32x128xf32> to vector<31x128xf32>
    %190 = tpu.concatenate %189, %186 in 0 : vector<31x128xf32>, vector<1x128xf32> -> vector<32x128xf32>
    %cst_40 = arith.constant 0.000000e+00 : f32
    %191 = vector.broadcast %cst_40 : f32 to vector<32x128xf32>
    %192 = vector.shape_cast %184 : vector<32x1xi1> to vector<32x1xi1>
    %193 = vector.broadcast %192 : vector<32x1xi1> to vector<32x128xi1>
    %194 = arith.select %193, %188, %191 : vector<32x128xi1>, vector<32x128xf32>
    %cst_41 = arith.constant 0.000000e+00 : f32
    %195 = vector.broadcast %cst_41 : f32 to vector<32x128xf32>
    %196 = vector.shape_cast %185 : vector<32x1xi1> to vector<32x1xi1>
    %197 = vector.broadcast %196 : vector<32x1xi1> to vector<32x128xi1>
    %198 = arith.select %197, %190, %195 : vector<32x128xi1>, vector<32x128xf32>
    %199 = tpu.concatenate %194, %172, %198 in 1 : vector<32x128xf32>, vector<32x128xf32>, vector<32x128xf32> -> vector<32x384xf32>
    %c0_42 = arith.constant 0 : index
    %c0_43 = arith.constant 0 : index
    %200 = vector.load %arg10[%c0_42, %c0_43] : memref<384x128xf32, #tpu.memory_space<vmem>>, vector<384x128xf32>
    %cst_44 = arith.constant dense<0.000000e+00> : vector<32x128xf32>
    %201 = tpu.matmul %199, %200, %cst_44 {dimension_numbers = #tpu.dot_dimension_numbers<[1], [0], [0], [1], [0, 0, 1, 1], [], []>} : vector<32x384xf32>, vector<384x128xf32>, vector<32x128xf32> -> vector<32x128xf32>
    %c0_45 = arith.constant 0 : index
    %c0_46 = arith.constant 0 : index
    %202 = vector.load %arg11[%c0_45, %c0_46] : memref<1x128xf32, #tpu.memory_space<vmem>>, vector<1x128xf32>
    %203 = vector.shape_cast %202 : vector<1x128xf32> to vector<128xf32>
    %204 = vector.shape_cast %203 : vector<128xf32> to vector<1x128xf32>
    %205 = vector.broadcast %204 : vector<1x128xf32> to vector<32x128xf32>
    %206 = arith.addf %201, %205 : vector<32x128xf32>
    %cst_47 = arith.constant 5.000000e-01 : f32
    %207 = vector.broadcast %cst_47 : f32 to vector<32x128xf32>
    %208 = arith.mulf %207, %206 : vector<32x128xf32>
    %cst_48 = arith.constant 0.707106769 : f32
    %209 = vector.broadcast %cst_48 : f32 to vector<32x128xf32>
    %210 = arith.mulf %206, %209 : vector<32x128xf32>
    %cst_49 = arith.constant 0.000000e+00 : f32
    %211 = vector.broadcast %cst_49 : f32 to vector<32x128xf32>
    %212 = arith.cmpf oge, %210, %211 : vector<32x128xf32>
    %cst_50 = arith.constant 1.000000e+00 : f32
    %cst_51 = arith.constant -1.000000e+00 : f32
    %213 = vector.broadcast %cst_50 : f32 to vector<32x128xf32>
    %214 = vector.broadcast %cst_51 : f32 to vector<32x128xf32>
    %215 = arith.select %212, %213, %214 : vector<32x128xi1>, vector<32x128xf32>
    %216 = math.absf %210 : vector<32x128xf32>
    %cst_52 = arith.constant 0.327591091 : f32
    %217 = vector.broadcast %cst_52 : f32 to vector<32x128xf32>
    %218 = arith.mulf %217, %216 : vector<32x128xf32>
    %cst_53 = arith.constant 1.000000e+00 : f32
    %219 = vector.broadcast %cst_53 : f32 to vector<32x128xf32>
    %220 = arith.addf %219, %218 : vector<32x128xf32>
    %221 = tpu.reciprocal %220 {approx = true} : vector<32x128xf32> -> vector<32x128xf32>
    %222 = arith.mulf %220, %221 : vector<32x128xf32>
    %cst_54 = arith.constant 2.000000e+00 : f32
    %223 = vector.broadcast %cst_54 : f32 to vector<32x128xf32>
    %224 = arith.subf %223, %222 : vector<32x128xf32>
    %225 = arith.mulf %221, %224 : vector<32x128xf32>
    %cst_55 = arith.constant 1.06140542 : f32
    %226 = vector.broadcast %cst_55 : f32 to vector<32x128xf32>
    %227 = arith.mulf %226, %225 : vector<32x128xf32>
    %cst_56 = arith.constant -1.45315206 : f32
    %228 = vector.broadcast %cst_56 : f32 to vector<32x128xf32>
    %229 = arith.addf %227, %228 : vector<32x128xf32>
    %230 = arith.mulf %229, %225 : vector<32x128xf32>
    %cst_57 = arith.constant 1.42141378 : f32
    %231 = vector.broadcast %cst_57 : f32 to vector<32x128xf32>
    %232 = arith.addf %230, %231 : vector<32x128xf32>
    %233 = arith.mulf %232, %225 : vector<32x128xf32>
    %cst_58 = arith.constant -0.284496725 : f32
    %234 = vector.broadcast %cst_58 : f32 to vector<32x128xf32>
    %235 = arith.addf %233, %234 : vector<32x128xf32>
    %236 = arith.mulf %235, %225 : vector<32x128xf32>
    %cst_59 = arith.constant 0.254829586 : f32
    %237 = vector.broadcast %cst_59 : f32 to vector<32x128xf32>
    %238 = arith.addf %236, %237 : vector<32x128xf32>
    %239 = arith.mulf %238, %225 : vector<32x128xf32>
    %cst_60 = arith.constant 0.000000e+00 : f32
    %240 = vector.broadcast %cst_60 : f32 to vector<32x128xf32>
    %241 = arith.subf %240, %216 : vector<32x128xf32>
    %242 = arith.mulf %241, %216 : vector<32x128xf32>
    %243 = math.exp %242 : vector<32x128xf32>
    %244 = arith.mulf %239, %243 : vector<32x128xf32>
    %cst_61 = arith.constant 1.000000e+00 : f32
    %245 = vector.broadcast %cst_61 : f32 to vector<32x128xf32>
    %246 = arith.subf %245, %244 : vector<32x128xf32>
    %247 = arith.mulf %215, %246 : vector<32x128xf32>
    %cst_62 = arith.constant 1.000000e+00 : f32
    %248 = vector.broadcast %cst_62 : f32 to vector<32x128xf32>
    %249 = arith.addf %248, %247 : vector<32x128xf32>
    %250 = arith.mulf %208, %249 : vector<32x128xf32>
    %cst_63 = arith.constant 0.000000e+00 : f32
    %251 = vector.broadcast %cst_63 : f32 to vector<1x128xf32>
    %252 = vector.extract_strided_slice %250 {offsets = [0, 0], sizes = [31, 128], strides = [1, 1]} : vector<32x128xf32> to vector<31x128xf32>
    %253 = tpu.concatenate %251, %252 in 0 : vector<1x128xf32>, vector<31x128xf32> -> vector<32x128xf32>
    %254 = vector.extract_strided_slice %250 {offsets = [1, 0], sizes = [31, 128], strides = [1, 1]} : vector<32x128xf32> to vector<31x128xf32>
    %255 = tpu.concatenate %254, %251 in 0 : vector<31x128xf32>, vector<1x128xf32> -> vector<32x128xf32>
    %cst_64 = arith.constant 0.000000e+00 : f32
    %256 = vector.broadcast %cst_64 : f32 to vector<32x128xf32>
    %257 = vector.shape_cast %184 : vector<32x1xi1> to vector<32x1xi1>
    %258 = vector.broadcast %257 : vector<32x1xi1> to vector<32x128xi1>
    %259 = arith.select %258, %253, %256 : vector<32x128xi1>, vector<32x128xf32>
    %cst_65 = arith.constant 0.000000e+00 : f32
    %260 = vector.broadcast %cst_65 : f32 to vector<32x128xf32>
    %261 = vector.shape_cast %185 : vector<32x1xi1> to vector<32x1xi1>
    %262 = vector.broadcast %261 : vector<32x1xi1> to vector<32x128xi1>
    %263 = arith.select %262, %255, %260 : vector<32x128xi1>, vector<32x128xf32>
    %264 = tpu.concatenate %259, %250, %263 in 1 : vector<32x128xf32>, vector<32x128xf32>, vector<32x128xf32> -> vector<32x384xf32>
    %c0_66 = arith.constant 0 : index
    %c0_67 = arith.constant 0 : index
    %265 = vector.load %arg12[%c0_66, %c0_67] : memref<384x128xf32, #tpu.memory_space<vmem>>, vector<384x128xf32>
    %cst_68 = arith.constant dense<0.000000e+00> : vector<32x128xf32>
    %266 = tpu.matmul %264, %265, %cst_68 {dimension_numbers = #tpu.dot_dimension_numbers<[1], [0], [0], [1], [0, 0, 1, 1], [], []>} : vector<32x384xf32>, vector<384x128xf32>, vector<32x128xf32> -> vector<32x128xf32>
    %c0_69 = arith.constant 0 : index
    %c0_70 = arith.constant 0 : index
    %267 = vector.load %arg13[%c0_69, %c0_70] : memref<1x128xf32, #tpu.memory_space<vmem>>, vector<1x128xf32>
    %268 = vector.shape_cast %267 : vector<1x128xf32> to vector<128xf32>
    %269 = vector.shape_cast %268 : vector<128xf32> to vector<1x128xf32>
    %270 = vector.broadcast %269 : vector<1x128xf32> to vector<32x128xf32>
    %271 = arith.addf %266, %270 : vector<32x128xf32>
    %cst_71 = arith.constant 5.000000e-01 : f32
    %272 = vector.broadcast %cst_71 : f32 to vector<32x128xf32>
    %273 = arith.mulf %272, %271 : vector<32x128xf32>
    %cst_72 = arith.constant 0.707106769 : f32
    %274 = vector.broadcast %cst_72 : f32 to vector<32x128xf32>
    %275 = arith.mulf %271, %274 : vector<32x128xf32>
    %cst_73 = arith.constant 0.000000e+00 : f32
    %276 = vector.broadcast %cst_73 : f32 to vector<32x128xf32>
    %277 = arith.cmpf oge, %275, %276 : vector<32x128xf32>
    %cst_74 = arith.constant 1.000000e+00 : f32
    %cst_75 = arith.constant -1.000000e+00 : f32
    %278 = vector.broadcast %cst_74 : f32 to vector<32x128xf32>
    %279 = vector.broadcast %cst_75 : f32 to vector<32x128xf32>
    %280 = arith.select %277, %278, %279 : vector<32x128xi1>, vector<32x128xf32>
    %281 = math.absf %275 : vector<32x128xf32>
    %cst_76 = arith.constant 0.327591091 : f32
    %282 = vector.broadcast %cst_76 : f32 to vector<32x128xf32>
    %283 = arith.mulf %282, %281 : vector<32x128xf32>
    %cst_77 = arith.constant 1.000000e+00 : f32
    %284 = vector.broadcast %cst_77 : f32 to vector<32x128xf32>
    %285 = arith.addf %284, %283 : vector<32x128xf32>
    %286 = tpu.reciprocal %285 {approx = true} : vector<32x128xf32> -> vector<32x128xf32>
    %287 = arith.mulf %285, %286 : vector<32x128xf32>
    %cst_78 = arith.constant 2.000000e+00 : f32
    %288 = vector.broadcast %cst_78 : f32 to vector<32x128xf32>
    %289 = arith.subf %288, %287 : vector<32x128xf32>
    %290 = arith.mulf %286, %289 : vector<32x128xf32>
    %cst_79 = arith.constant 1.06140542 : f32
    %291 = vector.broadcast %cst_79 : f32 to vector<32x128xf32>
    %292 = arith.mulf %291, %290 : vector<32x128xf32>
    %cst_80 = arith.constant -1.45315206 : f32
    %293 = vector.broadcast %cst_80 : f32 to vector<32x128xf32>
    %294 = arith.addf %292, %293 : vector<32x128xf32>
    %295 = arith.mulf %294, %290 : vector<32x128xf32>
    %cst_81 = arith.constant 1.42141378 : f32
    %296 = vector.broadcast %cst_81 : f32 to vector<32x128xf32>
    %297 = arith.addf %295, %296 : vector<32x128xf32>
    %298 = arith.mulf %297, %290 : vector<32x128xf32>
    %cst_82 = arith.constant -0.284496725 : f32
    %299 = vector.broadcast %cst_82 : f32 to vector<32x128xf32>
    %300 = arith.addf %298, %299 : vector<32x128xf32>
    %301 = arith.mulf %300, %290 : vector<32x128xf32>
    %cst_83 = arith.constant 0.254829586 : f32
    %302 = vector.broadcast %cst_83 : f32 to vector<32x128xf32>
    %303 = arith.addf %301, %302 : vector<32x128xf32>
    %304 = arith.mulf %303, %290 : vector<32x128xf32>
    %cst_84 = arith.constant 0.000000e+00 : f32
    %305 = vector.broadcast %cst_84 : f32 to vector<32x128xf32>
    %306 = arith.subf %305, %281 : vector<32x128xf32>
    %307 = arith.mulf %306, %281 : vector<32x128xf32>
    %308 = math.exp %307 : vector<32x128xf32>
    %309 = arith.mulf %304, %308 : vector<32x128xf32>
    %cst_85 = arith.constant 1.000000e+00 : f32
    %310 = vector.broadcast %cst_85 : f32 to vector<32x128xf32>
    %311 = arith.subf %310, %309 : vector<32x128xf32>
    %312 = arith.mulf %280, %311 : vector<32x128xf32>
    %cst_86 = arith.constant 1.000000e+00 : f32
    %313 = vector.broadcast %cst_86 : f32 to vector<32x128xf32>
    %314 = arith.addf %313, %312 : vector<32x128xf32>
    %315 = arith.mulf %273, %314 : vector<32x128xf32>
    %316 = arith.addf %315, %144 : vector<32x128xf32>
    %317 = vector.shape_cast %316 : vector<32x128xf32> to vector<2x16x128xf32>
    %c0_87 = arith.constant 0 : index
    %c0_88 = arith.constant 0 : index
    %c0_89 = arith.constant 0 : index
    %318 = vector.load %arg14[%c0_87, %c0_88, %c0_89] : memref<2x16x128xf32, #tpu.memory_space<vmem>>, vector<2x16x128xf32>
    tpu.vector_store %arg14[%c0_87, %c0_88, %c0_89], %317 {strides = array<i32>} : memref<2x16x128xf32, #tpu.memory_space<vmem>>, vector<2x16x128xf32>,
    return
  }
  func.func @transform_0(%arg0: i32) -> (i32, i32, i32) {
    %c0_i32 = arith.constant 0 : i32
    %c0_i32_0 = arith.constant 0 : i32
    %c0_i32_1 = arith.constant 0 : i32
    return %arg0, %c0_i32, %c0_i32_0 : i32, i32, i32
  }
  func.func @transform_1(%arg0: i32) -> (i32, i32) {
    %c0_i32 = arith.constant 0 : i32
    %c0_i32_0 = arith.constant 0 : i32
    %c0_i32_1 = arith.constant 0 : i32
    return %c0_i32, %c0_i32_0 : i32, i32
  }
  func.func @transform_2(%arg0: i32) -> (i32, i32) {
    %c0_i32 = arith.constant 0 : i32
    %c0_i32_0 = arith.constant 0 : i32
    %c0_i32_1 = arith.constant 0 : i32
    return %c0_i32, %c0_i32_0 : i32, i32
  }
  func.func @transform_3(%arg0: i32) -> (i32, i32) {
    %c0_i32 = arith.constant 0 : i32
    %c0_i32_0 = arith.constant 0 : i32
    %c0_i32_1 = arith.constant 0 : i32
    return %c0_i32, %c0_i32_0 : i32, i32
  }
  func.func @transform_4(%arg0: i32) -> (i32, i32) {
    %c0_i32 = arith.constant 0 : i32
    %c0_i32_0 = arith.constant 0 : i32
    %c0_i32_1 = arith.constant 0 : i32
    return %c0_i32, %c0_i32_0 : i32, i32
  }
  func.func @transform_5(%arg0: i32) -> (i32, i32) {
    %c0_i32 = arith.constant 0 : i32
    %c0_i32_0 = arith.constant 0 : i32
    %c0_i32_1 = arith.constant 0 : i32
    return %c0_i32, %c0_i32_0 : i32, i32
  }
  func.func @transform_6(%arg0: i32) -> (i32, i32) {
    %c0_i32 = arith.constant 0 : i32
    %c0_i32_0 = arith.constant 0 : i32
    %c0_i32_1 = arith.constant 0 : i32
    return %c0_i32, %c0_i32_0 : i32, i32
  }
  func.func @transform_7(%arg0: i32) -> (i32, i32) {
    %c0_i32 = arith.constant 0 : i32
    %c0_i32_0 = arith.constant 0 : i32
    %c0_i32_1 = arith.constant 0 : i32
    return %c0_i32, %c0_i32_0 : i32, i32
  }
  func.func @transform_8(%arg0: i32) -> (i32, i32) {
    %c0_i32 = arith.constant 0 : i32
    %c0_i32_0 = arith.constant 0 : i32
    %c0_i32_1 = arith.constant 0 : i32
    return %c0_i32, %c0_i32_0 : i32, i32
  }
  func.func @transform_9(%arg0: i32) -> (i32, i32) {
    %c0_i32 = arith.constant 0 : i32
    %c0_i32_0 = arith.constant 0 : i32
    %c0_i32_1 = arith.constant 0 : i32
    return %c0_i32, %c0_i32_0 : i32, i32
  }
  func.func @transform_10(%arg0: i32) -> (i32, i32) {
    %c0_i32 = arith.constant 0 : i32
    %c0_i32_0 = arith.constant 0 : i32
    %c0_i32_1 = arith.constant 0 : i32
    return %c0_i32, %c0_i32_0 : i32, i32
  }
  func.func @transform_11(%arg0: i32) -> (i32, i32) {
    %c0_i32 = arith.constant 0 : i32
    %c0_i32_0 = arith.constant 0 : i32
    %c0_i32_1 = arith.constant 0 : i32
    return %c0_i32, %c0_i32_0 : i32, i32
  }
  func.func @transform_12(%arg0: i32) -> (i32, i32) {
    %c0_i32 = arith.constant 0 : i32
    %c0_i32_0 = arith.constant 0 : i32
    %c0_i32_1 = arith.constant 0 : i32
    return %c0_i32, %c0_i32_0 : i32, i32
  }
  func.func @transform_13(%arg0: i32) -> (i32, i32, i32) {
    %c0_i32 = arith.constant 0 : i32
    %c0_i32_0 = arith.constant 0 : i32
    %c0_i32_1 = arith.constant 0 : i32
    return %arg0, %c0_i32, %c0_i32_0 : i32, i32, i32
  }
}

</mosaic_0001>

<llo_original>
// kernel: tpu_custom_call.1
$region0: #{tpu_custom_call.1}
  #allocation0 [shape = 'u32[]', space=smem, size = 0x4, offset = 0x4, fixed_abs, tag = 'smem constant byte address 0x4 - core index']
  #allocation1 [shape = 'u32[144,128]{1,0:T(1,128)}', space=vmem, size = 0x12000, scoped, tag = 'internal scratch']
  %s0 = inlined_call_operand.hbm [shape: f32[32,128], index: 0, kind: input, shape index: {}]
  %s1 = inlined_call_operand.hbm [shape: f32[8,16,32], index: 1, kind: output, shape index: {0}]
  %s2 = inlined_call_operand.hbm [shape: f32[32,128], index: 2, kind: output, shape index: {1}]
  %3 = xla_tuple %s1, %s2
  %s4 = sld [smem:[#allocation0]]
  $region26: #{tpu_custom_call.1} parent=0
    _
  %s6 = ssub.s32 1, %s4
  %s7 = scalar_select 0, %s6, %s4
  $region1: #{tpu_custom_call.1} parent=0
    #allocation2 [shape = 'u8[16384]{0}', space=vmem, size = 0x4000, scoped, tag = 'input window, operand 0, single buffered']
    #allocation3 [shape = 's32[1]{0}', space=sflag, size = 0x4, scoped, tag = 'scoped memory for tpu_custom_call.1']
    #allocation4 [shape = 's32[1]{0}', space=sflag, size = 0x4, scoped, tag = 'scoped memory for tpu_custom_call.1']
    #allocation5 [shape = 'u8[65536]{0}', space=vmem, size = 0x10000, scoped, tag = 'output window, operand 0, single buffered']
    #allocation6 [shape = 'u8[16384]{0}', space=vmem, size = 0x4000, scoped, tag = 'output window, operand 1, single buffered']
    #allocation7 [shape = 's32[1]{0}', space=sflag, size = 0x4, scoped, tag = 'scoped memory for tpu_custom_call.1']
    %8 = vsyncpa [#allocation3], 0
    %9 = vsyncpa [#allocation4], 0
    %10 = vsyncpa [#allocation7], 0
    // Predicated region
    $region2: #{tpu_custom_call.1} parent=1 // pred_check
      _
    $region3: #{tpu_custom_call.1} parent=1 // pred_check_branch
      %12 = sbr.rel (0) target = $region5
    $region4: #{tpu_custom_call.1} parent=1 // pred_region
      %s14 = ssub.s32 512, 512
      %15 = vsyncadd [#allocation3], %s14
      %s16 = sshll.u32 [#allocation2], 4
      %s17 = int_to_ptr.vmem [resolvable:$true] %s16
      %22 = dma.hbm_to_vmem [thread:$0]  %s0, 512, %s17, [#allocation3], 128, 128, 8
    $region5: #{tpu_custom_call.1} parent=1 // pred_fallthru
      _
    // Predicated region
    $region6: #{tpu_custom_call.1} parent=1 // pred_check
      _
    $region7: #{tpu_custom_call.1} parent=1 // pred_check_branch
      %24 = sbr.rel (0) target = $region9
    $region8: #{tpu_custom_call.1} parent=1 // pred_region
      %25 = dma.done [#allocation3], 512
    $region9: #{tpu_custom_call.1} parent=1 // pred_fallthru
      _
    %v26 = vld [vmem:[#allocation2] sm:$0xff]
    %v27 = vld [vmem:[#allocation2 + $0x8] sm:$0xff]
    %v28 = vld [vmem:[#allocation2 + $0x10] sm:$0xff]
    %v29 = vld [vmem:[#allocation2 + $0x18] sm:$0xff]
    %34 = vrot.lane.b32.xlu0 %v26, 96
    %v35 = vpop.permute.xlu0 %34
    %36 = vrot.lane.b32.xlu0 %v27, 96
    %v37 = vpop.permute.xlu0 %36
    %38 = vrot.lane.b32.xlu0 %v28, 96
    %v39 = vpop.permute.xlu0 %38
    %40 = vrot.lane.b32.xlu0 %v29, 96
    %v41 = vpop.permute.xlu0 %40
    %46 = vrot.lane.b32.xlu0 %v26, 64
    %v47 = vpop.permute.xlu0 %46
    %48 = vrot.lane.b32.xlu0 %v27, 64
    %v49 = vpop.permute.xlu0 %48
    %50 = vrot.lane.b32.xlu0 %v28, 64
    %v51 = vpop.permute.xlu0 %50
    %52 = vrot.lane.b32.xlu0 %v29, 64
    %v53 = vpop.permute.xlu0 %52
    %58 = vrot.lane.b32.xlu0 %v26, 32
    %v59 = vpop.permute.xlu0 %58
    %60 = vrot.lane.b32.xlu0 %v27, 32
    %v61 = vpop.permute.xlu0 %60
    %62 = vrot.lane.b32.xlu0 %v28, 32
    %v63 = vpop.permute.xlu0 %62
    %64 = vrot.lane.b32.xlu0 %v29, 32
    %v65 = vpop.permute.xlu0 %64
    %v70 = vcombine.low %v26, %v47
    %v71 = vcombine.high %v26, %v47
    %v73 = vunpack.c.l.s4 1983009808
    %v74 = vunpack.c.0.s8 %v73
    %v75 = vlaneseq
    %v76 = vshrl.u32 %v75, 7
    %v77 = vsub.s32 %v74, %v76
    %v78 = vrot.slane %v70, %v77
    %v80 = vunpack.c.l.s4 1983009808
    %v81 = vunpack.c.0.s8 %v80
    %v82 = vlaneseq
    %v83 = vshrl.u32 %v82, 7
    %v84 = vsub.s32 %v81, %v83
    %v85 = vrot.slane %v71, %v84
    %v86 = vcombine.low %v35, %v59
    %v87 = vcombine.high %v35, %v59
    %v89 = vunpack.c.l.s4 1983009808
    %v90 = vunpack.c.0.s8 %v89
    %v91 = vlaneseq
    %v92 = vshrl.u32 %v91, 7
    %v93 = vsub.s32 %v90, %v92
    %v94 = vrot.slane %v86, %v93
    %v96 = vunpack.c.l.s4 1983009808
    %v97 = vunpack.c.0.s8 %v96
    %v98 = vlaneseq
    %v99 = vshrl.u32 %v98, 7
    %v100 = vsub.s32 %v97, %v99
    %v101 = vrot.slane %v87, %v100
    %v102 = vcombine.low %v78, %v94
    %v103 = vcombine.high %v78, %v94
    %v105 = vunpack.c.l.s4 1934713408
    %v106 = vunpack.c.0.s8 %v105
    %v107 = vlaneseq
    %v108 = vshrl.u32 %v107, 7
    %v109 = vsub.s32 %v106, %v108
    %v110 = vrot.slane %v102, %v109
    %v112 = vunpack.c.l.s4 1934713408
    %v113 = vunpack.c.0.s8 %v112
    %v114 = vlaneseq
    %v115 = vshrl.u32 %v114, 7
    %v116 = vsub.s32 %v113, %v115
    %v117 = vrot.slane %v103, %v116
    %v118 = vcombine.low %v85, %v101
    %v119 = vcombine.high %v85, %v101
    %v121 = vunpack.c.l.s4 1934713408
    %v122 = vunpack.c.0.s8 %v121
    %v123 = vlaneseq
    %v124 = vshrl.u32 %v123, 7
    %v125 = vsub.s32 %v122, %v124
    %v126 = vrot.slane %v118, %v125
    %v128 = vunpack.c.l.s4 1934713408
    %v129 = vunpack.c.0.s8 %v128
    %v130 = vlaneseq
    %v131 = vshrl.u32 %v130, 7
    %v132 = vsub.s32 %v129, %v131
    %v133 = vrot.slane %v119, %v132
    %v134 = vcombine.high %v110, 0.0
    %v135 = vcombine.high %v117, 0.0
    %v136 = vcombine.high %v126, 0.0
    %v137 = vcombine.high %v133, 0.0
    %v138 = vcombine.low %v27, %v49
    %v139 = vcombine.high %v27, %v49
    %v141 = vunpack.c.l.s4 1983009808
    %v142 = vunpack.c.0.s8 %v141
    %v143 = vlaneseq
    %v144 = vshrl.u32 %v143, 7
    %v145 = vsub.s32 %v142, %v144
    %v146 = vrot.slane %v138, %v145
    %v148 = vunpack.c.l.s4 1983009808
    %v149 = vunpack.c.0.s8 %v148
    %v150 = vlaneseq
    %v151 = vshrl.u32 %v150, 7
    %v152 = vsub.s32 %v149, %v151
    %v153 = vrot.slane %v139, %v152
    %v154 = vcombine.low %v37, %v61
    %v155 = vcombine.high %v37, %v61
    %v157 = vunpack.c.l.s4 1983009808
    %v158 = vunpack.c.0.s8 %v157
    %v159 = vlaneseq
    %v160 = vshrl.u32 %v159, 7
    %v161 = vsub.s32 %v158, %v160
    %v162 = vrot.slane %v154, %v161
    %v164 = vunpack.c.l.s4 1983009808
    %v165 = vunpack.c.0.s8 %v164
    %v166 = vlaneseq
    %v167 = vshrl.u32 %v166, 7
    %v168 = vsub.s32 %v165, %v167
    %v169 = vrot.slane %v155, %v168
    %v170 = vcombine.low %v146, %v162
    %v171 = vcombine.high %v146, %v162
    %v173 = vunpack.c.l.s4 1934713408
    %v174 = vunpack.c.0.s8 %v173
    %v175 = vlaneseq
    %v176 = vshrl.u32 %v175, 7
    %v177 = vsub.s32 %v174, %v176
    %v178 = vrot.slane %v170, %v177
    %v180 = vunpack.c.l.s4 1934713408
    %v181 = vunpack.c.0.s8 %v180
    %v182 = vlaneseq
    %v183 = vshrl.u32 %v182, 7
    %v184 = vsub.s32 %v181, %v183
    %v185 = vrot.slane %v171, %v184
    %v186 = vcombine.low %v153, %v169
    %v187 = vcombine.high %v153, %v169
    %v189 = vunpack.c.l.s4 1934713408
    %v190 = vunpack.c.0.s8 %v189
    %v191 = vlaneseq
    %v192 = vshrl.u32 %v191, 7
    %v193 = vsub.s32 %v190, %v192
    %v194 = vrot.slane %v186, %v193
    %v196 = vunpack.c.l.s4 1934713408
    %v197 = vunpack.c.0.s8 %v196
    %v198 = vlaneseq
    %v199 = vshrl.u32 %v198, 7
    %v200 = vsub.s32 %v197, %v199
    %v201 = vrot.slane %v187, %v200
    %v202 = vcombine.high %v178, 0.0
    %v203 = vcombine.high %v185, 0.0
    %v204 = vcombine.high %v194, 0.0
    %v205 = vcombine.high %v201, 0.0
    %v206 = vcombine.low %v28, %v51
    %v207 = vcombine.high %v28, %v51
    %v209 = vunpack.c.l.s4 1983009808
    %v210 = vunpack.c.0.s8 %v209
    %v211 = vlaneseq
    %v212 = vshrl.u32 %v211, 7
    %v213 = vsub.s32 %v210, %v212
    %v214 = vrot.slane %v206, %v213
    %v216 = vunpack.c.l.s4 1983009808
    %v217 = vunpack.c.0.s8 %v216
    %v218 = vlaneseq
    %v219 = vshrl.u32 %v218, 7
    %v220 = vsub.s32 %v217, %v219
    %v221 = vrot.slane %v207, %v220
    %v222 = vcombine.low %v39, %v63
    %v223 = vcombine.high %v39, %v63
    %v225 = vunpack.c.l.s4 1983009808
    %v226 = vunpack.c.0.s8 %v225
    %v227 = vlaneseq
    %v228 = vshrl.u32 %v227, 7
    %v229 = vsub.s32 %v226, %v228
    %v230 = vrot.slane %v222, %v229
    %v232 = vunpack.c.l.s4 1983009808
    %v233 = vunpack.c.0.s8 %v232
    %v234 = vlaneseq
    %v235 = vshrl.u32 %v234, 7
    %v236 = vsub.s32 %v233, %v235
    %v237 = vrot.slane %v223, %v236
    %v238 = vcombine.low %v214, %v230
    %v239 = vcombine.high %v214, %v230
    %v241 = vunpack.c.l.s4 1934713408
    %v242 = vunpack.c.0.s8 %v241
    %v243 = vlaneseq
    %v244 = vshrl.u32 %v243, 7
    %v245 = vsub.s32 %v242, %v244
    %v246 = vrot.slane %v238, %v245
    %v248 = vunpack.c.l.s4 1934713408
    %v249 = vunpack.c.0.s8 %v248
    %v250 = vlaneseq
    %v251 = vshrl.u32 %v250, 7
    %v252 = vsub.s32 %v249, %v251
    %v253 = vrot.slane %v239, %v252
    %v254 = vcombine.low %v221, %v237
    %v255 = vcombine.high %v221, %v237
    %v257 = vunpack.c.l.s4 1934713408
    %v258 = vunpack.c.0.s8 %v257
    %v259 = vlaneseq
    %v260 = vshrl.u32 %v259, 7
    %v261 = vsub.s32 %v258, %v260
    %v262 = vrot.slane %v254, %v261
    %v264 = vunpack.c.l.s4 1934713408
    %v265 = vunpack.c.0.s8 %v264
    %v266 = vlaneseq
    %v267 = vshrl.u32 %v266, 7
    %v268 = vsub.s32 %v265, %v267
    %v269 = vrot.slane %v255, %v268
    %v270 = vcombine.high %v246, 0.0
    %v271 = vcombine.high %v253, 0.0
    %v272 = vcombine.high %v262, 0.0
    %v273 = vcombine.high %v269, 0.0
    %v274 = vcombine.low %v29, %v53
    %v275 = vcombine.high %v29, %v53
    %v277 = vunpack.c.l.s4 1983009808
    %v278 = vunpack.c.0.s8 %v277
    %v279 = vlaneseq
    %v280 = vshrl.u32 %v279, 7
    %v281 = vsub.s32 %v278, %v280
    %v282 = vrot.slane %v274, %v281
    %v284 = vunpack.c.l.s4 1983009808
    %v285 = vunpack.c.0.s8 %v284
    %v286 = vlaneseq
    %v287 = vshrl.u32 %v286, 7
    %v288 = vsub.s32 %v285, %v287
    %v289 = vrot.slane %v275, %v288
    %v290 = vcombine.low %v41, %v65
    %v291 = vcombine.high %v41, %v65
    %v293 = vunpack.c.l.s4 1983009808
    %v294 = vunpack.c.0.s8 %v293
    %v295 = vlaneseq
    %v296 = vshrl.u32 %v295, 7
    %v297 = vsub.s32 %v294, %v296
    %v298 = vrot.slane %v290, %v297
    %v300 = vunpack.c.l.s4 1983009808
    %v301 = vunpack.c.0.s8 %v300
    %v302 = vlaneseq
    %v303 = vshrl.u32 %v302, 7
    %v304 = vsub.s32 %v301, %v303
    %v305 = vrot.slane %v291, %v304
    %v306 = vcombine.low %v282, %v298
    %v307 = vcombine.high %v282, %v298
    %v309 = vunpack.c.l.s4 1934713408
    %v310 = vunpack.c.0.s8 %v309
    %v311 = vlaneseq
    %v312 = vshrl.u32 %v311, 7
    %v313 = vsub.s32 %v310, %v312
    %v314 = vrot.slane %v306, %v313
    %v316 = vunpack.c.l.s4 1934713408
    %v317 = vunpack.c.0.s8 %v316
    %v318 = vlaneseq
    %v319 = vshrl.u32 %v318, 7
    %v320 = vsub.s32 %v317, %v319
    %v321 = vrot.slane %v307, %v320
    %v322 = vcombine.low %v289, %v305
    %v323 = vcombine.high %v289, %v305
    %v325 = vunpack.c.l.s4 1934713408
    %v326 = vunpack.c.0.s8 %v325
    %v327 = vlaneseq
    %v328 = vshrl.u32 %v327, 7
    %v329 = vsub.s32 %v326, %v328
    %v330 = vrot.slane %v322, %v329
    %v332 = vunpack.c.l.s4 1934713408
    %v333 = vunpack.c.0.s8 %v332
    %v334 = vlaneseq
    %v335 = vshrl.u32 %v334, 7
    %v336 = vsub.s32 %v333, %v335
    %v337 = vrot.slane %v323, %v336
    %v338 = vcombine.high %v314, 0.0
    %v339 = vcombine.high %v321, 0.0
    %v340 = vcombine.high %v330, 0.0
    %v341 = vcombine.high %v337, 0.0
    %v342 = vcombine.low %v110, %v117
    %v344 = vunpack.c.l.s4 1983009808
    %v345 = vunpack.c.0.s8 %v344
    %v346 = vlaneseq
    %v347 = vshrl.u32 %v346, 7
    %v348 = vsub.s32 %v345, %v347
    %v349 = vrot.slane %v342, %v348
    %v350 = vcombine.low %v134, %v135
    %v352 = vunpack.c.l.s4 1983009808
    %v353 = vunpack.c.0.s8 %v352
    %v354 = vlaneseq
    %v355 = vshrl.u32 %v354, 7
    %v356 = vsub.s32 %v353, %v355
    %v357 = vrot.slane %v350, %v356
    %v358 = vcombine.low %v126, %v133
    %v360 = vunpack.c.l.s4 1983009808
    %v361 = vunpack.c.0.s8 %v360
    %v362 = vlaneseq
    %v363 = vshrl.u32 %v362, 7
    %v364 = vsub.s32 %v361, %v363
    %v365 = vrot.slane %v358, %v364
    %v366 = vcombine.low %v136, %v137
    %v368 = vunpack.c.l.s4 1983009808
    %v369 = vunpack.c.0.s8 %v368
    %v370 = vlaneseq
    %v371 = vshrl.u32 %v370, 7
    %v372 = vsub.s32 %v369, %v371
    %v373 = vrot.slane %v366, %v372
    %v374 = vcombine.low %v349, %v357
    %v375 = vcombine.high %v349, %v357
    %v377 = vunpack.c.l.s4 1934713408
    %v378 = vunpack.c.0.s8 %v377
    %v379 = vlaneseq
    %v380 = vshrl.u32 %v379, 7
    %v381 = vsub.s32 %v378, %v380
    %v382 = vrot.slane %v374, %v381
    %v384 = vunpack.c.l.s4 1934713408
    %v385 = vunpack.c.0.s8 %v384
    %v386 = vlaneseq
    %v387 = vshrl.u32 %v386, 7
    %v388 = vsub.s32 %v385, %v387
    %v389 = vrot.slane %v375, %v388
    %v390 = vcombine.low %v365, %v373
    %v391 = vcombine.high %v365, %v373
    %v393 = vunpack.c.l.s4 1934713408
    %v394 = vunpack.c.0.s8 %v393
    %v395 = vlaneseq
    %v396 = vshrl.u32 %v395, 7
    %v397 = vsub.s32 %v394, %v396
    %v398 = vrot.slane %v390, %v397
    %v400 = vunpack.c.l.s4 1934713408
    %v401 = vunpack.c.0.s8 %v400
    %v402 = vlaneseq
    %v403 = vshrl.u32 %v402, 7
    %v404 = vsub.s32 %v401, %v403
    %v405 = vrot.slane %v391, %v404
    %v406 = vcombine.low %v382, %v398
    %v407 = vcombine.high %v382, %v398
    %v408 = vcombine.low %v389, %v405
    %v409 = vcombine.high %v389, %v405
    %v410 = vcombine.low %v178, %v185
    %v412 = vunpack.c.l.s4 1983009808
    %v413 = vunpack.c.0.s8 %v412
    %v414 = vlaneseq
    %v415 = vshrl.u32 %v414, 7
    %v416 = vsub.s32 %v413, %v415
    %v417 = vrot.slane %v410, %v416
    %v418 = vcombine.low %v202, %v203
    %v420 = vunpack.c.l.s4 1983009808
    %v421 = vunpack.c.0.s8 %v420
    %v422 = vlaneseq
    %v423 = vshrl.u32 %v422, 7
    %v424 = vsub.s32 %v421, %v423
    %v425 = vrot.slane %v418, %v424
    %v426 = vcombine.low %v194, %v201
    %v428 = vunpack.c.l.s4 1983009808
    %v429 = vunpack.c.0.s8 %v428
    %v430 = vlaneseq
    %v431 = vshrl.u32 %v430, 7
    %v432 = vsub.s32 %v429, %v431
    %v433 = vrot.slane %v426, %v432
    %v434 = vcombine.low %v204, %v205
    %v436 = vunpack.c.l.s4 1983009808
    %v437 = vunpack.c.0.s8 %v436
    %v438 = vlaneseq
    %v439 = vshrl.u32 %v438, 7
    %v440 = vsub.s32 %v437, %v439
    %v441 = vrot.slane %v434, %v440
    %v442 = vcombine.low %v417, %v425
    %v443 = vcombine.high %v417, %v425
    %v445 = vunpack.c.l.s4 1934713408
    %v446 = vunpack.c.0.s8 %v445
    %v447 = vlaneseq
    %v448 = vshrl.u32 %v447, 7
    %v449 = vsub.s32 %v446, %v448
    %v450 = vrot.slane %v442, %v449
    %v452 = vunpack.c.l.s4 1934713408
    %v453 = vunpack.c.0.s8 %v452
    %v454 = vlaneseq
    %v455 = vshrl.u32 %v454, 7
    %v456 = vsub.s32 %v453, %v455
    %v457 = vrot.slane %v443, %v456
    %v458 = vcombine.low %v433, %v441
    %v459 = vcombine.high %v433, %v441
    %v461 = vunpack.c.l.s4 1934713408
    %v462 = vunpack.c.0.s8 %v461
    %v463 = vlaneseq
    %v464 = vshrl.u32 %v463, 7
    %v465 = vsub.s32 %v462, %v464
    %v466 = vrot.slane %v458, %v465
    %v468 = vunpack.c.l.s4 1934713408
    %v469 = vunpack.c.0.s8 %v468
    %v470 = vlaneseq
    %v471 = vshrl.u32 %v470, 7
    %v472 = vsub.s32 %v469, %v471
    %v473 = vrot.slane %v459, %v472
    %v474 = vcombine.low %v450, %v466
    %v475 = vcombine.high %v450, %v466
    %v476 = vcombine.low %v457, %v473
    %v477 = vcombine.high %v457, %v473
    %v478 = vcombine.low %v246, %v253
    %v480 = vunpack.c.l.s4 1983009808
    %v481 = vunpack.c.0.s8 %v480
    %v482 = vlaneseq
    %v483 = vshrl.u32 %v482, 7
    %v484 = vsub.s32 %v481, %v483
    %v485 = vrot.slane %v478, %v484
    %v486 = vcombine.low %v270, %v271
    %v488 = vunpack.c.l.s4 1983009808
    %v489 = vunpack.c.0.s8 %v488
    %v490 = vlaneseq
    %v491 = vshrl.u32 %v490, 7
    %v492 = vsub.s32 %v489, %v491
    %v493 = vrot.slane %v486, %v492
    %v494 = vcombine.low %v262, %v269
    %v496 = vunpack.c.l.s4 1983009808
    %v497 = vunpack.c.0.s8 %v496
    %v498 = vlaneseq
    %v499 = vshrl.u32 %v498, 7
    %v500 = vsub.s32 %v497, %v499
    %v501 = vrot.slane %v494, %v500
    %v502 = vcombine.low %v272, %v273
    %v504 = vunpack.c.l.s4 1983009808
    %v505 = vunpack.c.0.s8 %v504
    %v506 = vlaneseq
    %v507 = vshrl.u32 %v506, 7
    %v508 = vsub.s32 %v505, %v507
    %v509 = vrot.slane %v502, %v508
    %v510 = vcombine.low %v485, %v493
    %v511 = vcombine.high %v485, %v493
    %v513 = vunpack.c.l.s4 1934713408
    %v514 = vunpack.c.0.s8 %v513
    %v515 = vlaneseq
    %v516 = vshrl.u32 %v515, 7
    %v517 = vsub.s32 %v514, %v516
    %v518 = vrot.slane %v510, %v517
    %v520 = vunpack.c.l.s4 1934713408
    %v521 = vunpack.c.0.s8 %v520
    %v522 = vlaneseq
    %v523 = vshrl.u32 %v522, 7
    %v524 = vsub.s32 %v521, %v523
    %v525 = vrot.slane %v511, %v524
    %v526 = vcombine.low %v501, %v509
    %v527 = vcombine.high %v501, %v509
    %v529 = vunpack.c.l.s4 1934713408
    %v530 = vunpack.c.0.s8 %v529
    %v531 = vlaneseq
    %v532 = vshrl.u32 %v531, 7
    %v533 = vsub.s32 %v530, %v532
    %v534 = vrot.slane %v526, %v533
    %v536 = vunpack.c.l.s4 1934713408
    %v537 = vunpack.c.0.s8 %v536
    %v538 = vlaneseq
    %v539 = vshrl.u32 %v538, 7
    %v540 = vsub.s32 %v537, %v539
    %v541 = vrot.slane %v527, %v540
    %v542 = vcombine.low %v518, %v534
    %v543 = vcombine.high %v518, %v534
    %v544 = vcombine.low %v525, %v541
    %v545 = vcombine.high %v525, %v541
    %v546 = vcombine.low %v314, %v321
    %v548 = vunpack.c.l.s4 1983009808
    %v549 = vunpack.c.0.s8 %v548
    %v550 = vlaneseq
    %v551 = vshrl.u32 %v550, 7
    %v552 = vsub.s32 %v549, %v551
    %v553 = vrot.slane %v546, %v552
    %v554 = vcombine.low %v338, %v339
    %v556 = vunpack.c.l.s4 1983009808
    %v557 = vunpack.c.0.s8 %v556
    %v558 = vlaneseq
    %v559 = vshrl.u32 %v558, 7
    %v560 = vsub.s32 %v557, %v559
    %v561 = vrot.slane %v554, %v560
    %v562 = vcombine.low %v330, %v337
    %v564 = vunpack.c.l.s4 1983009808
    %v565 = vunpack.c.0.s8 %v564
    %v566 = vlaneseq
    %v567 = vshrl.u32 %v566, 7
    %v568 = vsub.s32 %v565, %v567
    %v569 = vrot.slane %v562, %v568
    %v570 = vcombine.low %v340, %v341
    %v572 = vunpack.c.l.s4 1983009808
    %v573 = vunpack.c.0.s8 %v572
    %v574 = vlaneseq
    %v575 = vshrl.u32 %v574, 7
    %v576 = vsub.s32 %v573, %v575
    %v577 = vrot.slane %v570, %v576
    %v578 = vcombine.low %v553, %v561
    %v579 = vcombine.high %v553, %v561
    %v581 = vunpack.c.l.s4 1934713408
    %v582 = vunpack.c.0.s8 %v581
    %v583 = vlaneseq
    %v584 = vshrl.u32 %v583, 7
    %v585 = vsub.s32 %v582, %v584
    %v586 = vrot.slane %v578, %v585
    %v588 = vunpack.c.l.s4 1934713408
    %v589 = vunpack.c.0.s8 %v588
    %v590 = vlaneseq
    %v591 = vshrl.u32 %v590, 7
    %v592 = vsub.s32 %v589, %v591
    %v593 = vrot.slane %v579, %v592
    %v594 = vcombine.low %v569, %v577
    %v595 = vcombine.high %v569, %v577
    %v597 = vunpack.c.l.s4 1934713408
    %v598 = vunpack.c.0.s8 %v597
    %v599 = vlaneseq
    %v600 = vshrl.u32 %v599, 7
    %v601 = vsub.s32 %v598, %v600
    %v602 = vrot.slane %v594, %v601
    %v604 = vunpack.c.l.s4 1934713408
    %v605 = vunpack.c.0.s8 %v604
    %v606 = vlaneseq
    %v607 = vshrl.u32 %v606, 7
    %v608 = vsub.s32 %v605, %v607
    %v609 = vrot.slane %v595, %v608
    %v610 = vcombine.low %v586, %v602
    %v611 = vcombine.high %v586, %v602
    %v612 = vcombine.low %v593, %v609
    %v613 = vcombine.high %v593, %v609
    %vm614 = vcmask 261120
    %615 = vst.msk [vmem:[#allocation5] sm:$0xff] %vm614, %v406
    %616 = vst.msk [vmem:[#allocation5 + $0x8] sm:$0xff] %vm614, %v474
    %617 = vst.msk [vmem:[#allocation5 + $0x10] sm:$0xff] %vm614, %v407
    %618 = vst.msk [vmem:[#allocation5 + $0x18] sm:$0xff] %vm614, %v475
    %619 = vst.msk [vmem:[#allocation5 + $0x20] sm:$0xff] %vm614, %v408
    %620 = vst.msk [vmem:[#allocation5 + $0x28] sm:$0xff] %vm614, %v476
    %621 = vst.msk [vmem:[#allocation5 + $0x30] sm:$0xff] %vm614, %v409
    %622 = vst.msk [vmem:[#allocation5 + $0x38] sm:$0xff] %vm614, %v477
    %623 = vst.msk [vmem:[#allocation5 + $0x40] sm:$0xff] %vm614, %v542
    %624 = vst.msk [vmem:[#allocation5 + $0x48] sm:$0xff] %vm614, %v610
    %625 = vst.msk [vmem:[#allocation5 + $0x50] sm:$0xff] %vm614, %v543
    %626 = vst.msk [vmem:[#allocation5 + $0x58] sm:$0xff] %vm614, %v611
    %627 = vst.msk [vmem:[#allocation5 + $0x60] sm:$0xff] %vm614, %v544
    %628 = vst.msk [vmem:[#allocation5 + $0x68] sm:$0xff] %vm614, %v612
    %629 = vst.msk [vmem:[#allocation5 + $0x70] sm:$0xff] %vm614, %v545
    %630 = vst.msk [vmem:[#allocation5 + $0x78] sm:$0xff] %vm614, %v613
    %v631 = vcombine.low %v406, %v408
    %v632 = vcombine.high %v406, %v408
    %v634 = vunpack.c.l.s4 1983009808
    %v635 = vunpack.c.0.s8 %v634
    %v636 = vlaneseq
    %v637 = vshrl.u32 %v636, 7
    %v638 = vsub.s32 %v635, %v637
    %v639 = vrot.slane %v631, %v638
    %v641 = vunpack.c.l.s4 1983009808
    %v642 = vunpack.c.0.s8 %v641
    %v643 = vlaneseq
    %v644 = vshrl.u32 %v643, 7
    %v645 = vsub.s32 %v642, %v644
    %v646 = vrot.slane %v632, %v645
    %v647 = vcombine.low %v407, %v409
    %v648 = vcombine.high %v407, %v409
    %v650 = vunpack.c.l.s4 1983009808
    %v651 = vunpack.c.0.s8 %v650
    %v652 = vlaneseq
    %v653 = vshrl.u32 %v652, 7
    %v654 = vsub.s32 %v651, %v653
    %v655 = vrot.slane %v647, %v654
    %v657 = vunpack.c.l.s4 1983009808
    %v658 = vunpack.c.0.s8 %v657
    %v659 = vlaneseq
    %v660 = vshrl.u32 %v659, 7
    %v661 = vsub.s32 %v658, %v660
    %v662 = vrot.slane %v648, %v661
    %v663 = vcombine.low %v639, %v655
    %v664 = vcombine.high %v639, %v655
    %v666 = vunpack.c.l.s4 1934713408
    %v667 = vunpack.c.0.s8 %v666
    %v668 = vlaneseq
    %v669 = vshrl.u32 %v668, 7
    %v670 = vsub.s32 %v667, %v669
    %v671 = vrot.slane %v663, %v670
    %v673 = vunpack.c.l.s4 1934713408
    %v674 = vunpack.c.0.s8 %v673
    %v675 = vlaneseq
    %v676 = vshrl.u32 %v675, 7
    %v677 = vsub.s32 %v674, %v676
    %v678 = vrot.slane %v664, %v677
    %v679 = vcombine.low %v646, %v662
    %v680 = vcombine.high %v646, %v662
    %v682 = vunpack.c.l.s4 1934713408
    %v683 = vunpack.c.0.s8 %v682
    %v684 = vlaneseq
    %v685 = vshrl.u32 %v684, 7
    %v686 = vsub.s32 %v683, %v685
    %v687 = vrot.slane %v679, %v686
    %v689 = vunpack.c.l.s4 1934713408
    %v690 = vunpack.c.0.s8 %v689
    %v691 = vlaneseq
    %v692 = vshrl.u32 %v691, 7
    %v693 = vsub.s32 %v690, %v692
    %v694 = vrot.slane %v680, %v693
    %v695 = vcombine.high %v671, 0.0
    %v696 = vcombine.high %v678, 0.0
    %v697 = vcombine.high %v687, 0.0
    %v698 = vcombine.high %v694, 0.0
    %v699 = vcombine.low %v474, %v476
    %v700 = vcombine.high %v474, %v476
    %v702 = vunpack.c.l.s4 1983009808
    %v703 = vunpack.c.0.s8 %v702
    %v704 = vlaneseq
    %v705 = vshrl.u32 %v704, 7
    %v706 = vsub.s32 %v703, %v705
    %v707 = vrot.slane %v699, %v706
    %v709 = vunpack.c.l.s4 1983009808
    %v710 = vunpack.c.0.s8 %v709
    %v711 = vlaneseq
    %v712 = vshrl.u32 %v711, 7
    %v713 = vsub.s32 %v710, %v712
    %v714 = vrot.slane %v700, %v713
    %v715 = vcombine.low %v475, %v477
    %v716 = vcombine.high %v475, %v477
    %v718 = vunpack.c.l.s4 1983009808
    %v719 = vunpack.c.0.s8 %v718
    %v720 = vlaneseq
    %v721 = vshrl.u32 %v720, 7
    %v722 = vsub.s32 %v719, %v721
    %v723 = vrot.slane %v715, %v722
    %v725 = vunpack.c.l.s4 1983009808
    %v726 = vunpack.c.0.s8 %v725
    %v727 = vlaneseq
    %v728 = vshrl.u32 %v727, 7
    %v729 = vsub.s32 %v726, %v728
    %v730 = vrot.slane %v716, %v729
    %v731 = vcombine.low %v707, %v723
    %v732 = vcombine.high %v707, %v723
    %v734 = vunpack.c.l.s4 1934713408
    %v735 = vunpack.c.0.s8 %v734
    %v736 = vlaneseq
    %v737 = vshrl.u32 %v736, 7
    %v738 = vsub.s32 %v735, %v737
    %v739 = vrot.slane %v731, %v738
    %v741 = vunpack.c.l.s4 1934713408
    %v742 = vunpack.c.0.s8 %v741
    %v743 = vlaneseq
    %v744 = vshrl.u32 %v743, 7
    %v745 = vsub.s32 %v742, %v744
    %v746 = vrot.slane %v732, %v745
    %v747 = vcombine.low %v714, %v730
    %v748 = vcombine.high %v714, %v730
    %v750 = vunpack.c.l.s4 1934713408
    %v751 = vunpack.c.0.s8 %v750
    %v752 = vlaneseq
    %v753 = vshrl.u32 %v752, 7
    %v754 = vsub.s32 %v751, %v753
    %v755 = vrot.slane %v747, %v754
    %v757 = vunpack.c.l.s4 1934713408
    %v758 = vunpack.c.0.s8 %v757
    %v759 = vlaneseq
    %v760 = vshrl.u32 %v759, 7
    %v761 = vsub.s32 %v758, %v760
    %v762 = vrot.slane %v748, %v761
    %v763 = vcombine.high %v739, 0.0
    %v764 = vcombine.high %v746, 0.0
    %v765 = vcombine.high %v755, 0.0
    %v766 = vcombine.high %v762, 0.0
    %v767 = vcombine.low %v542, %v544
    %v768 = vcombine.high %v542, %v544
    %v770 = vunpack.c.l.s4 1983009808
    %v771 = vunpack.c.0.s8 %v770
    %v772 = vlaneseq
    %v773 = vshrl.u32 %v772, 7
    %v774 = vsub.s32 %v771, %v773
    %v775 = vrot.slane %v767, %v774
    %v777 = vunpack.c.l.s4 1983009808
    %v778 = vunpack.c.0.s8 %v777
    %v779 = vlaneseq
    %v780 = vshrl.u32 %v779, 7
    %v781 = vsub.s32 %v778, %v780
    %v782 = vrot.slane %v768, %v781
    %v783 = vcombine.low %v543, %v545
    %v784 = vcombine.high %v543, %v545
    %v786 = vunpack.c.l.s4 1983009808
    %v787 = vunpack.c.0.s8 %v786
    %v788 = vlaneseq
    %v789 = vshrl.u32 %v788, 7
    %v790 = vsub.s32 %v787, %v789
    %v791 = vrot.slane %v783, %v790
    %v793 = vunpack.c.l.s4 1983009808
    %v794 = vunpack.c.0.s8 %v793
    %v795 = vlaneseq
    %v796 = vshrl.u32 %v795, 7
    %v797 = vsub.s32 %v794, %v796
    %v798 = vrot.slane %v784, %v797
    %v799 = vcombine.low %v775, %v791
    %v800 = vcombine.high %v775, %v791
    %v802 = vunpack.c.l.s4 1934713408
    %v803 = vunpack.c.0.s8 %v802
    %v804 = vlaneseq
    %v805 = vshrl.u32 %v804, 7
    %v806 = vsub.s32 %v803, %v805
    %v807 = vrot.slane %v799, %v806
    %v809 = vunpack.c.l.s4 1934713408
    %v810 = vunpack.c.0.s8 %v809
    %v811 = vlaneseq
    %v812 = vshrl.u32 %v811, 7
    %v813 = vsub.s32 %v810, %v812
    %v814 = vrot.slane %v800, %v813
    %v815 = vcombine.low %v782, %v798
    %v816 = vcombine.high %v782, %v798
    %v818 = vunpack.c.l.s4 1934713408
    %v819 = vunpack.c.0.s8 %v818
    %v820 = vlaneseq
    %v821 = vshrl.u32 %v820, 7
    %v822 = vsub.s32 %v819, %v821
    %v823 = vrot.slane %v815, %v822
    %v825 = vunpack.c.l.s4 1934713408
    %v826 = vunpack.c.0.s8 %v825
    %v827 = vlaneseq
    %v828 = vshrl.u32 %v827, 7
    %v829 = vsub.s32 %v826, %v828
    %v830 = vrot.slane %v816, %v829
    %v831 = vcombine.high %v807, 0.0
    %v832 = vcombine.high %v814, 0.0
    %v833 = vcombine.high %v823, 0.0
    %v834 = vcombine.high %v830, 0.0
    %v835 = vcombine.low %v610, %v612
    %v836 = vcombine.high %v610, %v612
    %v838 = vunpack.c.l.s4 1983009808
    %v839 = vunpack.c.0.s8 %v838
    %v840 = vlaneseq
    %v841 = vshrl.u32 %v840, 7
    %v842 = vsub.s32 %v839, %v841
    %v843 = vrot.slane %v835, %v842
    %v845 = vunpack.c.l.s4 1983009808
    %v846 = vunpack.c.0.s8 %v845
    %v847 = vlaneseq
    %v848 = vshrl.u32 %v847, 7
    %v849 = vsub.s32 %v846, %v848
    %v850 = vrot.slane %v836, %v849
    %v851 = vcombine.low %v611, %v613
    %v852 = vcombine.high %v611, %v613
    %v854 = vunpack.c.l.s4 1983009808
    %v855 = vunpack.c.0.s8 %v854
    %v856 = vlaneseq
    %v857 = vshrl.u32 %v856, 7
    %v858 = vsub.s32 %v855, %v857
    %v859 = vrot.slane %v851, %v858
    %v861 = vunpack.c.l.s4 1983009808
    %v862 = vunpack.c.0.s8 %v861
    %v863 = vlaneseq
    %v864 = vshrl.u32 %v863, 7
    %v865 = vsub.s32 %v862, %v864
    %v866 = vrot.slane %v852, %v865
    %v867 = vcombine.low %v843, %v859
    %v868 = vcombine.high %v843, %v859
    %v870 = vunpack.c.l.s4 1934713408
    %v871 = vunpack.c.0.s8 %v870
    %v872 = vlaneseq
    %v873 = vshrl.u32 %v872, 7
    %v874 = vsub.s32 %v871, %v873
    %v875 = vrot.slane %v867, %v874
    %v877 = vunpack.c.l.s4 1934713408
    %v878 = vunpack.c.0.s8 %v877
    %v879 = vlaneseq
    %v880 = vshrl.u32 %v879, 7
    %v881 = vsub.s32 %v878, %v880
    %v882 = vrot.slane %v868, %v881
    %v883 = vcombine.low %v850, %v866
    %v884 = vcombine.high %v850, %v866
    %v886 = vunpack.c.l.s4 1934713408
    %v887 = vunpack.c.0.s8 %v886
    %v888 = vlaneseq
    %v889 = vshrl.u32 %v888, 7
    %v890 = vsub.s32 %v887, %v889
    %v891 = vrot.slane %v883, %v890
    %v893 = vunpack.c.l.s4 1934713408
    %v894 = vunpack.c.0.s8 %v893
    %v895 = vlaneseq
    %v896 = vshrl.u32 %v895, 7
    %v897 = vsub.s32 %v894, %v896
    %v898 = vrot.slane %v884, %v897
    %v899 = vcombine.high %v875, 0.0
    %v900 = vcombine.high %v882, 0.0
    %v901 = vcombine.high %v891, 0.0
    %v902 = vcombine.high %v898, 0.0
    %v903 = vcombine.low %v671, %v678
    %v905 = vunpack.c.l.s4 1983009808
    %v906 = vunpack.c.0.s8 %v905
    %v907 = vlaneseq
    %v908 = vshrl.u32 %v907, 7
    %v909 = vsub.s32 %v906, %v908
    %v910 = vrot.slane %v903, %v909
    %v911 = vcombine.low %v695, %v696
    %v913 = vunpack.c.l.s4 1983009808
    %v914 = vunpack.c.0.s8 %v913
    %v915 = vlaneseq
    %v916 = vshrl.u32 %v915, 7
    %v917 = vsub.s32 %v914, %v916
    %v918 = vrot.slane %v911, %v917
    %v919 = vcombine.low %v687, %v694
    %v921 = vunpack.c.l.s4 1983009808
    %v922 = vunpack.c.0.s8 %v921
    %v923 = vlaneseq
    %v924 = vshrl.u32 %v923, 7
    %v925 = vsub.s32 %v922, %v924
    %v926 = vrot.slane %v919, %v925
    %v927 = vcombine.low %v697, %v698
    %v929 = vunpack.c.l.s4 1983009808
    %v930 = vunpack.c.0.s8 %v929
    %v931 = vlaneseq
    %v932 = vshrl.u32 %v931, 7
    %v933 = vsub.s32 %v930, %v932
    %v934 = vrot.slane %v927, %v933
    %v935 = vcombine.low %v910, %v918
    %v936 = vcombine.high %v910, %v918
    %v938 = vunpack.c.l.s4 1934713408
    %v939 = vunpack.c.0.s8 %v938
    %v940 = vlaneseq
    %v941 = vshrl.u32 %v940, 7
    %v942 = vsub.s32 %v939, %v941
    %v943 = vrot.slane %v935, %v942
    %v945 = vunpack.c.l.s4 1934713408
    %v946 = vunpack.c.0.s8 %v945
    %v947 = vlaneseq
    %v948 = vshrl.u32 %v947, 7
    %v949 = vsub.s32 %v946, %v948
    %v950 = vrot.slane %v936, %v949
    %v951 = vcombine.low %v926, %v934
    %v952 = vcombine.high %v926, %v934
    %v954 = vunpack.c.l.s4 1934713408
    %v955 = vunpack.c.0.s8 %v954
    %v956 = vlaneseq
    %v957 = vshrl.u32 %v956, 7
    %v958 = vsub.s32 %v955, %v957
    %v959 = vrot.slane %v951, %v958
    %v961 = vunpack.c.l.s4 1934713408
    %v962 = vunpack.c.0.s8 %v961
    %v963 = vlaneseq
    %v964 = vshrl.u32 %v963, 7
    %v965 = vsub.s32 %v962, %v964
    %v966 = vrot.slane %v952, %v965
    %v967 = vcombine.low %v943, %v959
    %v968 = vcombine.high %v943, %v959
    %v969 = vcombine.low %v950, %v966
    %v970 = vcombine.high %v950, %v966
    %v971 = vcombine.low %v739, %v746
    %v973 = vunpack.c.l.s4 1983009808
    %v974 = vunpack.c.0.s8 %v973
    %v975 = vlaneseq
    %v976 = vshrl.u32 %v975, 7
    %v977 = vsub.s32 %v974, %v976
    %v978 = vrot.slane %v971, %v977
    %v979 = vcombine.low %v763, %v764
    %v981 = vunpack.c.l.s4 1983009808
    %v982 = vunpack.c.0.s8 %v981
    %v983 = vlaneseq
    %v984 = vshrl.u32 %v983, 7
    %v985 = vsub.s32 %v982, %v984
    %v986 = vrot.slane %v979, %v985
    %v987 = vcombine.low %v755, %v762
    %v989 = vunpack.c.l.s4 1983009808
    %v990 = vunpack.c.0.s8 %v989
    %v991 = vlaneseq
    %v992 = vshrl.u32 %v991, 7
    %v993 = vsub.s32 %v990, %v992
    %v994 = vrot.slane %v987, %v993
    %v995 = vcombine.low %v765, %v766
    %v997 = vunpack.c.l.s4 1983009808
    %v998 = vunpack.c.0.s8 %v997
    %v999 = vlaneseq
    %v1000 = vshrl.u32 %v999, 7
    %v1001 = vsub.s32 %v998, %v1000
    %v1002 = vrot.slane %v995, %v1001
    %v1003 = vcombine.low %v978, %v986
    %v1004 = vcombine.high %v978, %v986
    %v1006 = vunpack.c.l.s4 1934713408
    %v1007 = vunpack.c.0.s8 %v1006
    %v1008 = vlaneseq
    %v1009 = vshrl.u32 %v1008, 7
    %v1010 = vsub.s32 %v1007, %v1009
    %v1011 = vrot.slane %v1003, %v1010
    %v1013 = vunpack.c.l.s4 1934713408
    %v1014 = vunpack.c.0.s8 %v1013
    %v1015 = vlaneseq
    %v1016 = vshrl.u32 %v1015, 7
    %v1017 = vsub.s32 %v1014, %v1016
    %v1018 = vrot.slane %v1004, %v1017
    %v1019 = vcombine.low %v994, %v1002
    %v1020 = vcombine.high %v994, %v1002
    %v1022 = vunpack.c.l.s4 1934713408
    %v1023 = vunpack.c.0.s8 %v1022
    %v1024 = vlaneseq
    %v1025 = vshrl.u32 %v1024, 7
    %v1026 = vsub.s32 %v1023, %v1025
    %v1027 = vrot.slane %v1019, %v1026
    %v1029 = vunpack.c.l.s4 1934713408
    %v1030 = vunpack.c.0.s8 %v1029
    %v1031 = vlaneseq
    %v1032 = vshrl.u32 %v1031, 7
    %v1033 = vsub.s32 %v1030, %v1032
    %v1034 = vrot.slane %v1020, %v1033
    %v1035 = vcombine.low %v1011, %v1027
    %v1036 = vcombine.high %v1011, %v1027
    %v1037 = vcombine.low %v1018, %v1034
    %v1038 = vcombine.high %v1018, %v1034
    %v1039 = vcombine.low %v807, %v814
    %v1041 = vunpack.c.l.s4 1983009808
    %v1042 = vunpack.c.0.s8 %v1041
    %v1043 = vlaneseq
    %v1044 = vshrl.u32 %v1043, 7
    %v1045 = vsub.s32 %v1042, %v1044
    %v1046 = vrot.slane %v1039, %v1045
    %v1047 = vcombine.low %v831, %v832
    %v1049 = vunpack.c.l.s4 1983009808
    %v1050 = vunpack.c.0.s8 %v1049
    %v1051 = vlaneseq
    %v1052 = vshrl.u32 %v1051, 7
    %v1053 = vsub.s32 %v1050, %v1052
    %v1054 = vrot.slane %v1047, %v1053
    %v1055 = vcombine.low %v823, %v830
    %v1057 = vunpack.c.l.s4 1983009808
    %v1058 = vunpack.c.0.s8 %v1057
    %v1059 = vlaneseq
    %v1060 = vshrl.u32 %v1059, 7
    %v1061 = vsub.s32 %v1058, %v1060
    %v1062 = vrot.slane %v1055, %v1061
    %v1063 = vcombine.low %v833, %v834
    %v1065 = vunpack.c.l.s4 1983009808
    %v1066 = vunpack.c.0.s8 %v1065
    %v1067 = vlaneseq
    %v1068 = vshrl.u32 %v1067, 7
    %v1069 = vsub.s32 %v1066, %v1068
    %v1070 = vrot.slane %v1063, %v1069
    %v1071 = vcombine.low %v1046, %v1054
    %v1072 = vcombine.high %v1046, %v1054
    %v1074 = vunpack.c.l.s4 1934713408
    %v1075 = vunpack.c.0.s8 %v1074
    %v1076 = vlaneseq
    %v1077 = vshrl.u32 %v1076, 7
    %v1078 = vsub.s32 %v1075, %v1077
    %v1079 = vrot.slane %v1071, %v1078
    %v1081 = vunpack.c.l.s4 1934713408
    %v1082 = vunpack.c.0.s8 %v1081
    %v1083 = vlaneseq
    %v1084 = vshrl.u32 %v1083, 7
    %v1085 = vsub.s32 %v1082, %v1084
    %v1086 = vrot.slane %v1072, %v1085
    %v1087 = vcombine.low %v1062, %v1070
    %v1088 = vcombine.high %v1062, %v1070
    %v1090 = vunpack.c.l.s4 1934713408
    %v1091 = vunpack.c.0.s8 %v1090
    %v1092 = vlaneseq
    %v1093 = vshrl.u32 %v1092, 7
    %v1094 = vsub.s32 %v1091, %v1093
    %v1095 = vrot.slane %v1087, %v1094
    %v1097 = vunpack.c.l.s4 1934713408
    %v1098 = vunpack.c.0.s8 %v1097
    %v1099 = vlaneseq
    %v1100 = vshrl.u32 %v1099, 7
    %v1101 = vsub.s32 %v1098, %v1100
    %v1102 = vrot.slane %v1088, %v1101
    %v1103 = vcombine.low %v1079, %v1095
    %v1104 = vcombine.high %v1079, %v1095
    %v1105 = vcombine.low %v1086, %v1102
    %v1106 = vcombine.high %v1086, %v1102
    %v1107 = vcombine.low %v875, %v882
    %v1109 = vunpack.c.l.s4 1983009808
    %v1110 = vunpack.c.0.s8 %v1109
    %v1111 = vlaneseq
    %v1112 = vshrl.u32 %v1111, 7
    %v1113 = vsub.s32 %v1110, %v1112
    %v1114 = vrot.slane %v1107, %v1113
    %v1115 = vcombine.low %v899, %v900
    %v1117 = vunpack.c.l.s4 1983009808
    %v1118 = vunpack.c.0.s8 %v1117
    %v1119 = vlaneseq
    %v1120 = vshrl.u32 %v1119, 7
    %v1121 = vsub.s32 %v1118, %v1120
    %v1122 = vrot.slane %v1115, %v1121
    %v1123 = vcombine.low %v891, %v898
    %v1125 = vunpack.c.l.s4 1983009808
    %v1126 = vunpack.c.0.s8 %v1125
    %v1127 = vlaneseq
    %v1128 = vshrl.u32 %v1127, 7
    %v1129 = vsub.s32 %v1126, %v1128
    %v1130 = vrot.slane %v1123, %v1129
    %v1131 = vcombine.low %v901, %v902
    %v1133 = vunpack.c.l.s4 1983009808
    %v1134 = vunpack.c.0.s8 %v1133
    %v1135 = vlaneseq
    %v1136 = vshrl.u32 %v1135, 7
    %v1137 = vsub.s32 %v1134, %v1136
    %v1138 = vrot.slane %v1131, %v1137
    %v1139 = vcombine.low %v1114, %v1122
    %v1140 = vcombine.high %v1114, %v1122
    %v1142 = vunpack.c.l.s4 1934713408
    %v1143 = vunpack.c.0.s8 %v1142
    %v1144 = vlaneseq
    %v1145 = vshrl.u32 %v1144, 7
    %v1146 = vsub.s32 %v1143, %v1145
    %v1147 = vrot.slane %v1139, %v1146
    %v1149 = vunpack.c.l.s4 1934713408
    %v1150 = vunpack.c.0.s8 %v1149
    %v1151 = vlaneseq
    %v1152 = vshrl.u32 %v1151, 7
    %v1153 = vsub.s32 %v1150, %v1152
    %v1154 = vrot.slane %v1140, %v1153
    %v1155 = vcombine.low %v1130, %v1138
    %v1156 = vcombine.high %v1130, %v1138
    %v1158 = vunpack.c.l.s4 1934713408
    %v1159 = vunpack.c.0.s8 %v1158
    %v1160 = vlaneseq
    %v1161 = vshrl.u32 %v1160, 7
    %v1162 = vsub.s32 %v1159, %v1161
    %v1163 = vrot.slane %v1155, %v1162
    %v1165 = vunpack.c.l.s4 1934713408
    %v1166 = vunpack.c.0.s8 %v1165
    %v1167 = vlaneseq
    %v1168 = vshrl.u32 %v1167, 7
    %v1169 = vsub.s32 %v1166, %v1168
    %v1170 = vrot.slane %v1156, %v1169
    %v1171 = vcombine.low %v1147, %v1163
    %v1172 = vcombine.high %v1147, %v1163
    %v1173 = vcombine.low %v1154, %v1170
    %v1174 = vcombine.high %v1154, %v1170
    %1179 = vrot.lane.b32.xlu0 %v968, 32
    %v1180 = vpop.permute.xlu0 %1179
    %1181 = vrot.lane.b32.xlu0 %v1036, 32
    %v1182 = vpop.permute.xlu0 %1181
    %1183 = vrot.lane.b32.xlu0 %v1104, 32
    %v1184 = vpop.permute.xlu0 %1183
    %1185 = vrot.lane.b32.xlu0 %v1172, 32
    %v1186 = vpop.permute.xlu0 %1185
    %1195 = vrot.lane.b32.xlu0 %v969, 64
    %v1196 = vpop.permute.xlu0 %1195
    %1197 = vrot.lane.b32.xlu0 %v1037, 64
    %v1198 = vpop.permute.xlu0 %1197
    %1199 = vrot.lane.b32.xlu0 %v1105, 64
    %v1200 = vpop.permute.xlu0 %1199
    %1201 = vrot.lane.b32.xlu0 %v1173, 64
    %v1202 = vpop.permute.xlu0 %1201
    %1211 = vrot.lane.b32.xlu0 %v970, 96
    %v1212 = vpop.permute.xlu0 %1211
    %1213 = vrot.lane.b32.xlu0 %v1038, 96
    %v1214 = vpop.permute.xlu0 %1213
    %1215 = vrot.lane.b32.xlu0 %v1106, 96
    %v1216 = vpop.permute.xlu0 %1215
    %1217 = vrot.lane.b32.xlu0 %v1174, 96
    %v1218 = vpop.permute.xlu0 %1217
    %v1223 = vsel %vm614, %v967, %v1180
    %v1224 = vsel %vm614, %v1035, %v1182
    %v1225 = vsel %vm614, %v1103, %v1184
    %v1226 = vsel %vm614, %v1171, %v1186
    %vm1227 = vcmask 523264
    %v1228 = vsel %vm1227, %v1223, %v1196
    %v1229 = vsel %vm1227, %v1224, %v1198
    %v1230 = vsel %vm1227, %v1225, %v1200
    %v1231 = vsel %vm1227, %v1226, %v1202
    %vm1232 = vcmask 785408
    %v1233 = vsel %vm1232, %v1228, %v1212
    %v1234 = vsel %vm1232, %v1229, %v1214
    %v1235 = vsel %vm1232, %v1230, %v1216
    %v1236 = vsel %vm1232, %v1231, %v1218
    %1237 = vst [vmem:[#allocation6] sm:$0xff] %v1233
    %1238 = vst [vmem:[#allocation6 + $0x8] sm:$0xff] %v1234
    %1239 = vst [vmem:[#allocation6 + $0x10] sm:$0xff] %v1235
    %1240 = vst [vmem:[#allocation6 + $0x18] sm:$0xff] %v1236
    // Predicated region
    $region10: #{tpu_custom_call.1} parent=1 // pred_check
      _
    $region11: #{tpu_custom_call.1} parent=1 // pred_check_branch
      %1242 = sbr.rel (0) target = $region13
    $region12: #{tpu_custom_call.1} parent=1 // pred_region
      %s1244 = ssub.s32 2048, 2048
      %1245 = vsyncadd [#allocation4], %s1244
      %s1246 = sshll.u32 [#allocation5], 4
      %s1247 = int_to_ptr.vmem [resolvable:$true] %s1246
      %1252 = dma.vmem_to_hbm [thread:$0]  %s1247, 2048, %s1, [#allocation4], 128, 128, 8
    $region13: #{tpu_custom_call.1} parent=1 // pred_fallthru
      _
    // Predicated region
    $region14: #{tpu_custom_call.1} parent=1 // pred_check
      _
    $region15: #{tpu_custom_call.1} parent=1 // pred_check_branch
      %1254 = sbr.rel (0) target = $region17
    $region16: #{tpu_custom_call.1} parent=1 // pred_region
      %s1256 = ssub.s32 512, 512
      %1257 = vsyncadd [#allocation7], %s1256
      %s1258 = sshll.u32 [#allocation6], 4
      %s1259 = int_to_ptr.vmem [resolvable:$true] %s1258
      %1264 = dma.vmem_to_hbm [thread:$0]  %s1259, 512, %s2, [#allocation7], 128, 128, 8
    $region17: #{tpu_custom_call.1} parent=1 // pred_fallthru
      _
    // Predicated region
    $region18: #{tpu_custom_call.1} parent=1 // pred_check
      _
    $region19: #{tpu_custom_call.1} parent=1 // pred_check_branch
      %1266 = sbr.rel (0) target = $region21
    $region20: #{tpu_custom_call.1} parent=1 // pred_region
      %1267 = dma.done [#allocation4], 2048
    $region21: #{tpu_custom_call.1} parent=1 // pred_fallthru
      _
    // Predicated region
    $region22: #{tpu_custom_call.1} parent=1 // pred_check
      _
    $region23: #{tpu_custom_call.1} parent=1 // pred_check_branch
      %1269 = sbr.rel (0) target = $region25
    $region24: #{tpu_custom_call.1} parent=1 // pred_region
      %1270 = dma.done [#allocation7], 512
    $region25: #{tpu_custom_call.1} parent=1 // pred_fallthru
      _
    %1271 = vsyncpa [#allocation3], 1
    %1272 = vsyncpa [#allocation4], 1
    %1273 = vsyncpa [#allocation7], 1

// kernel: tpu_custom_call.1
$region0: #{tpu_custom_call.1}
  #allocation0 [shape = 'u32[]', space=smem, size = 0x4, offset = 0x4, fixed_abs, tag = 'smem constant byte address 0x4 - core index']
  #allocation1 [shape = 'u32[144,128]{1,0:T(1,128)}', space=vmem, size = 0x12000, scoped, tag = 'internal scratch']
  %s0 = inlined_call_operand.hbm [shape: f32[8,128], index: 0, kind: input, shape index: {}]
  %s1 = inlined_call_operand.hbm [shape: f32[16,128], index: 1, kind: output, shape index: {}]
  %s2 = sld [smem:[#allocation0]]
  $region41: #{tpu_custom_call.1} parent=0
    _
  %s4 = ssub.s32 1, %s2
  %s5 = scalar_select 0, %s4, %s2
  $region1: #{tpu_custom_call.1} parent=0
    #allocation2 [shape = 'u8[4096]{0}', space=vmem, size = 0x1000, scoped, tag = 'input window, operand 0, single buffered']
    #allocation3 [shape = 's32[2]{0}', space=sflag, size = 0x8, scoped, tag = 'scoped memory for tpu_custom_call.1']
    #allocation4 [shape = 's32[2]{0}', space=sflag, size = 0x8, scoped, tag = 'scoped memory for tpu_custom_call.1']
    #allocation5 [shape = 'u8[8192]{0}', space=vmem, size = 0x2000, scoped, tag = 'output window, operand 0']
    %6 = vsyncpa [#allocation3], 0
    %7 = vsyncpa [#allocation4], 0
    %s8 = scalar_lea.sflag [#allocation4], 1
    %9 = vsyncpa %s8, 0
    loop: start=0, step=1, limit=4
    $region2: #{tpu_custom_call.1} parent=1 // loop_pre_header
      _
    $region3: #{tpu_custom_call.1} parent=1 // loop_header
      %s11 = sphi 0, %s15
      %p12 = scmp.ge.s32.totalorder %s11, 4
      %s19 = sphi 0, %s19
      %s21 = sphi 0, %s19
      %s22 = sphi 0, %s21
      %s36 = sphi 0, %s22
      %s42 = sphi 0, %s44
      %s45 = sphi 0, %s42
      %s46 = sphi 0, %s45
      %s62 = sphi 0, %s46
    $region4: #{tpu_custom_call.1} parent=1 // loop_header_branch
      %14 = sbr.rel (%p12) target = $region8
    $region5: #{tpu_custom_call.1} parent=1 // loop_body
      %s16 = ssub.s32 %s11, 1
      %s17 = ssub.s32 %s11, 2
      %s18 = sadd.s32 %s11, 1
      %s20 = sadd.s32 %s19, 1
      %p23 = scmp.eq.s32.totalorder %s11, 1
      %p24 = scmp.ne.s32.totalorder %s19, %s21
      %p25 = scmp.eq.s32.totalorder %s11, 0
      %p26 = por %p24, %p25
      %p27 = scmp.ne.s32.totalorder %s19, %s21
      %p28 = scmp.eq.s32.totalorder %s16, 1
      %p29 = por %p27, %p28
      %p30 = scmp.ne.s32.totalorder %s21, %s22
      %p31 = scmp.eq.s32.totalorder %s16, 0
      %p32 = por %p30, %p31
      %p33 = scmp.ne.s32.totalorder %s21, %s22
      %p34 = scmp.eq.s32.totalorder %s17, 1
      %p35 = por %p33, %p34
      %p37 = scmp.ne.s32.totalorder %s22, %s36
      %p38 = scmp.eq.s32.totalorder %s17, 0
      %p39 = por %p37, %p38
      %s40 = ssub.s32 %s11, %s18
      %p41 = scmp.eq.s32.totalorder %s40, 0
      %s43 = sadd.s32 %s42, 1
      %s44 = scalar_select %p41, %s42, %s43
      %p47 = pneg %p41
      %p48 = scmp.eq.s32.totalorder %s11, 1
      %p49 = por %p47, %p48
      %p50 = scmp.ne.s32.totalorder %s42, %s45
      %p51 = scmp.eq.s32.totalorder %s11, 0
      %p52 = por %p50, %p51
      %p53 = scmp.ne.s32.totalorder %s42, %s45
      %p54 = scmp.eq.s32.totalorder %s16, 1
      %p55 = por %p53, %p54
      %p56 = scmp.ne.s32.totalorder %s45, %s46
      %p57 = scmp.eq.s32.totalorder %s16, 0
      %p58 = por %p56, %p57
      %p59 = scmp.ne.s32.totalorder %s45, %s46
      %p60 = scmp.eq.s32.totalorder %s17, 1
      %p61 = por %p59, %p60
      %p63 = scmp.ne.s32.totalorder %s46, %s62
      %p64 = scmp.eq.s32.totalorder %s17, 0
      %p65 = por %p63, %p64
      %p66 = scmp.le.s32.totalorder 1, %s11
      %p67 = scmp.lt.s32.totalorder %s11, 3
      %p68 = pnand %p66, %p67
      %p69 = pneg %p68
      // Predicated region
      $region9: #{tpu_custom_call.1} parent=5 // pred_check
        _
      $region10: #{tpu_custom_call.1} parent=5 // pred_check_branch
        %71 = sbr.rel (%p68) target = $region12
      $region11: #{tpu_custom_call.1} parent=5 // pred_region
        %s72 = ssub.s32 %s11, 1
        // Predicated region
        $region13: #{tpu_custom_call.1} parent=11 // pred_check
          %p73 = pneg %p32
        $region14: #{tpu_custom_call.1} parent=11 // pred_check_branch
          %75 = sbr.rel (%p73) target = $region16
        $region15: #{tpu_custom_call.1} parent=11 // pred_region
          %s77 = ssub.s32 128, 128
          %78 = vsyncadd [#allocation3], %s77
          %s80 = sshll.u32 [#allocation2], 4
          %s81 = int_to_ptr.vmem [resolvable:$true] %s80
          %83 = dma.hbm_to_vmem [thread:$0]  %s0, 128, %s81, [#allocation3]
        $region16: #{tpu_custom_call.1} parent=11 // pred_fallthru
          _
      $region12: #{tpu_custom_call.1} parent=5 // pred_fallthru
        _
      %p84 = scmp.lt.s32.totalorder %s11, 2
      // Predicated region
      $region17: #{tpu_custom_call.1} parent=5 // pred_check
        %p85 = pneg %p84
      $region18: #{tpu_custom_call.1} parent=5 // pred_check_branch
        %87 = sbr.rel (%p85) target = $region20
      $region19: #{tpu_custom_call.1} parent=5 // pred_region
        _
      $region20: #{tpu_custom_call.1} parent=5 // pred_fallthru
        _
      %p88 = scmp.le.s32.totalorder 1, %s11
      %p89 = scmp.lt.s32.totalorder %s11, 3
      %p90 = pnand %p88, %p89
      %p91 = pneg %p90
      // Predicated region
      $region21: #{tpu_custom_call.1} parent=5 // pred_check
        _
      $region22: #{tpu_custom_call.1} parent=5 // pred_check_branch
        %93 = sbr.rel (%p90) target = $region24
      $region23: #{tpu_custom_call.1} parent=5 // pred_region
        %s94 = ssub.s32 %s11, 1
        // Predicated region
        $region25: #{tpu_custom_call.1} parent=23 // pred_check
          %p95 = pneg %p32
        $region26: #{tpu_custom_call.1} parent=23 // pred_check_branch
          %97 = sbr.rel (%p95) target = $region28
        $region27: #{tpu_custom_call.1} parent=23 // pred_region
          %98 = dma.done [#allocation3], 128
        $region28: #{tpu_custom_call.1} parent=23 // pred_fallthru
          _
        %p99 = pneg %p32
        %p100 = pneg %p29
        %p101 = pneg %p58
        %p102 = pneg %p55
        %s103 = sand.u32 %s45, 1
        %s104 = scalar_lea.sflag [#allocation4], %s103
        %s105 = sand.u32 %s45, 1
        %s106 = smul.addr %s105, 8
        %s107 = scalar_lea.vmem [#allocation5], %s106
        %v108 = vld [vmem:[#allocation2] sm:$0xff]
        %v109 = vadd.f32 %v108, 1.0
        %110 = vst [vmem:[%s107] sm:$0xff] %v109
        %s111 = sand.u32 %s45, 1
        %s112 = scalar_lea.sflag [#allocation4], %s111
        %s113 = sand.u32 %s45, 1
        %s114 = smul.addr %s113, 8
        %s115 = scalar_lea.vmem [#allocation5], %s114
        // Predicated region
        $region29: #{tpu_custom_call.1} parent=23 // pred_check
          %p116 = pneg %p55
        $region30: #{tpu_custom_call.1} parent=23 // pred_check_branch
          %118 = sbr.rel (%p116) target = $region32
        $region31: #{tpu_custom_call.1} parent=23 // pred_region
          %s120 = ssub.s32 128, 128
          %121 = vsyncadd %s112, %s120
          %s122 = smul.addr %s16, 128
          %s123 = scalar_lea.hbm %s1, %s122
          %s125 = sshll.u32 %s115, 4
          %s126 = int_to_ptr.vmem [resolvable:$true] %s125
          %128 = dma.vmem_to_hbm [thread:$0]  %s126, 128, %s123, %s112
        $region32: #{tpu_custom_call.1} parent=23 // pred_fallthru
          _
      $region24: #{tpu_custom_call.1} parent=5 // pred_fallthru
        _
      %p129 = scmp.le.s32.totalorder 2, %s11
      // Predicated region
      $region33: #{tpu_custom_call.1} parent=5 // pred_check
        %p130 = pneg %p129
      $region34: #{tpu_custom_call.1} parent=5 // pred_check_branch
        %132 = sbr.rel (%p130) target = $region36
      $region35: #{tpu_custom_call.1} parent=5 // pred_region
        %s133 = ssub.s32 %s11, 2
        // Predicated region
        $region37: #{tpu_custom_call.1} parent=35 // pred_check
          %p134 = pneg %p61
        $region38: #{tpu_custom_call.1} parent=35 // pred_check_branch
          %136 = sbr.rel (%p134) target = $region40
        $region39: #{tpu_custom_call.1} parent=35 // pred_region
          %s137 = sand.u32 %s46, 1
          %s138 = scalar_lea.sflag [#allocation4], %s137
          %s139 = sand.u32 %s46, 1
          %s140 = smul.addr %s139, 8
          %s141 = scalar_lea.vmem [#allocation5], %s140
          %142 = dma.done %s138, 128
        $region40: #{tpu_custom_call.1} parent=35 // pred_fallthru
          _
      $region36: #{tpu_custom_call.1} parent=5 // pred_fallthru
        _
    $region6: #{tpu_custom_call.1} parent=1 // loop_footer
      %s15 = sadd.s32 1, %s11
    $region7: #{tpu_custom_call.1} parent=1 // loop_footer_branch
      %10 = sbr.rel target = $region3
    $region8: #{tpu_custom_call.1} parent=1 // loop_exit
      _
    %143 = vsyncpa [#allocation3], 1
    %s144 = scalar_lea.sflag [#allocation3], 1
    %145 = vsyncpa %s144, 1
    %146 = vsyncpa [#allocation4], 1
    %s147 = scalar_lea.sflag [#allocation4], 1
    %148 = vsyncpa %s147, 1

// kernel: tpu_custom_call.1
$region0: #{tpu_custom_call.1}
  #allocation0 [shape = 'u32[]', space=smem, size = 0x4, offset = 0x4, fixed_abs, tag = 'smem constant byte address 0x4 - core index']
  #allocation1 [shape = 'u32[144,128]{1,0:T(1,128)}', space=vmem, size = 0x12000, scoped, tag = 'internal scratch']
  %s0 = inlined_call_operand.hbm [shape: f32[2,16,128], index: 0, kind: input, shape index: {}]
  %s1 = inlined_call_operand.vmem [shape: f32[1,128], index: 1, kind: input, shape index: {}]
  %s2 = inlined_call_operand.vmem [shape: f32[1,128], index: 2, kind: input, shape index: {}]
  %s3 = inlined_call_operand.hbm [shape: f32[128,384], index: 3, kind: input, shape index: {}]
  %s4 = inlined_call_operand.vmem [shape: f32[1,384], index: 4, kind: input, shape index: {}]
  %s5 = inlined_call_operand.hbm [shape: f32[128,128], index: 5, kind: input, shape index: {}]
  %s6 = inlined_call_operand.vmem [shape: f32[1,128], index: 6, kind: input, shape index: {}]
  %s7 = inlined_call_operand.vmem [shape: f32[1,128], index: 7, kind: input, shape index: {}]
  %s8 = inlined_call_operand.vmem [shape: f32[1,128], index: 8, kind: input, shape index: {}]
  %s9 = inlined_call_operand.hbm [shape: f32[384,128], index: 9, kind: input, shape index: {}]
  %s10 = inlined_call_operand.vmem [shape: f32[1,128], index: 10, kind: input, shape index: {}]
  %s11 = inlined_call_operand.hbm [shape: f32[384,128], index: 11, kind: input, shape index: {}]
  %s12 = inlined_call_operand.vmem [shape: f32[1,128], index: 12, kind: input, shape index: {}]
  %s13 = inlined_call_operand.hbm [shape: f32[2,16,128], index: 13, kind: output, shape index: {}]
  %s14 = sld [smem:[#allocation0]]
  $region82: #{tpu_custom_call.1} parent=0
    _
  %s16 = ssub.s32 1, %s14
  %s17 = scalar_select 0, %s16, %s14
  $region1: #{tpu_custom_call.1} parent=0
    #allocation2 [shape = 'u8[16384]{0}', space=vmem, size = 0x4000, scoped, tag = 'input window, operand 0, single buffered']
    #allocation3 [shape = 's32[1]{0}', space=sflag, size = 0x4, scoped, tag = 'scoped memory for tpu_custom_call.1']
    #allocation4 [shape = 's32[1]{0}', space=sflag, size = 0x4, scoped, tag = 'scoped memory for tpu_custom_call.1']
    #allocation5 [shape = 'u8[196608]{0}', space=vmem, size = 0x30000, scoped, tag = 'input window, operand 3, single buffered']
    #allocation6 [shape = 's32[1]{0}', space=sflag, size = 0x4, scoped, tag = 'scoped memory for tpu_custom_call.1']
    #allocation7 [shape = 'u8[65536]{0}', space=vmem, size = 0x10000, scoped, tag = 'input window, operand 5, single buffered']
    #allocation8 [shape = 'u8[196608]{0}', space=vmem, size = 0x30000, scoped, tag = 'input window, operand 9, single buffered']
    #allocation9 [shape = 's32[1]{0}', space=sflag, size = 0x4, scoped, tag = 'scoped memory for tpu_custom_call.1']
    #allocation10 [shape = 'u8[196608]{0}', space=vmem, size = 0x30000, scoped, tag = 'input window, operand 11, single buffered']
    #allocation11 [shape = 'u8[16384]{0}', space=vmem, size = 0x4000, scoped, tag = 'output window, operand 0, single buffered']
    %18 = vsyncpa [#allocation3], 0
    %19 = vsyncpa [#allocation6], 0
    %20 = vsyncpa [#allocation9], 0
    %21 = vsyncpa [#allocation4], 0
    // Predicated region
    $region2: #{tpu_custom_call.1} parent=1 // pred_check
      _
    $region3: #{tpu_custom_call.1} parent=1 // pred_check_branch
      %23 = sbr.rel (0) target = $region5
    $region4: #{tpu_custom_call.1} parent=1 // pred_region
      %s25 = ssub.s32 512, 512
      %26 = vsyncadd [#allocation3], %s25
      %s27 = sshll.u32 [#allocation2], 4
      %s28 = int_to_ptr.vmem [resolvable:$true] %s27
      %33 = dma.hbm_to_vmem [thread:$0]  %s0, 512, %s28, [#allocation3], 128, 128, 8
    $region5: #{tpu_custom_call.1} parent=1 // pred_fallthru
      _
    // Predicated region
    $region6: #{tpu_custom_call.1} parent=1 // pred_check
      _
    $region7: #{tpu_custom_call.1} parent=1 // pred_check_branch
      %35 = sbr.rel (0) target = $region9
    $region8: #{tpu_custom_call.1} parent=1 // pred_region
      _
    $region9: #{tpu_custom_call.1} parent=1 // pred_fallthru
      _
    // Predicated region
    $region10: #{tpu_custom_call.1} parent=1 // pred_check
      _
    $region11: #{tpu_custom_call.1} parent=1 // pred_check_branch
      %37 = sbr.rel (0) target = $region13
    $region12: #{tpu_custom_call.1} parent=1 // pred_region
      _
    $region13: #{tpu_custom_call.1} parent=1 // pred_fallthru
      _
    // Predicated region
    $region14: #{tpu_custom_call.1} parent=1 // pred_check
      _
    $region15: #{tpu_custom_call.1} parent=1 // pred_check_branch
      %39 = sbr.rel (0) target = $region17
    $region16: #{tpu_custom_call.1} parent=1 // pred_region
      %s41 = ssub.s32 6144, 6144
      %42 = vsyncadd [#allocation6], %s41
      %s43 = sshll.u32 [#allocation5], 4
      %s44 = int_to_ptr.vmem [resolvable:$true] %s43
      %49 = dma.hbm_to_vmem [thread:$0]  %s3, 6144, %s44, [#allocation6], 384, 384, 24
    $region17: #{tpu_custom_call.1} parent=1 // pred_fallthru
      _
    // Predicated region
    $region18: #{tpu_custom_call.1} parent=1 // pred_check
      _
    $region19: #{tpu_custom_call.1} parent=1 // pred_check_branch
      %51 = sbr.rel (0) target = $region21
    $region20: #{tpu_custom_call.1} parent=1 // pred_region
      _
    $region21: #{tpu_custom_call.1} parent=1 // pred_fallthru
      _
    // Predicated region
    $region22: #{tpu_custom_call.1} parent=1 // pred_check
      _
    $region23: #{tpu_custom_call.1} parent=1 // pred_check_branch
      %53 = sbr.rel (0) target = $region25
    $region24: #{tpu_custom_call.1} parent=1 // pred_region
      %s55 = ssub.s32 2048, 2048
      %56 = vsyncadd [#allocation6], %s55
      %s57 = sshll.u32 [#allocation7], 4
      %s58 = int_to_ptr.vmem [resolvable:$true] %s57
      %63 = dma.hbm_to_vmem [thread:$0]  %s5, 2048, %s58, [#allocation6], 128, 128, 8
    $region25: #{tpu_custom_call.1} parent=1 // pred_fallthru
      _
    // Predicated region
    $region26: #{tpu_custom_call.1} parent=1 // pred_check
      _
    $region27: #{tpu_custom_call.1} parent=1 // pred_check_branch
      %65 = sbr.rel (0) target = $region29
    $region28: #{tpu_custom_call.1} parent=1 // pred_region
      _
    $region29: #{tpu_custom_call.1} parent=1 // pred_fallthru
      _
    // Predicated region
    $region30: #{tpu_custom_call.1} parent=1 // pred_check
      _
    $region31: #{tpu_custom_call.1} parent=1 // pred_check_branch
      %67 = sbr.rel (0) target = $region33
    $region32: #{tpu_custom_call.1} parent=1 // pred_region
      _
    $region33: #{tpu_custom_call.1} parent=1 // pred_fallthru
      _
    // Predicated region
    $region34: #{tpu_custom_call.1} parent=1 // pred_check
      _
    $region35: #{tpu_custom_call.1} parent=1 // pred_check_branch
      %69 = sbr.rel (0) target = $region37
    $region36: #{tpu_custom_call.1} parent=1 // pred_region
      _
    $region37: #{tpu_custom_call.1} parent=1 // pred_fallthru
      _
    // Predicated region
    $region38: #{tpu_custom_call.1} parent=1 // pred_check
      _
    $region39: #{tpu_custom_call.1} parent=1 // pred_check_branch
      %71 = sbr.rel (0) target = $region41
    $region40: #{tpu_custom_call.1} parent=1 // pred_region
      %s73 = ssub.s32 6144, 6144
      %74 = vsyncadd [#allocation9], %s73
      %s75 = sshll.u32 [#allocation8], 4
      %s76 = int_to_ptr.vmem [resolvable:$true] %s75
      %81 = dma.hbm_to_vmem [thread:$0]  %s9, 6144, %s76, [#allocation9], 128, 128, 8
    $region41: #{tpu_custom_call.1} parent=1 // pred_fallthru
      _
    // Predicated region
    $region42: #{tpu_custom_call.1} parent=1 // pred_check
      _
    $region43: #{tpu_custom_call.1} parent=1 // pred_check_branch
      %83 = sbr.rel (0) target = $region45
    $region44: #{tpu_custom_call.1} parent=1 // pred_region
      _
    $region45: #{tpu_custom_call.1} parent=1 // pred_fallthru
      _
    // Predicated region
    $region46: #{tpu_custom_call.1} parent=1 // pred_check
      _
    $region47: #{tpu_custom_call.1} parent=1 // pred_check_branch
      %85 = sbr.rel (0) target = $region49
    $region48: #{tpu_custom_call.1} parent=1 // pred_region
      %s87 = ssub.s32 6144, 6144
      %88 = vsyncadd [#allocation9], %s87
      %s89 = sshll.u32 [#allocation10], 4
      %s90 = int_to_ptr.vmem [resolvable:$true] %s89
      %95 = dma.hbm_to_vmem [thread:$0]  %s11, 6144, %s90, [#allocation9], 128, 128, 8
    $region49: #{tpu_custom_call.1} parent=1 // pred_fallthru
      _
    // Predicated region
    $region50: #{tpu_custom_call.1} parent=1 // pred_check
      _
    $region51: #{tpu_custom_call.1} parent=1 // pred_check_branch
      %97 = sbr.rel (0) target = $region53
    $region52: #{tpu_custom_call.1} parent=1 // pred_region
      _
    $region53: #{tpu_custom_call.1} parent=1 // pred_fallthru
      _
    // Predicated region
    $region54: #{tpu_custom_call.1} parent=1 // pred_check
      _
    $region55: #{tpu_custom_call.1} parent=1 // pred_check_branch
      %99 = sbr.rel (0) target = $region57
    $region56: #{tpu_custom_call.1} parent=1 // pred_region
      %100 = dma.done [#allocation3], 512
    $region57: #{tpu_custom_call.1} parent=1 // pred_fallthru
      _
    // Predicated region
    $region58: #{tpu_custom_call.1} parent=1 // pred_check
      _
    $region59: #{tpu_custom_call.1} parent=1 // pred_check_branch
      %102 = sbr.rel (0) target = $region61
    $region60: #{tpu_custom_call.1} parent=1 // pred_region
      %103 = dma.done [#allocation6], 6144
    $region61: #{tpu_custom_call.1} parent=1 // pred_fallthru
      _
    // Predicated region
    $region62: #{tpu_custom_call.1} parent=1 // pred_check
      _
    $region63: #{tpu_custom_call.1} parent=1 // pred_check_branch
      %105 = sbr.rel (0) target = $region65
    $region64: #{tpu_custom_call.1} parent=1 // pred_region
      %106 = dma.done [#allocation6], 2048
    $region65: #{tpu_custom_call.1} parent=1 // pred_fallthru
      _
    // Predicated region
    $region66: #{tpu_custom_call.1} parent=1 // pred_check
      _
    $region67: #{tpu_custom_call.1} parent=1 // pred_check_branch
      %108 = sbr.rel (0) target = $region69
    $region68: #{tpu_custom_call.1} parent=1 // pred_region
      %109 = dma.done [#allocation9], 6144
    $region69: #{tpu_custom_call.1} parent=1 // pred_fallthru
      _
    // Predicated region
    $region70: #{tpu_custom_call.1} parent=1 // pred_check
      _
    $region71: #{tpu_custom_call.1} parent=1 // pred_check_branch
      %111 = sbr.rel (0) target = $region73
    $region72: #{tpu_custom_call.1} parent=1 // pred_region
      %112 = dma.done [#allocation9], 6144
    $region73: #{tpu_custom_call.1} parent=1 // pred_fallthru
      _
    %v113 = vld [vmem:[#allocation2] sm:$0xff]
    %v114 = vld [vmem:[#allocation2 + $0x8] sm:$0xff]
    %v115 = vld [vmem:[#allocation2 + $0x10] sm:$0xff]
    %v116 = vld [vmem:[#allocation2 + $0x18] sm:$0xff]
    %v117 = vld [vmem:[%s1] sm:$0x1]
    %v118 = vld [vmem:[%s2] sm:$0x1]
    %119 = vadd.xlane.f32.xlu0 %v113
    %v120 = vpop.xlane.xlu0 %119
    %121 = vadd.xlane.f32.xlu0 %v114
    %v122 = vpop.xlane.xlu0 %121
    %123 = vadd.xlane.f32.xlu0 %v115
    %v124 = vpop.xlane.xlu0 %123
    %125 = vadd.xlane.f32.xlu0 %v116
    %v126 = vpop.xlane.xlu0 %125
    %v127 = vrcp.pop 128.0
    %v128 = vmul.f32 %v120, %v127
    %v129 = vmul.f32 %v122, %v127
    %v130 = vmul.f32 %v124, %v127
    %v131 = vmul.f32 %v126, %v127
    %v132 = vsub.f32 %v113, %v128
    %v133 = vsub.f32 %v114, %v129
    %v134 = vsub.f32 %v115, %v130
    %v135 = vsub.f32 %v116, %v131
    %v136 = vmul.f32 %v132, %v132
    %v137 = vmul.f32 %v133, %v133
    %v138 = vmul.f32 %v134, %v134
    %v139 = vmul.f32 %v135, %v135
    %140 = vadd.xlane.f32.xlu0 %v136
    %v141 = vpop.xlane.xlu0 %140
    %142 = vadd.xlane.f32.xlu0 %v137
    %v143 = vpop.xlane.xlu0 %142
    %144 = vadd.xlane.f32.xlu0 %v138
    %v145 = vpop.xlane.xlu0 %144
    %146 = vadd.xlane.f32.xlu0 %v139
    %v147 = vpop.xlane.xlu0 %146
    %v148 = vmul.f32 %v141, %v127
    %v149 = vmul.f32 %v143, %v127
    %v150 = vmul.f32 %v145, %v127
    %v151 = vmul.f32 %v147, %v127
    %v152 = vadd.f32 %v148, 1e-05
    %v153 = vadd.f32 %v149, 1e-05
    %v154 = vadd.f32 %v150, 1e-05
    %v155 = vadd.f32 %v151, 1e-05
    %v156 = vrsqrt.pop %v152
    %v157 = vrsqrt.pop %v153
    %v158 = vrsqrt.pop %v154
    %v159 = vrsqrt.pop %v155
    %v160 = vmul.f32 %v132, %v156
    %v161 = vmul.f32 %v133, %v157
    %v162 = vmul.f32 %v134, %v158
    %v163 = vmul.f32 %v135, %v159
    %v165 = vlaneseq
    %v166 = vshrl.u32 %v165, 7
    %v167 = vsub.s32 0, %v166
    %v168 = vrot.slane %v117, %v167
    %v170 = vmul.f32 %v160, %v168
    %v171 = vmul.f32 %v161, %v168
    %v172 = vmul.f32 %v162, %v168
    %v173 = vmul.f32 %v163, %v168
    %v175 = vlaneseq
    %v176 = vshrl.u32 %v175, 7
    %v177 = vsub.s32 0, %v176
    %v178 = vrot.slane %v118, %v177
    %v180 = vadd.f32 %v170, %v178
    %v181 = vadd.f32 %v171, %v178
    %v182 = vadd.f32 %v172, %v178
    %v183 = vadd.f32 %v173, %v178
    %v184 = vld [vmem:[#allocation5] sm:$0xff]
    %v185 = vld [vmem:[#allocation5 + $0x8] sm:$0xff]
    %v186 = vld [vmem:[#allocation5 + $0x10] sm:$0xff]
    %v187 = vld [vmem:[#allocation5 + $0x18] sm:$0xff]
    %v188 = vld [vmem:[#allocation5 + $0x20] sm:$0xff]
    %v189 = vld [vmem:[#allocation5 + $0x28] sm:$0xff]
    %v190 = vld [vmem:[#allocation5 + $0x30] sm:$0xff]
    %v191 = vld [vmem:[#allocation5 + $0x38] sm:$0xff]
    %v192 = vld [vmem:[#allocation5 + $0x40] sm:$0xff]
    %v193 = vld [vmem:[#allocation5 + $0x48] sm:$0xff]
    %v194 = vld [vmem:[#allocation5 + $0x50] sm:$0xff]
    %v195 = vld [vmem:[#allocation5 + $0x58] sm:$0xff]
    %v196 = vld [vmem:[#allocation5 + $0x60] sm:$0xff]
    %v197 = vld [vmem:[#allocation5 + $0x68] sm:$0xff]
    %v198 = vld [vmem:[#allocation5 + $0x70] sm:$0xff]
    %v199 = vld [vmem:[#allocation5 + $0x78] sm:$0xff]
    %v200 = vld [vmem:[#allocation5 + $0x80] sm:$0xff]
    %v201 = vld [vmem:[#allocation5 + $0x88] sm:$0xff]
    %v202 = vld [vmem:[#allocation5 + $0x90] sm:$0xff]
    %v203 = vld [vmem:[#allocation5 + $0x98] sm:$0xff]
    %v204 = vld [vmem:[#allocation5 + $0xa0] sm:$0xff]
    %v205 = vld [vmem:[#allocation5 + $0xa8] sm:$0xff]
    %v206 = vld [vmem:[#allocation5 + $0xb0] sm:$0xff]
    %v207 = vld [vmem:[#allocation5 + $0xb8] sm:$0xff]
    %v208 = vld [vmem:[#allocation5 + $0xc0] sm:$0xff]
    %v209 = vld [vmem:[#allocation5 + $0xc8] sm:$0xff]
    %v210 = vld [vmem:[#allocation5 + $0xd0] sm:$0xff]
    %v211 = vld [vmem:[#allocation5 + $0xd8] sm:$0xff]
    %v212 = vld [vmem:[#allocation5 + $0xe0] sm:$0xff]
    %v213 = vld [vmem:[#allocation5 + $0xe8] sm:$0xff]
    %v214 = vld [vmem:[#allocation5 + $0xf0] sm:$0xff]
    %v215 = vld [vmem:[#allocation5 + $0xf8] sm:$0xff]
    %v216 = vld [vmem:[#allocation5 + $0x100] sm:$0xff]
    %v217 = vld [vmem:[#allocation5 + $0x108] sm:$0xff]
    %v218 = vld [vmem:[#allocation5 + $0x110] sm:$0xff]
    %v219 = vld [vmem:[#allocation5 + $0x118] sm:$0xff]
    %v220 = vld [vmem:[#allocation5 + $0x120] sm:$0xff]
    %v221 = vld [vmem:[#allocation5 + $0x128] sm:$0xff]
    %v222 = vld [vmem:[#allocation5 + $0x130] sm:$0xff]
    %v223 = vld [vmem:[#allocation5 + $0x138] sm:$0xff]
    %v224 = vld [vmem:[#allocation5 + $0x140] sm:$0xff]
    %v225 = vld [vmem:[#allocation5 + $0x148] sm:$0xff]
    %v226 = vld [vmem:[#allocation5 + $0x150] sm:$0xff]
    %v227 = vld [vmem:[#allocation5 + $0x158] sm:$0xff]
    %v228 = vld [vmem:[#allocation5 + $0x160] sm:$0xff]
    %v229 = vld [vmem:[#allocation5 + $0x168] sm:$0xff]
    %v230 = vld [vmem:[#allocation5 + $0x170] sm:$0xff]
    %v231 = vld [vmem:[#allocation5 + $0x178] sm:$0xff]
    %v232 = vld [vmem:[%s4] sm:$0x7]
    %v234 = vlaneseq
    %v235 = vshrl.u32 %v234, 7
    %v236 = vsub.s32 0, %v235
    %v237 = vrot.slane %v232, %v236
    %v238 = vlaneseq
    %v239 = vshrl.u32 %v238, 7
    %v240 = vsub.s32 1, %v239
    %v241 = vrot.slane %v232, %v240
    %v242 = vlaneseq
    %v243 = vshrl.u32 %v242, 7
    %v244 = vsub.s32 2, %v243
    %v245 = vrot.slane %v232, %v244
    %249 = vmatprep.subr.mxu0 %v185
    %250 = vmatpush1.msra.mxu0 %v184
    %251 = vmatprep.subr.mxu0 %v188
    %252 = vmatpush1.msra.mxu0 %v187
    %253 = vmatprep.subr.mxu0 %v191
    %254 = vmatpush1.msra.mxu0 %v190
    %255 = vmatprep.subr.mxu0 %v194
    %256 = vmatpush1.msra.mxu0 %v193
    %257 = vmatprep.subr.mxu0 %v197
    %258 = vmatpush1.msra.mxu0 %v196
    %259 = vmatprep.subr.mxu0 %v200
    %260 = vmatpush1.msra.mxu0 %v199
    %261 = vmatprep.subr.mxu0 %v203
    %262 = vmatpush1.msra.mxu0 %v202
    %263 = vmatprep.subr.mxu0 %v206
    %264 = vmatpush1.msra.mxu0 %v205
    %265 = vmatprep.subr.mxu0 %v209
    %266 = vmatpush1.msra.mxu0 %v208
    %267 = vmatprep.subr.mxu0 %v212
    %268 = vmatpush1.msra.mxu0 %v211
    %269 = vmatprep.subr.mxu0 %v215
    %270 = vmatpush1.msra.mxu0 %v214
    %271 = vmatprep.subr.mxu0 %v218
    %272 = vmatpush1.msra.mxu0 %v217
    %273 = vmatprep.subr.mxu0 %v221
    %274 = vmatpush1.msra.mxu0 %v220
    %275 = vmatprep.subr.mxu0 %v224
    %276 = vmatpush1.msra.mxu0 %v223
    %277 = vmatprep.subr.mxu0 %v227
    %278 = vmatpush1.msra.mxu0 %v226
    %279 = vmatprep.subr.mxu0 %v230
    %280 = vmatpush1.msra.mxu0 %v229
    %281 = vmatprep.subr.mxu0 0.0
    %282 = vmatpush1.msra.mxu0 0.0
    %283 = vmatprep.subr.mxu0 0.0
    %284 = vmatpush1.msra.mxu0 0.0
    %285 = vmatprep.subr.mxu0 0.0
    %286 = vmatpush1.msra.mxu0 0.0
    %287 = vmatprep.subr.mxu0 0.0
    %288 = vmatpush1.msra.mxu0 0.0
    %289 = vmatprep.subr.mxu0 0.0
    %290 = vmatpush1.msra.mxu0 0.0
    %291 = vmatprep.subr.mxu0 0.0
    %292 = vmatpush1.msra.mxu0 0.0
    %293 = vmatprep.subr.mxu0 0.0
    %294 = vmatpush1.msra.mxu0 0.0
    %295 = vmatprep.subr.mxu0 0.0
    %296 = vmatpush1.msra.mxu0 0.0
    %297 = vmatprep.subr.mxu0 0.0
    %298 = vmatpush1.msra.mxu0 0.0
    %299 = vmatprep.subr.mxu0 0.0
    %300 = vmatpush1.msra.mxu0 0.0
    %301 = vmatprep.subr.mxu0 0.0
    %302 = vmatpush1.msra.mxu0 0.0
    %303 = vmatprep.subr.mxu0 0.0
    %304 = vmatpush1.msra.mxu0 0.0
    %305 = vmatprep.subr.mxu0 0.0
    %306 = vmatpush1.msra.mxu0 0.0
    %307 = vmatprep.subr.mxu0 0.0
    %308 = vmatpush1.msra.mxu0 0.0
    %309 = vmatprep.subr.mxu0 0.0
    %310 = vmatpush1.msra.mxu0 0.0
    %311 = vmatprep.subr.mxu0 0.0
    %312 = vmatpush1.msra.mxu0 0.0
    %313 = vmatprep.mubr.f32.mxu0 0.0
    %314 = vmatmul.mubr.f32.gmra.mrb[0].mxu0 %v180
    %v315 = vpop.f32.mrb[0].mxu0
    %v316 = vadd.f32 %v237, %v315
    %v317 = vpop.f32.mrb[0].mxu0
    %v318 = vadd.f32 %v241, %v317
    %319 = vmatprep.mubr.f32.mxu0 0.0
    %320 = vmatmul.mubr.f32.gmra.mrb[0].mxu0 %v181
    %v321 = vpop.f32.mrb[0].mxu0
    %v322 = vadd.f32 %v237, %v321
    %v323 = vpop.f32.mrb[0].mxu0
    %v324 = vadd.f32 %v241, %v323
    %325 = vmatprep.mubr.f32.mxu0 0.0
    %326 = vmatmul.mubr.f32.gmra.mrb[0].mxu0 %v182
    %v327 = vpop.f32.mrb[0].mxu0
    %v328 = vadd.f32 %v237, %v327
    %v329 = vpop.f32.mrb[0].mxu0
    %v330 = vadd.f32 %v241, %v329
    %331 = vmatprep.mubr.f32.mxu0 0.0
    %332 = vmatmul.mubr.f32.gmra.mrb[0].mxu0 %v183
    %v333 = vpop.f32.mrb[0].mxu0
    %v334 = vadd.f32 %v237, %v333
    %v335 = vpop.f32.mrb[0].mxu0
    %v336 = vadd.f32 %v241, %v335
    %337 = vdwg.mxu0
    %338 = vmatprep.subr.mxu0 0.0
    %339 = vmatpush1.msra.mxu0 %v186
    %340 = vmatprep.subr.mxu0 0.0
    %341 = vmatpush1.msra.mxu0 %v189
    %342 = vmatprep.subr.mxu0 0.0
    %343 = vmatpush1.msra.mxu0 %v192
    %344 = vmatprep.subr.mxu0 0.0
    %345 = vmatpush1.msra.mxu0 %v195
    %346 = vmatprep.subr.mxu0 0.0
    %347 = vmatpush1.msra.mxu0 %v198
    %348 = vmatprep.subr.mxu0 0.0
    %349 = vmatpush1.msra.mxu0 %v201
    %350 = vmatprep.subr.mxu0 0.0
    %351 = vmatpush1.msra.mxu0 %v204
    %352 = vmatprep.subr.mxu0 0.0
    %353 = vmatpush1.msra.mxu0 %v207
    %354 = vmatprep.subr.mxu0 0.0
    %355 = vmatpush1.msra.mxu0 %v210
    %356 = vmatprep.subr.mxu0 0.0
    %357 = vmatpush1.msra.mxu0 %v213
    %358 = vmatprep.subr.mxu0 0.0
    %359 = vmatpush1.msra.mxu0 %v216
    %360 = vmatprep.subr.mxu0 0.0
    %361 = vmatpush1.msra.mxu0 %v219
    %362 = vmatprep.subr.mxu0 0.0
    %363 = vmatpush1.msra.mxu0 %v222
    %364 = vmatprep.subr.mxu0 0.0
    %365 = vmatpush1.msra.mxu0 %v225
    %366 = vmatprep.subr.mxu0 0.0
    %367 = vmatpush1.msra.mxu0 %v228
    %368 = vmatprep.subr.mxu0 0.0
    %369 = vmatpush1.msra.mxu0 %v231
    %370 = vmatprep.subr.mxu0 0.0
    %371 = vmatpush1.msra.mxu0 0.0
    %372 = vmatprep.subr.mxu0 0.0
    %373 = vmatpush1.msra.mxu0 0.0
    %374 = vmatprep.subr.mxu0 0.0
    %375 = vmatpush1.msra.mxu0 0.0
    %376 = vmatprep.subr.mxu0 0.0
    %377 = vmatpush1.msra.mxu0 0.0
    %378 = vmatprep.subr.mxu0 0.0
    %379 = vmatpush1.msra.mxu0 0.0
    %380 = vmatprep.subr.mxu0 0.0
    %381 = vmatpush1.msra.mxu0 0.0
    %382 = vmatprep.subr.mxu0 0.0
    %383 = vmatpush1.msra.mxu0 0.0
    %384 = vmatprep.subr.mxu0 0.0
    %385 = vmatpush1.msra.mxu0 0.0
    %386 = vmatprep.subr.mxu0 0.0
    %387 = vmatpush1.msra.mxu0 0.0
    %388 = vmatprep.subr.mxu0 0.0
    %389 = vmatpush1.msra.mxu0 0.0
    %390 = vmatprep.subr.mxu0 0.0
    %391 = vmatpush1.msra.mxu0 0.0
    %392 = vmatprep.subr.mxu0 0.0
    %393 = vmatpush1.msra.mxu0 0.0
    %394 = vmatprep.subr.mxu0 0.0
    %395 = vmatpush1.msra.mxu0 0.0
    %396 = vmatprep.subr.mxu0 0.0
    %397 = vmatpush1.msra.mxu0 0.0
    %398 = vmatprep.subr.mxu0 0.0
    %399 = vmatpush1.msra.mxu0 0.0
    %400 = vmatprep.subr.mxu0 0.0
    %401 = vmatpush1.msra.mxu0 0.0
    %402 = vmatprep.mubr.f32.mxu0 0.0
    %403 = vmatmul.mubr.f32.gmra.mrb[0].mxu0 %v180
    %v404 = vpop.f32.mrb[0].mxu0
    %v405 = vadd.f32 %v245, %v404
    %v406 = vpop.f32.mrb[0].mxu0
    %407 = vmatprep.mubr.f32.mxu0 0.0
    %408 = vmatmul.mubr.f32.gmra.mrb[0].mxu0 %v181
    %v409 = vpop.f32.mrb[0].mxu0
    %v410 = vadd.f32 %v245, %v409
    %v411 = vpop.f32.mrb[0].mxu0
    %412 = vmatprep.mubr.f32.mxu0 0.0
    %413 = vmatmul.mubr.f32.gmra.mrb[0].mxu0 %v182
    %v414 = vpop.f32.mrb[0].mxu0
    %v415 = vadd.f32 %v245, %v414
    %v416 = vpop.f32.mrb[0].mxu0
    %417 = vmatprep.mubr.f32.mxu0 0.0
    %418 = vmatmul.mubr.f32.gmra.mrb[0].mxu0 %v183
    %v419 = vpop.f32.mrb[0].mxu0
    %v420 = vadd.f32 %v245, %v419
    %v421 = vpop.f32.mrb[0].mxu0
    %422 = vdwg.mxu0
    %425 = vrot.lane.b32.xlu0 %v316, 96
    %v426 = vpop.permute.xlu0 %425
    %427 = vrot.lane.b32.xlu0 %v322, 96
    %v428 = vpop.permute.xlu0 %427
    %429 = vrot.lane.b32.xlu0 %v316, 64
    %v430 = vpop.permute.xlu0 %429
    %431 = vrot.lane.b32.xlu0 %v322, 64
    %v432 = vpop.permute.xlu0 %431
    %433 = vrot.lane.b32.xlu0 %v316, 32
    %v434 = vpop.permute.xlu0 %433
    %435 = vrot.lane.b32.xlu0 %v322, 32
    %v436 = vpop.permute.xlu0 %435
    %439 = vrot.lane.b32.xlu0 %v328, 96
    %v440 = vpop.permute.xlu0 %439
    %441 = vrot.lane.b32.xlu0 %v334, 96
    %v442 = vpop.permute.xlu0 %441
    %443 = vrot.lane.b32.xlu0 %v328, 64
    %v444 = vpop.permute.xlu0 %443
    %445 = vrot.lane.b32.xlu0 %v334, 64
    %v446 = vpop.permute.xlu0 %445
    %447 = vrot.lane.b32.xlu0 %v328, 32
    %v448 = vpop.permute.xlu0 %447
    %449 = vrot.lane.b32.xlu0 %v334, 32
    %v450 = vpop.permute.xlu0 %449
    %453 = vrot.lane.b32.xlu0 %v318, 96
    %v454 = vpop.permute.xlu0 %453
    %455 = vrot.lane.b32.xlu0 %v324, 96
    %v456 = vpop.permute.xlu0 %455
    %457 = vrot.lane.b32.xlu0 %v318, 64
    %v458 = vpop.permute.xlu0 %457
    %459 = vrot.lane.b32.xlu0 %v324, 64
    %v460 = vpop.permute.xlu0 %459
    %461 = vrot.lane.b32.xlu0 %v318, 32
    %v462 = vpop.permute.xlu0 %461
    %463 = vrot.lane.b32.xlu0 %v324, 32
    %v464 = vpop.permute.xlu0 %463
    %467 = vrot.lane.b32.xlu0 %v330, 96
    %v468 = vpop.permute.xlu0 %467
    %469 = vrot.lane.b32.xlu0 %v336, 96
    %v470 = vpop.permute.xlu0 %469
    %471 = vrot.lane.b32.xlu0 %v330, 64
    %v472 = vpop.permute.xlu0 %471
    %473 = vrot.lane.b32.xlu0 %v336, 64
    %v474 = vpop.permute.xlu0 %473
    %475 = vrot.lane.b32.xlu0 %v330, 32
    %v476 = vpop.permute.xlu0 %475
    %477 = vrot.lane.b32.xlu0 %v336, 32
    %v478 = vpop.permute.xlu0 %477
    %481 = vrot.lane.b32.xlu0 %v405, 96
    %v482 = vpop.permute.xlu0 %481
    %483 = vrot.lane.b32.xlu0 %v410, 96
    %v484 = vpop.permute.xlu0 %483
    %487 = vrot.lane.b32.xlu0 %v405, 64
    %v488 = vpop.permute.xlu0 %487
    %489 = vrot.lane.b32.xlu0 %v410, 64
    %v490 = vpop.permute.xlu0 %489
    %493 = vrot.lane.b32.xlu0 %v405, 32
    %v494 = vpop.permute.xlu0 %493
    %495 = vrot.lane.b32.xlu0 %v410, 32
    %v496 = vpop.permute.xlu0 %495
    %501 = vrot.lane.b32.xlu0 %v415, 96
    %v502 = vpop.permute.xlu0 %501
    %503 = vrot.lane.b32.xlu0 %v420, 96
    %v504 = vpop.permute.xlu0 %503
    %507 = vrot.lane.b32.xlu0 %v415, 64
    %v508 = vpop.permute.xlu0 %507
    %509 = vrot.lane.b32.xlu0 %v420, 64
    %v510 = vpop.permute.xlu0 %509
    %513 = vrot.lane.b32.xlu0 %v415, 32
    %v514 = vpop.permute.xlu0 %513
    %515 = vrot.lane.b32.xlu0 %v420, 32
    %v516 = vpop.permute.xlu0 %515
    %vm519 = vcmask 261120
    %v520 = vsel %vm519, %v316, 0
    %v522 = vsel %vm519, %v322, 0
    %v524 = vsel %vm519, %v318, 0
    %v526 = vsel %vm519, %v324, 0
    %528 = vmatprep.subr.mxu0 0.0
    %529 = vmatpush1.xpose.msra.mxu0 %v524
    %530 = vmatprep.subr.mxu0 0.0
    %531 = vmatpush1.xpose.msra.mxu0 %v526
    %532 = vmatprep.subr.mxu0 0.0
    %533 = vmatpush1.xpose.msra.mxu0 0.0
    %534 = vmatprep.subr.mxu0 0.0
    %535 = vmatpush1.xpose.msra.mxu0 0.0
    %536 = vmatprep.subr.mxu0 0.0
    %537 = vmatpush1.xpose.msra.mxu0 0.0
    %538 = vmatprep.subr.mxu0 0.0
    %539 = vmatpush1.xpose.msra.mxu0 0.0
    %540 = vmatprep.subr.mxu0 0.0
    %541 = vmatpush1.xpose.msra.mxu0 0.0
    %542 = vmatprep.subr.mxu0 0.0
    %543 = vmatpush1.xpose.msra.mxu0 0.0
    %544 = vmatprep.subr.mxu0 0.0
    %545 = vmatpush1.xpose.msra.mxu0 0.0
    %546 = vmatprep.subr.mxu0 0.0
    %547 = vmatpush1.xpose.msra.mxu0 0.0
    %548 = vmatprep.subr.mxu0 0.0
    %549 = vmatpush1.xpose.msra.mxu0 0.0
    %550 = vmatprep.subr.mxu0 0.0
    %551 = vmatpush1.xpose.msra.mxu0 0.0
    %552 = vmatprep.subr.mxu0 0.0
    %553 = vmatpush1.xpose.msra.mxu0 0.0
    %554 = vmatprep.subr.mxu0 0.0
    %555 = vmatpush1.xpose.msra.mxu0 0.0
    %556 = vmatprep.subr.mxu0 0.0
    %557 = vmatpush1.xpose.msra.mxu0 0.0
    %558 = vmatprep.subr.mxu0 0.0
    %559 = vmatpush1.xpose.msra.mxu0 0.0
    %560 = vmatprep.subr.mxu0 0.0
    %561 = vmatpush1.xpose.msra.mxu0 0.0
    %562 = vmatprep.subr.mxu0 0.0
    %563 = vmatpush1.xpose.msra.mxu0 0.0
    %564 = vmatprep.subr.mxu0 0.0
    %565 = vmatpush1.xpose.msra.mxu0 0.0
    %566 = vmatprep.subr.mxu0 0.0
    %567 = vmatpush1.xpose.msra.mxu0 0.0
    %568 = vmatprep.subr.mxu0 0.0
    %569 = vmatpush1.xpose.msra.mxu0 0.0
    %570 = vmatprep.subr.mxu0 0.0
    %571 = vmatpush1.xpose.msra.mxu0 0.0
    %572 = vmatprep.subr.mxu0 0.0
    %573 = vmatpush1.xpose.msra.mxu0 0.0
    %574 = vmatprep.subr.mxu0 0.0
    %575 = vmatpush1.xpose.msra.mxu0 0.0
    %576 = vmatprep.subr.mxu0 0.0
    %577 = vmatpush1.xpose.msra.mxu0 0.0
    %578 = vmatprep.subr.mxu0 0.0
    %579 = vmatpush1.xpose.msra.mxu0 0.0
    %580 = vmatprep.subr.mxu0 0.0
    %581 = vmatpush1.xpose.msra.mxu0 0.0
    %582 = vmatprep.subr.mxu0 0.0
    %583 = vmatpush1.xpose.msra.mxu0 0.0
    %584 = vmatprep.subr.mxu0 0.0
    %585 = vmatpush1.xpose.msra.mxu0 0.0
    %586 = vmatprep.subr.mxu0 0.0
    %587 = vmatpush1.xpose.msra.mxu0 0.0
    %588 = vmatprep.subr.mxu0 0.0
    %589 = vmatpush1.xpose.msra.mxu0 0.0
    %590 = vmatprep.subr.mxu0 0.0
    %591 = vmatpush1.xpose.msra.mxu0 0.0
    %592 = vmatprep.mubr.f32.mxu0 0.0
    %593 = vmatmul.mubr.f32.gmra.mrb[0].mxu0 %v520
    %v594 = vpop.f32.mrb[0].mxu0
    %v595 = vadd.f32 0.0, %v594
    %v596 = vpop.f32.mrb[0].mxu0
    %597 = vmatprep.mubr.f32.mxu0 0.0
    %598 = vmatmul.mubr.f32.gmra.mrb[0].mxu0 %v522
    %v599 = vpop.f32.mrb[0].mxu0
    %v600 = vadd.f32 0.0, %v599
    %v601 = vpop.f32.mrb[0].mxu0
    %602 = vdwg.mxu0
    %v603 = vsel %vm519, %v426, 0
    %v605 = vsel %vm519, %v428, 0
    %v607 = vsel %vm519, %v454, 0
    %v609 = vsel %vm519, %v456, 0
    %611 = vmatprep.subr.mxu0 0.0
    %612 = vmatpush1.xpose.msra.mxu0 %v607
    %613 = vmatprep.subr.mxu0 0.0
    %614 = vmatpush1.xpose.msra.mxu0 %v609
    %615 = vmatprep.subr.mxu0 0.0
    %616 = vmatpush1.xpose.msra.mxu0 0.0
    %617 = vmatprep.subr.mxu0 0.0
    %618 = vmatpush1.xpose.msra.mxu0 0.0
    %619 = vmatprep.subr.mxu0 0.0
    %620 = vmatpush1.xpose.msra.mxu0 0.0
    %621 = vmatprep.subr.mxu0 0.0
    %622 = vmatpush1.xpose.msra.mxu0 0.0
    %623 = vmatprep.subr.mxu0 0.0
    %624 = vmatpush1.xpose.msra.mxu0 0.0
    %625 = vmatprep.subr.mxu0 0.0
    %626 = vmatpush1.xpose.msra.mxu0 0.0
    %627 = vmatprep.subr.mxu0 0.0
    %628 = vmatpush1.xpose.msra.mxu0 0.0
    %629 = vmatprep.subr.mxu0 0.0
    %630 = vmatpush1.xpose.msra.mxu0 0.0
    %631 = vmatprep.subr.mxu0 0.0
    %632 = vmatpush1.xpose.msra.mxu0 0.0
    %633 = vmatprep.subr.mxu0 0.0
    %634 = vmatpush1.xpose.msra.mxu0 0.0
    %635 = vmatprep.subr.mxu0 0.0
    %636 = vmatpush1.xpose.msra.mxu0 0.0
    %637 = vmatprep.subr.mxu0 0.0
    %638 = vmatpush1.xpose.msra.mxu0 0.0
    %639 = vmatprep.subr.mxu0 0.0
    %640 = vmatpush1.xpose.msra.mxu0 0.0
    %641 = vmatprep.subr.mxu0 0.0
    %642 = vmatpush1.xpose.msra.mxu0 0.0
    %643 = vmatprep.subr.mxu0 0.0
    %644 = vmatpush1.xpose.msra.mxu0 0.0
    %645 = vmatprep.subr.mxu0 0.0
    %646 = vmatpush1.xpose.msra.mxu0 0.0
    %647 = vmatprep.subr.mxu0 0.0
    %648 = vmatpush1.xpose.msra.mxu0 0.0
    %649 = vmatprep.subr.mxu0 0.0
    %650 = vmatpush1.xpose.msra.mxu0 0.0
    %651 = vmatprep.subr.mxu0 0.0
    %652 = vmatpush1.xpose.msra.mxu0 0.0
    %653 = vmatprep.subr.mxu0 0.0
    %654 = vmatpush1.xpose.msra.mxu0 0.0
    %655 = vmatprep.subr.mxu0 0.0
    %656 = vmatpush1.xpose.msra.mxu0 0.0
    %657 = vmatprep.subr.mxu0 0.0
    %658 = vmatpush1.xpose.msra.mxu0 0.0
    %659 = vmatprep.subr.mxu0 0.0
    %660 = vmatpush1.xpose.msra.mxu0 0.0
    %661 = vmatprep.subr.mxu0 0.0
    %662 = vmatpush1.xpose.msra.mxu0 0.0
    %663 = vmatprep.subr.mxu0 0.0
    %664 = vmatpush1.xpose.msra.mxu0 0.0
    %665 = vmatprep.subr.mxu0 0.0
    %666 = vmatpush1.xpose.msra.mxu0 0.0
    %667 = vmatprep.subr.mxu0 0.0
    %668 = vmatpush1.xpose.msra.mxu0 0.0
    %669 = vmatprep.subr.mxu0 0.0
    %670 = vmatpush1.xpose.msra.mxu0 0.0
    %671 = vmatprep.subr.mxu0 0.0
    %672 = vmatpush1.xpose.msra.mxu0 0.0
    %673 = vmatprep.subr.mxu0 0.0
    %674 = vmatpush1.xpose.msra.mxu0 0.0
    %675 = vmatprep.mubr.f32.mxu0 0.0
    %676 = vmatmul.mubr.f32.gmra.mrb[0].mxu0 %v603
    %v677 = vpop.f32.mrb[0].mxu0
    %v678 = vadd.f32 0.0, %v677
    %v679 = vpop.f32.mrb[0].mxu0
    %680 = vmatprep.mubr.f32.mxu0 0.0
    %681 = vmatmul.mubr.f32.gmra.mrb[0].mxu0 %v605
    %v682 = vpop.f32.mrb[0].mxu0
    %v683 = vadd.f32 0.0, %v682
    %v684 = vpop.f32.mrb[0].mxu0
    %685 = vdwg.mxu0
    %v686 = vsel %vm519, %v430, 0
    %v688 = vsel %vm519, %v432, 0
    %v690 = vsel %vm519, %v458, 0
    %v692 = vsel %vm519, %v460, 0
    %694 = vmatprep.subr.mxu0 0.0
    %695 = vmatpush1.xpose.msra.mxu0 %v690
    %696 = vmatprep.subr.mxu0 0.0
    %697 = vmatpush1.xpose.msra.mxu0 %v692
    %698 = vmatprep.subr.mxu0 0.0
    %699 = vmatpush1.xpose.msra.mxu0 0.0
    %700 = vmatprep.subr.mxu0 0.0
    %701 = vmatpush1.xpose.msra.mxu0 0.0
    %702 = vmatprep.subr.mxu0 0.0
    %703 = vmatpush1.xpose.msra.mxu0 0.0
    %704 = vmatprep.subr.mxu0 0.0
    %705 = vmatpush1.xpose.msra.mxu0 0.0
    %706 = vmatprep.subr.mxu0 0.0
    %707 = vmatpush1.xpose.msra.mxu0 0.0
    %708 = vmatprep.subr.mxu0 0.0
    %709 = vmatpush1.xpose.msra.mxu0 0.0
    %710 = vmatprep.subr.mxu0 0.0
    %711 = vmatpush1.xpose.msra.mxu0 0.0
    %712 = vmatprep.subr.mxu0 0.0
    %713 = vmatpush1.xpose.msra.mxu0 0.0
    %714 = vmatprep.subr.mxu0 0.0
    %715 = vmatpush1.xpose.msra.mxu0 0.0
    %716 = vmatprep.subr.mxu0 0.0
    %717 = vmatpush1.xpose.msra.mxu0 0.0
    %718 = vmatprep.subr.mxu0 0.0
    %719 = vmatpush1.xpose.msra.mxu0 0.0
    %720 = vmatprep.subr.mxu0 0.0
    %721 = vmatpush1.xpose.msra.mxu0 0.0
    %722 = vmatprep.subr.mxu0 0.0
    %723 = vmatpush1.xpose.msra.mxu0 0.0
    %724 = vmatprep.subr.mxu0 0.0
    %725 = vmatpush1.xpose.msra.mxu0 0.0
    %726 = vmatprep.subr.mxu0 0.0
    %727 = vmatpush1.xpose.msra.mxu0 0.0
    %728 = vmatprep.subr.mxu0 0.0
    %729 = vmatpush1.xpose.msra.mxu0 0.0
    %730 = vmatprep.subr.mxu0 0.0
    %731 = vmatpush1.xpose.msra.mxu0 0.0
    %732 = vmatprep.subr.mxu0 0.0
    %733 = vmatpush1.xpose.msra.mxu0 0.0
    %734 = vmatprep.subr.mxu0 0.0
    %735 = vmatpush1.xpose.msra.mxu0 0.0
    %736 = vmatprep.subr.mxu0 0.0
    %737 = vmatpush1.xpose.msra.mxu0 0.0
    %738 = vmatprep.subr.mxu0 0.0
    %739 = vmatpush1.xpose.msra.mxu0 0.0
    %740 = vmatprep.subr.mxu0 0.0
    %741 = vmatpush1.xpose.msra.mxu0 0.0
    %742 = vmatprep.subr.mxu0 0.0
    %743 = vmatpush1.xpose.msra.mxu0 0.0
    %744 = vmatprep.subr.mxu0 0.0
    %745 = vmatpush1.xpose.msra.mxu0 0.0
    %746 = vmatprep.subr.mxu0 0.0
    %747 = vmatpush1.xpose.msra.mxu0 0.0
    %748 = vmatprep.subr.mxu0 0.0
    %749 = vmatpush1.xpose.msra.mxu0 0.0
    %750 = vmatprep.subr.mxu0 0.0
    %751 = vmatpush1.xpose.msra.mxu0 0.0
    %752 = vmatprep.subr.mxu0 0.0
    %753 = vmatpush1.xpose.msra.mxu0 0.0
    %754 = vmatprep.subr.mxu0 0.0
    %755 = vmatpush1.xpose.msra.mxu0 0.0
    %756 = vmatprep.subr.mxu0 0.0
    %757 = vmatpush1.xpose.msra.mxu0 0.0
    %758 = vmatprep.mubr.f32.mxu0 0.0
    %759 = vmatmul.mubr.f32.gmra.mrb[0].mxu0 %v686
    %v760 = vpop.f32.mrb[0].mxu0
    %v761 = vadd.f32 0.0, %v760
    %v762 = vpop.f32.mrb[0].mxu0
    %763 = vmatprep.mubr.f32.mxu0 0.0
    %764 = vmatmul.mubr.f32.gmra.mrb[0].mxu0 %v688
    %v765 = vpop.f32.mrb[0].mxu0
    %v766 = vadd.f32 0.0, %v765
    %v767 = vpop.f32.mrb[0].mxu0
    %768 = vdwg.mxu0
    %v769 = vsel %vm519, %v434, 0
    %v771 = vsel %vm519, %v436, 0
    %v773 = vsel %vm519, %v462, 0
    %v775 = vsel %vm519, %v464, 0
    %777 = vmatprep.subr.mxu0 0.0
    %778 = vmatpush1.xpose.msra.mxu0 %v773
    %779 = vmatprep.subr.mxu0 0.0
    %780 = vmatpush1.xpose.msra.mxu0 %v775
    %781 = vmatprep.subr.mxu0 0.0
    %782 = vmatpush1.xpose.msra.mxu0 0.0
    %783 = vmatprep.subr.mxu0 0.0
    %784 = vmatpush1.xpose.msra.mxu0 0.0
    %785 = vmatprep.subr.mxu0 0.0
    %786 = vmatpush1.xpose.msra.mxu0 0.0
    %787 = vmatprep.subr.mxu0 0.0
    %788 = vmatpush1.xpose.msra.mxu0 0.0
    %789 = vmatprep.subr.mxu0 0.0
    %790 = vmatpush1.xpose.msra.mxu0 0.0
    %791 = vmatprep.subr.mxu0 0.0
    %792 = vmatpush1.xpose.msra.mxu0 0.0
    %793 = vmatprep.subr.mxu0 0.0
    %794 = vmatpush1.xpose.msra.mxu0 0.0
    %795 = vmatprep.subr.mxu0 0.0
    %796 = vmatpush1.xpose.msra.mxu0 0.0
    %797 = vmatprep.subr.mxu0 0.0
    %798 = vmatpush1.xpose.msra.mxu0 0.0
    %799 = vmatprep.subr.mxu0 0.0
    %800 = vmatpush1.xpose.msra.mxu0 0.0
    %801 = vmatprep.subr.mxu0 0.0
    %802 = vmatpush1.xpose.msra.mxu0 0.0
    %803 = vmatprep.subr.mxu0 0.0
    %804 = vmatpush1.xpose.msra.mxu0 0.0
    %805 = vmatprep.subr.mxu0 0.0
    %806 = vmatpush1.xpose.msra.mxu0 0.0
    %807 = vmatprep.subr.mxu0 0.0
    %808 = vmatpush1.xpose.msra.mxu0 0.0
    %809 = vmatprep.subr.mxu0 0.0
    %810 = vmatpush1.xpose.msra.mxu0 0.0
    %811 = vmatprep.subr.mxu0 0.0
    %812 = vmatpush1.xpose.msra.mxu0 0.0
    %813 = vmatprep.subr.mxu0 0.0
    %814 = vmatpush1.xpose.msra.mxu0 0.0
    %815 = vmatprep.subr.mxu0 0.0
    %816 = vmatpush1.xpose.msra.mxu0 0.0
    %817 = vmatprep.subr.mxu0 0.0
    %818 = vmatpush1.xpose.msra.mxu0 0.0
    %819 = vmatprep.subr.mxu0 0.0
    %820 = vmatpush1.xpose.msra.mxu0 0.0
    %821 = vmatprep.subr.mxu0 0.0
    %822 = vmatpush1.xpose.msra.mxu0 0.0
    %823 = vmatprep.subr.mxu0 0.0
    %824 = vmatpush1.xpose.msra.mxu0 0.0
    %825 = vmatprep.subr.mxu0 0.0
    %826 = vmatpush1.xpose.msra.mxu0 0.0
    %827 = vmatprep.subr.mxu0 0.0
    %828 = vmatpush1.xpose.msra.mxu0 0.0
    %829 = vmatprep.subr.mxu0 0.0
    %830 = vmatpush1.xpose.msra.mxu0 0.0
    %831 = vmatprep.subr.mxu0 0.0
    %832 = vmatpush1.xpose.msra.mxu0 0.0
    %833 = vmatprep.subr.mxu0 0.0
    %834 = vmatpush1.xpose.msra.mxu0 0.0
    %835 = vmatprep.subr.mxu0 0.0
    %836 = vmatpush1.xpose.msra.mxu0 0.0
    %837 = vmatprep.subr.mxu0 0.0
    %838 = vmatpush1.xpose.msra.mxu0 0.0
    %839 = vmatprep.subr.mxu0 0.0
    %840 = vmatpush1.xpose.msra.mxu0 0.0
    %841 = vmatprep.mubr.f32.mxu0 0.0
    %842 = vmatmul.mubr.f32.gmra.mrb[0].mxu0 %v769
    %v843 = vpop.f32.mrb[0].mxu0
    %v844 = vadd.f32 0.0, %v843
    %v845 = vpop.f32.mrb[0].mxu0
    %846 = vmatprep.mubr.f32.mxu0 0.0
    %847 = vmatmul.mubr.f32.gmra.mrb[0].mxu0 %v771
    %v848 = vpop.f32.mrb[0].mxu0
    %v849 = vadd.f32 0.0, %v848
    %v850 = vpop.f32.mrb[0].mxu0
    %851 = vdwg.mxu0
    %v852 = vsel %vm519, %v328, 0
    %v854 = vsel %vm519, %v334, 0
    %v856 = vsel %vm519, %v330, 0
    %v858 = vsel %vm519, %v336, 0
    %860 = vmatprep.subr.mxu0 0.0
    %861 = vmatpush1.xpose.msra.mxu0 %v856
    %862 = vmatprep.subr.mxu0 0.0
    %863 = vmatpush1.xpose.msra.mxu0 %v858
    %864 = vmatprep.subr.mxu0 0.0
    %865 = vmatpush1.xpose.msra.mxu0 0.0
    %866 = vmatprep.subr.mxu0 0.0
    %867 = vmatpush1.xpose.msra.mxu0 0.0
    %868 = vmatprep.subr.mxu0 0.0
    %869 = vmatpush1.xpose.msra.mxu0 0.0
    %870 = vmatprep.subr.mxu0 0.0
    %871 = vmatpush1.xpose.msra.mxu0 0.0
    %872 = vmatprep.subr.mxu0 0.0
    %873 = vmatpush1.xpose.msra.mxu0 0.0
    %874 = vmatprep.subr.mxu0 0.0
    %875 = vmatpush1.xpose.msra.mxu0 0.0
    %876 = vmatprep.subr.mxu0 0.0
    %877 = vmatpush1.xpose.msra.mxu0 0.0
    %878 = vmatprep.subr.mxu0 0.0
    %879 = vmatpush1.xpose.msra.mxu0 0.0
    %880 = vmatprep.subr.mxu0 0.0
    %881 = vmatpush1.xpose.msra.mxu0 0.0
    %882 = vmatprep.subr.mxu0 0.0
    %883 = vmatpush1.xpose.msra.mxu0 0.0
    %884 = vmatprep.subr.mxu0 0.0
    %885 = vmatpush1.xpose.msra.mxu0 0.0
    %886 = vmatprep.subr.mxu0 0.0
    %887 = vmatpush1.xpose.msra.mxu0 0.0
    %888 = vmatprep.subr.mxu0 0.0
    %889 = vmatpush1.xpose.msra.mxu0 0.0
    %890 = vmatprep.subr.mxu0 0.0
    %891 = vmatpush1.xpose.msra.mxu0 0.0
    %892 = vmatprep.subr.mxu0 0.0
    %893 = vmatpush1.xpose.msra.mxu0 0.0
    %894 = vmatprep.subr.mxu0 0.0
    %895 = vmatpush1.xpose.msra.mxu0 0.0
    %896 = vmatprep.subr.mxu0 0.0
    %897 = vmatpush1.xpose.msra.mxu0 0.0
    %898 = vmatprep.subr.mxu0 0.0
    %899 = vmatpush1.xpose.msra.mxu0 0.0
    %900 = vmatprep.subr.mxu0 0.0
    %901 = vmatpush1.xpose.msra.mxu0 0.0
    %902 = vmatprep.subr.mxu0 0.0
    %903 = vmatpush1.xpose.msra.mxu0 0.0
    %904 = vmatprep.subr.mxu0 0.0
    %905 = vmatpush1.xpose.msra.mxu0 0.0
    %906 = vmatprep.subr.mxu0 0.0
    %907 = vmatpush1.xpose.msra.mxu0 0.0
    %908 = vmatprep.subr.mxu0 0.0
    %909 = vmatpush1.xpose.msra.mxu0 0.0
    %910 = vmatprep.subr.mxu0 0.0
    %911 = vmatpush1.xpose.msra.mxu0 0.0
    %912 = vmatprep.subr.mxu0 0.0
    %913 = vmatpush1.xpose.msra.mxu0 0.0
    %914 = vmatprep.subr.mxu0 0.0
    %915 = vmatpush1.xpose.msra.mxu0 0.0
    %916 = vmatprep.subr.mxu0 0.0
    %917 = vmatpush1.xpose.msra.mxu0 0.0
    %918 = vmatprep.subr.mxu0 0.0
    %919 = vmatpush1.xpose.msra.mxu0 0.0
    %920 = vmatprep.subr.mxu0 0.0
    %921 = vmatpush1.xpose.msra.mxu0 0.0
    %922 = vmatprep.subr.mxu0 0.0
    %923 = vmatpush1.xpose.msra.mxu0 0.0
    %924 = vmatprep.mubr.f32.mxu0 0.0
    %925 = vmatmul.mubr.f32.gmra.mrb[0].mxu0 %v852
    %v926 = vpop.f32.mrb[0].mxu0
    %v927 = vadd.f32 0.0, %v926
    %v928 = vpop.f32.mrb[0].mxu0
    %929 = vmatprep.mubr.f32.mxu0 0.0
    %930 = vmatmul.mubr.f32.gmra.mrb[0].mxu0 %v854
    %v931 = vpop.f32.mrb[0].mxu0
    %v932 = vadd.f32 0.0, %v931
    %v933 = vpop.f32.mrb[0].mxu0
    %934 = vdwg.mxu0
    %v935 = vsel %vm519, %v440, 0
    %v937 = vsel %vm519, %v442, 0
    %v939 = vsel %vm519, %v468, 0
    %v941 = vsel %vm519, %v470, 0
    %943 = vmatprep.subr.mxu0 0.0
    %944 = vmatpush1.xpose.msra.mxu0 %v939
    %945 = vmatprep.subr.mxu0 0.0
    %946 = vmatpush1.xpose.msra.mxu0 %v941
    %947 = vmatprep.subr.mxu0 0.0
    %948 = vmatpush1.xpose.msra.mxu0 0.0
    %949 = vmatprep.subr.mxu0 0.0
    %950 = vmatpush1.xpose.msra.mxu0 0.0
    %951 = vmatprep.subr.mxu0 0.0
    %952 = vmatpush1.xpose.msra.mxu0 0.0
    %953 = vmatprep.subr.mxu0 0.0
    %954 = vmatpush1.xpose.msra.mxu0 0.0
    %955 = vmatprep.subr.mxu0 0.0
    %956 = vmatpush1.xpose.msra.mxu0 0.0
    %957 = vmatprep.subr.mxu0 0.0
    %958 = vmatpush1.xpose.msra.mxu0 0.0
    %959 = vmatprep.subr.mxu0 0.0
    %960 = vmatpush1.xpose.msra.mxu0 0.0
    %961 = vmatprep.subr.mxu0 0.0
    %962 = vmatpush1.xpose.msra.mxu0 0.0
    %963 = vmatprep.subr.mxu0 0.0
    %964 = vmatpush1.xpose.msra.mxu0 0.0
    %965 = vmatprep.subr.mxu0 0.0
    %966 = vmatpush1.xpose.msra.mxu0 0.0
    %967 = vmatprep.subr.mxu0 0.0
    %968 = vmatpush1.xpose.msra.mxu0 0.0
    %969 = vmatprep.subr.mxu0 0.0
    %970 = vmatpush1.xpose.msra.mxu0 0.0
    %971 = vmatprep.subr.mxu0 0.0
    %972 = vmatpush1.xpose.msra.mxu0 0.0
    %973 = vmatprep.subr.mxu0 0.0
    %974 = vmatpush1.xpose.msra.mxu0 0.0
    %975 = vmatprep.subr.mxu0 0.0
    %976 = vmatpush1.xpose.msra.mxu0 0.0
    %977 = vmatprep.subr.mxu0 0.0
    %978 = vmatpush1.xpose.msra.mxu0 0.0
    %979 = vmatprep.subr.mxu0 0.0
    %980 = vmatpush1.xpose.msra.mxu0 0.0
    %981 = vmatprep.subr.mxu0 0.0
    %982 = vmatpush1.xpose.msra.mxu0 0.0
    %983 = vmatprep.subr.mxu0 0.0
    %984 = vmatpush1.xpose.msra.mxu0 0.0
    %985 = vmatprep.subr.mxu0 0.0
    %986 = vmatpush1.xpose.msra.mxu0 0.0
    %987 = vmatprep.subr.mxu0 0.0
    %988 = vmatpush1.xpose.msra.mxu0 0.0
    %989 = vmatprep.subr.mxu0 0.0
    %990 = vmatpush1.xpose.msra.mxu0 0.0
    %991 = vmatprep.subr.mxu0 0.0
    %992 = vmatpush1.xpose.msra.mxu0 0.0
    %993 = vmatprep.subr.mxu0 0.0
    %994 = vmatpush1.xpose.msra.mxu0 0.0
    %995 = vmatprep.subr.mxu0 0.0
    %996 = vmatpush1.xpose.msra.mxu0 0.0
    %997 = vmatprep.subr.mxu0 0.0
    %998 = vmatpush1.xpose.msra.mxu0 0.0
    %999 = vmatprep.subr.mxu0 0.0
    %1000 = vmatpush1.xpose.msra.mxu0 0.0
    %1001 = vmatprep.subr.mxu0 0.0
    %1002 = vmatpush1.xpose.msra.mxu0 0.0
    %1003 = vmatprep.subr.mxu0 0.0
    %1004 = vmatpush1.xpose.msra.mxu0 0.0
    %1005 = vmatprep.subr.mxu0 0.0
    %1006 = vmatpush1.xpose.msra.mxu0 0.0
    %1007 = vmatprep.mubr.f32.mxu0 0.0
    %1008 = vmatmul.mubr.f32.gmra.mrb[0].mxu0 %v935
    %v1009 = vpop.f32.mrb[0].mxu0
    %v1010 = vadd.f32 0.0, %v1009
    %v1011 = vpop.f32.mrb[0].mxu0
    %1012 = vmatprep.mubr.f32.mxu0 0.0
    %1013 = vmatmul.mubr.f32.gmra.mrb[0].mxu0 %v937
    %v1014 = vpop.f32.mrb[0].mxu0
    %v1015 = vadd.f32 0.0, %v1014
    %v1016 = vpop.f32.mrb[0].mxu0
    %1017 = vdwg.mxu0
    %v1018 = vsel %vm519, %v444, 0
    %v1020 = vsel %vm519, %v446, 0
    %v1022 = vsel %vm519, %v472, 0
    %v1024 = vsel %vm519, %v474, 0
    %1026 = vmatprep.subr.mxu0 0.0
    %1027 = vmatpush1.xpose.msra.mxu0 %v1022
    %1028 = vmatprep.subr.mxu0 0.0
    %1029 = vmatpush1.xpose.msra.mxu0 %v1024
    %1030 = vmatprep.subr.mxu0 0.0
    %1031 = vmatpush1.xpose.msra.mxu0 0.0
    %1032 = vmatprep.subr.mxu0 0.0
    %1033 = vmatpush1.xpose.msra.mxu0 0.0
    %1034 = vmatprep.subr.mxu0 0.0
    %1035 = vmatpush1.xpose.msra.mxu0 0.0
    %1036 = vmatprep.subr.mxu0 0.0
    %1037 = vmatpush1.xpose.msra.mxu0 0.0
    %1038 = vmatprep.subr.mxu0 0.0
    %1039 = vmatpush1.xpose.msra.mxu0 0.0
    %1040 = vmatprep.subr.mxu0 0.0
    %1041 = vmatpush1.xpose.msra.mxu0 0.0
    %1042 = vmatprep.subr.mxu0 0.0
    %1043 = vmatpush1.xpose.msra.mxu0 0.0
    %1044 = vmatprep.subr.mxu0 0.0
    %1045 = vmatpush1.xpose.msra.mxu0 0.0
    %1046 = vmatprep.subr.mxu0 0.0
    %1047 = vmatpush1.xpose.msra.mxu0 0.0
    %1048 = vmatprep.subr.mxu0 0.0
    %1049 = vmatpush1.xpose.msra.mxu0 0.0
    %1050 = vmatprep.subr.mxu0 0.0
    %1051 = vmatpush1.xpose.msra.mxu0 0.0
    %1052 = vmatprep.subr.mxu0 0.0
    %1053 = vmatpush1.xpose.msra.mxu0 0.0
    %1054 = vmatprep.subr.mxu0 0.0
    %1055 = vmatpush1.xpose.msra.mxu0 0.0
    %1056 = vmatprep.subr.mxu0 0.0
    %1057 = vmatpush1.xpose.msra.mxu0 0.0
    %1058 = vmatprep.subr.mxu0 0.0
    %1059 = vmatpush1.xpose.msra.mxu0 0.0
    %1060 = vmatprep.subr.mxu0 0.0
    %1061 = vmatpush1.xpose.msra.mxu0 0.0
    %1062 = vmatprep.subr.mxu0 0.0
    %1063 = vmatpush1.xpose.msra.mxu0 0.0
    %1064 = vmatprep.subr.mxu0 0.0
    %1065 = vmatpush1.xpose.msra.mxu0 0.0
    %1066 = vmatprep.subr.mxu0 0.0
    %1067 = vmatpush1.xpose.msra.mxu0 0.0
    %1068 = vmatprep.subr.mxu0 0.0
    %1069 = vmatpush1.xpose.msra.mxu0 0.0
    %1070 = vmatprep.subr.mxu0 0.0
    %1071 = vmatpush1.xpose.msra.mxu0 0.0
    %1072 = vmatprep.subr.mxu0 0.0
    %1073 = vmatpush1.xpose.msra.mxu0 0.0
    %1074 = vmatprep.subr.mxu0 0.0
    %1075 = vmatpush1.xpose.msra.mxu0 0.0
    %1076 = vmatprep.subr.mxu0 0.0
    %1077 = vmatpush1.xpose.msra.mxu0 0.0
    %1078 = vmatprep.subr.mxu0 0.0
    %1079 = vmatpush1.xpose.msra.mxu0 0.0
    %1080 = vmatprep.subr.mxu0 0.0
    %1081 = vmatpush1.xpose.msra.mxu0 0.0
    %1082 = vmatprep.subr.mxu0 0.0
    %1083 = vmatpush1.xpose.msra.mxu0 0.0
    %1084 = vmatprep.subr.mxu0 0.0
    %1085 = vmatpush1.xpose.msra.mxu0 0.0
    %1086 = vmatprep.subr.mxu0 0.0
    %1087 = vmatpush1.xpose.msra.mxu0 0.0
    %1088 = vmatprep.subr.mxu0 0.0
    %1089 = vmatpush1.xpose.msra.mxu0 0.0
    %1090 = vmatprep.mubr.f32.mxu0 0.0
    %1091 = vmatmul.mubr.f32.gmra.mrb[0].mxu0 %v1018
    %v1092 = vpop.f32.mrb[0].mxu0
    %v1093 = vadd.f32 0.0, %v1092
    %v1094 = vpop.f32.mrb[0].mxu0
    %1095 = vmatprep.mubr.f32.mxu0 0.0
    %1096 = vmatmul.mubr.f32.gmra.mrb[0].mxu0 %v1020
    %v1097 = vpop.f32.mrb[0].mxu0
    %v1098 = vadd.f32 0.0, %v1097
    %v1099 = vpop.f32.mrb[0].mxu0
    %1100 = vdwg.mxu0
    %v1101 = vsel %vm519, %v448, 0
    %v1103 = vsel %vm519, %v450, 0
    %v1105 = vsel %vm519, %v476, 0
    %v1107 = vsel %vm519, %v478, 0
    %1109 = vmatprep.subr.mxu0 0.0
    %1110 = vmatpush1.xpose.msra.mxu0 %v1105
    %1111 = vmatprep.subr.mxu0 0.0
    %1112 = vmatpush1.xpose.msra.mxu0 %v1107
    %1113 = vmatprep.subr.mxu0 0.0
    %1114 = vmatpush1.xpose.msra.mxu0 0.0
    %1115 = vmatprep.subr.mxu0 0.0
    %1116 = vmatpush1.xpose.msra.mxu0 0.0
    %1117 = vmatprep.subr.mxu0 0.0
    %1118 = vmatpush1.xpose.msra.mxu0 0.0
    %1119 = vmatprep.subr.mxu0 0.0
    %1120 = vmatpush1.xpose.msra.mxu0 0.0
    %1121 = vmatprep.subr.mxu0 0.0
    %1122 = vmatpush1.xpose.msra.mxu0 0.0
    %1123 = vmatprep.subr.mxu0 0.0
    %1124 = vmatpush1.xpose.msra.mxu0 0.0
    %1125 = vmatprep.subr.mxu0 0.0
    %1126 = vmatpush1.xpose.msra.mxu0 0.0
    %1127 = vmatprep.subr.mxu0 0.0
    %1128 = vmatpush1.xpose.msra.mxu0 0.0
    %1129 = vmatprep.subr.mxu0 0.0
    %1130 = vmatpush1.xpose.msra.mxu0 0.0
    %1131 = vmatprep.subr.mxu0 0.0
    %1132 = vmatpush1.xpose.msra.mxu0 0.0
    %1133 = vmatprep.subr.mxu0 0.0
    %1134 = vmatpush1.xpose.msra.mxu0 0.0
    %1135 = vmatprep.subr.mxu0 0.0
    %1136 = vmatpush1.xpose.msra.mxu0 0.0
    %1137 = vmatprep.subr.mxu0 0.0
    %1138 = vmatpush1.xpose.msra.mxu0 0.0
    %1139 = vmatprep.subr.mxu0 0.0
    %1140 = vmatpush1.xpose.msra.mxu0 0.0
    %1141 = vmatprep.subr.mxu0 0.0
    %1142 = vmatpush1.xpose.msra.mxu0 0.0
    %1143 = vmatprep.subr.mxu0 0.0
    %1144 = vmatpush1.xpose.msra.mxu0 0.0
    %1145 = vmatprep.subr.mxu0 0.0
    %1146 = vmatpush1.xpose.msra.mxu0 0.0
    %1147 = vmatprep.subr.mxu0 0.0
    %1148 = vmatpush1.xpose.msra.mxu0 0.0
    %1149 = vmatprep.subr.mxu0 0.0
    %1150 = vmatpush1.xpose.msra.mxu0 0.0
    %1151 = vmatprep.subr.mxu0 0.0
    %1152 = vmatpush1.xpose.msra.mxu0 0.0
    %1153 = vmatprep.subr.mxu0 0.0
    %1154 = vmatpush1.xpose.msra.mxu0 0.0
    %1155 = vmatprep.subr.mxu0 0.0
    %1156 = vmatpush1.xpose.msra.mxu0 0.0
    %1157 = vmatprep.subr.mxu0 0.0
    %1158 = vmatpush1.xpose.msra.mxu0 0.0
    %1159 = vmatprep.subr.mxu0 0.0
    %1160 = vmatpush1.xpose.msra.mxu0 0.0
    %1161 = vmatprep.subr.mxu0 0.0
    %1162 = vmatpush1.xpose.msra.mxu0 0.0
    %1163 = vmatprep.subr.mxu0 0.0
    %1164 = vmatpush1.xpose.msra.mxu0 0.0
    %1165 = vmatprep.subr.mxu0 0.0
    %1166 = vmatpush1.xpose.msra.mxu0 0.0
    %1167 = vmatprep.subr.mxu0 0.0
    %1168 = vmatpush1.xpose.msra.mxu0 0.0
    %1169 = vmatprep.subr.mxu0 0.0
    %1170 = vmatpush1.xpose.msra.mxu0 0.0
    %1171 = vmatprep.subr.mxu0 0.0
    %1172 = vmatpush1.xpose.msra.mxu0 0.0
    %1173 = vmatprep.mubr.f32.mxu0 0.0
    %1174 = vmatmul.mubr.f32.gmra.mrb[0].mxu0 %v1101
    %v1175 = vpop.f32.mrb[0].mxu0
    %v1176 = vadd.f32 0.0, %v1175
    %v1177 = vpop.f32.mrb[0].mxu0
    %1178 = vmatprep.mubr.f32.mxu0 0.0
    %1179 = vmatmul.mubr.f32.gmra.mrb[0].mxu0 %v1103
    %v1180 = vpop.f32.mrb[0].mxu0
    %v1181 = vadd.f32 0.0, %v1180
    %v1182 = vpop.f32.mrb[0].mxu0
    %1183 = vdwg.mxu0
    %v1184 = vmul.f32 %v595, 0.17677669
    %v1185 = vmul.f32 %v600, 0.17677669
    %v1186 = vmul.f32 %v678, 0.17677669
    %v1187 = vmul.f32 %v683, 0.17677669
    %v1188 = vmul.f32 %v761, 0.17677669
    %v1189 = vmul.f32 %v766, 0.17677669
    %v1190 = vmul.f32 %v844, 0.17677669
    %v1191 = vmul.f32 %v849, 0.17677669
    %v1192 = vmul.f32 %v927, 0.17677669
    %v1193 = vmul.f32 %v932, 0.17677669
    %v1194 = vmul.f32 %v1010, 0.17677669
    %v1195 = vmul.f32 %v1015, 0.17677669
    %v1196 = vmul.f32 %v1093, 0.17677669
    %v1197 = vmul.f32 %v1098, 0.17677669
    %v1198 = vmul.f32 %v1176, 0.17677669
    %v1199 = vmul.f32 %v1181, 0.17677669
    %v1200 = vlaneseq
    %v1201 = vshrl.u32 %v1200, 7
    %v1202 = vadd.s32 %v1201, 8
    %v1203 = vlaneseq
    %v1204 = vand.u32 %v1203, 127
    %vm1205 = vcmp.gt.s32.totalorder %v1204, %v1201
    %vm1206 = vcmp.gt.s32.totalorder %v1204, %v1202
    %v1207 = vsel %vm1205, -1e+30, 0.0
    %v1208 = vsel %vm1206, -1e+30, 0.0
    %v1209 = vadd.f32 %v1184, %v1207
    %v1210 = vadd.f32 %v1185, %v1208
    %v1211 = vadd.f32 %v1186, %v1207
    %v1212 = vadd.f32 %v1187, %v1208
    %v1213 = vadd.f32 %v1188, %v1207
    %v1214 = vadd.f32 %v1189, %v1208
    %v1215 = vadd.f32 %v1190, %v1207
    %v1216 = vadd.f32 %v1191, %v1208
    %v1217 = vadd.f32 %v1192, %v1207
    %v1218 = vadd.f32 %v1193, %v1208
    %v1219 = vadd.f32 %v1194, %v1207
    %v1220 = vadd.f32 %v1195, %v1208
    %v1221 = vadd.f32 %v1196, %v1207
    %v1222 = vadd.f32 %v1197, %v1208
    %v1223 = vadd.f32 %v1198, %v1207
    %v1224 = vadd.f32 %v1199, %v1208
    %vm1225 = vcmask 130048
    %v1226 = vsel %vm1225, %v1209, -inf
    %1227 = vmax.xlane.f32.xlu0 %v1226
    %v1228 = vpop.xlane.xlu0 %1227
    %v1229 = vsel %vm1225, %v1210, -inf
    %1230 = vmax.xlane.f32.xlu0 %v1229
    %v1231 = vpop.xlane.xlu0 %1230
    %v1232 = vsel %vm1225, %v1211, -inf
    %1233 = vmax.xlane.f32.xlu0 %v1232
    %v1234 = vpop.xlane.xlu0 %1233
    %v1235 = vsel %vm1225, %v1212, -inf
    %1236 = vmax.xlane.f32.xlu0 %v1235
    %v1237 = vpop.xlane.xlu0 %1236
    %v1238 = vsel %vm1225, %v1213, -inf
    %1239 = vmax.xlane.f32.xlu0 %v1238
    %v1240 = vpop.xlane.xlu0 %1239
    %v1241 = vsel %vm1225, %v1214, -inf
    %1242 = vmax.xlane.f32.xlu0 %v1241
    %v1243 = vpop.xlane.xlu0 %1242
    %v1244 = vsel %vm1225, %v1215, -inf
    %1245 = vmax.xlane.f32.xlu0 %v1244
    %v1246 = vpop.xlane.xlu0 %1245
    %v1247 = vsel %vm1225, %v1216, -inf
    %1248 = vmax.xlane.f32.xlu0 %v1247
    %v1249 = vpop.xlane.xlu0 %1248
    %v1250 = vsel %vm1225, %v1217, -inf
    %1251 = vmax.xlane.f32.xlu0 %v1250
    %v1252 = vpop.xlane.xlu0 %1251
    %v1253 = vsel %vm1225, %v1218, -inf
    %1254 = vmax.xlane.f32.xlu0 %v1253
    %v1255 = vpop.xlane.xlu0 %1254
    %v1256 = vsel %vm1225, %v1219, -inf
    %1257 = vmax.xlane.f32.xlu0 %v1256
    %v1258 = vpop.xlane.xlu0 %1257
    %v1259 = vsel %vm1225, %v1220, -inf
    %1260 = vmax.xlane.f32.xlu0 %v1259
    %v1261 = vpop.xlane.xlu0 %1260
    %v1262 = vsel %vm1225, %v1221, -inf
    %1263 = vmax.xlane.f32.xlu0 %v1262
    %v1264 = vpop.xlane.xlu0 %1263
    %v1265 = vsel %vm1225, %v1222, -inf
    %1266 = vmax.xlane.f32.xlu0 %v1265
    %v1267 = vpop.xlane.xlu0 %1266
    %v1268 = vsel %vm1225, %v1223, -inf
    %1269 = vmax.xlane.f32.xlu0 %v1268
    %v1270 = vpop.xlane.xlu0 %1269
    %v1271 = vsel %vm1225, %v1224, -inf
    %1272 = vmax.xlane.f32.xlu0 %v1271
    %v1273 = vpop.xlane.xlu0 %1272
    %v1274 = vsub.f32 %v1209, %v1228
    %v1275 = vsub.f32 %v1210, %v1231
    %v1276 = vsub.f32 %v1211, %v1234
    %v1277 = vsub.f32 %v1212, %v1237
    %v1278 = vsub.f32 %v1213, %v1240
    %v1279 = vsub.f32 %v1214, %v1243
    %v1280 = vsub.f32 %v1215, %v1246
    %v1281 = vsub.f32 %v1216, %v1249
    %v1282 = vsub.f32 %v1217, %v1252
    %v1283 = vsub.f32 %v1218, %v1255
    %v1284 = vsub.f32 %v1219, %v1258
    %v1285 = vsub.f32 %v1220, %v1261
    %v1286 = vsub.f32 %v1221, %v1264
    %v1287 = vsub.f32 %v1222, %v1267
    %v1288 = vsub.f32 %v1223, %v1270
    %v1289 = vsub.f32 %v1224, %v1273
    %v1290 = vmul.f32 %v1274, 1.442695
    %v1291 = vpow.pop %v1290
    %v1292 = vmul.f32 %v1275, 1.442695
    %v1293 = vpow.pop %v1292
    %v1294 = vmul.f32 %v1276, 1.442695
    %v1295 = vpow.pop %v1294
    %v1296 = vmul.f32 %v1277, 1.442695
    %v1297 = vpow.pop %v1296
    %v1298 = vmul.f32 %v1278, 1.442695
    %v1299 = vpow.pop %v1298
    %v1300 = vmul.f32 %v1279, 1.442695
    %v1301 = vpow.pop %v1300
    %v1302 = vmul.f32 %v1280, 1.442695
    %v1303 = vpow.pop %v1302
    %v1304 = vmul.f32 %v1281, 1.442695
    %v1305 = vpow.pop %v1304
    %v1306 = vmul.f32 %v1282, 1.442695
    %v1307 = vpow.pop %v1306
    %v1308 = vmul.f32 %v1283, 1.442695
    %v1309 = vpow.pop %v1308
    %v1310 = vmul.f32 %v1284, 1.442695
    %v1311 = vpow.pop %v1310
    %v1312 = vmul.f32 %v1285, 1.442695
    %v1313 = vpow.pop %v1312
    %v1314 = vmul.f32 %v1286, 1.442695
    %v1315 = vpow.pop %v1314
    %v1316 = vmul.f32 %v1287, 1.442695
    %v1317 = vpow.pop %v1316
    %v1318 = vmul.f32 %v1288, 1.442695
    %v1319 = vpow.pop %v1318
    %v1320 = vmul.f32 %v1289, 1.442695
    %v1321 = vpow.pop %v1320
    %v1322 = vsel %vm1225, %v1291, 0.0
    %1323 = vadd.xlane.f32.xlu0 %v1322
    %v1324 = vpop.xlane.xlu0 %1323
    %v1325 = vsel %vm1225, %v1293, 0.0
    %1326 = vadd.xlane.f32.xlu0 %v1325
    %v1327 = vpop.xlane.xlu0 %1326
    %v1328 = vsel %vm1225, %v1295, 0.0
    %1329 = vadd.xlane.f32.xlu0 %v1328
    %v1330 = vpop.xlane.xlu0 %1329
    %v1331 = vsel %vm1225, %v1297, 0.0
    %1332 = vadd.xlane.f32.xlu0 %v1331
    %v1333 = vpop.xlane.xlu0 %1332
    %v1334 = vsel %vm1225, %v1299, 0.0
    %1335 = vadd.xlane.f32.xlu0 %v1334
    %v1336 = vpop.xlane.xlu0 %1335
    %v1337 = vsel %vm1225, %v1301, 0.0
    %1338 = vadd.xlane.f32.xlu0 %v1337
    %v1339 = vpop.xlane.xlu0 %1338
    %v1340 = vsel %vm1225, %v1303, 0.0
    %1341 = vadd.xlane.f32.xlu0 %v1340
    %v1342 = vpop.xlane.xlu0 %1341
    %v1343 = vsel %vm1225, %v1305, 0.0
    %1344 = vadd.xlane.f32.xlu0 %v1343
    %v1345 = vpop.xlane.xlu0 %1344
    %v1346 = vsel %vm1225, %v1307, 0.0
    %1347 = vadd.xlane.f32.xlu0 %v1346
    %v1348 = vpop.xlane.xlu0 %1347
    %v1349 = vsel %vm1225, %v1309, 0.0
    %1350 = vadd.xlane.f32.xlu0 %v1349
    %v1351 = vpop.xlane.xlu0 %1350
    %v1352 = vsel %vm1225, %v1311, 0.0
    %1353 = vadd.xlane.f32.xlu0 %v1352
    %v1354 = vpop.xlane.xlu0 %1353
    %v1355 = vsel %vm1225, %v1313, 0.0
    %1356 = vadd.xlane.f32.xlu0 %v1355
    %v1357 = vpop.xlane.xlu0 %1356
    %v1358 = vsel %vm1225, %v1315, 0.0
    %1359 = vadd.xlane.f32.xlu0 %v1358
    %v1360 = vpop.xlane.xlu0 %1359
    %v1361 = vsel %vm1225, %v1317, 0.0
    %1362 = vadd.xlane.f32.xlu0 %v1361
    %v1363 = vpop.xlane.xlu0 %1362
    %v1364 = vsel %vm1225, %v1319, 0.0
    %1365 = vadd.xlane.f32.xlu0 %v1364
    %v1366 = vpop.xlane.xlu0 %1365
    %v1367 = vsel %vm1225, %v1321, 0.0
    %1368 = vadd.xlane.f32.xlu0 %v1367
    %v1369 = vpop.xlane.xlu0 %1368
    %v1370 = vrcp.pop %v1324
    %v1371 = vrcp.pop %v1327
    %v1372 = vrcp.pop %v1330
    %v1373 = vrcp.pop %v1333
    %v1374 = vrcp.pop %v1336
    %v1375 = vrcp.pop %v1339
    %v1376 = vrcp.pop %v1342
    %v1377 = vrcp.pop %v1345
    %v1378 = vrcp.pop %v1348
    %v1379 = vrcp.pop %v1351
    %v1380 = vrcp.pop %v1354
    %v1381 = vrcp.pop %v1357
    %v1382 = vrcp.pop %v1360
    %v1383 = vrcp.pop %v1363
    %v1384 = vrcp.pop %v1366
    %v1385 = vrcp.pop %v1369
    %v1386 = vmul.f32 %v1324, %v1370
    %v1387 = vmul.f32 %v1327, %v1371
    %v1388 = vmul.f32 %v1330, %v1372
    %v1389 = vmul.f32 %v1333, %v1373
    %v1390 = vmul.f32 %v1336, %v1374
    %v1391 = vmul.f32 %v1339, %v1375
    %v1392 = vmul.f32 %v1342, %v1376
    %v1393 = vmul.f32 %v1345, %v1377
    %v1394 = vmul.f32 %v1348, %v1378
    %v1395 = vmul.f32 %v1351, %v1379
    %v1396 = vmul.f32 %v1354, %v1380
    %v1397 = vmul.f32 %v1357, %v1381
    %v1398 = vmul.f32 %v1360, %v1382
    %v1399 = vmul.f32 %v1363, %v1383
    %v1400 = vmul.f32 %v1366, %v1384
    %v1401 = vmul.f32 %v1369, %v1385
    %v1402 = vsub.f32 2.0, %v1386
    %v1403 = vsub.f32 2.0, %v1387
    %v1404 = vsub.f32 2.0, %v1388
    %v1405 = vsub.f32 2.0, %v1389
    %v1406 = vsub.f32 2.0, %v1390
    %v1407 = vsub.f32 2.0, %v1391
    %v1408 = vsub.f32 2.0, %v1392
    %v1409 = vsub.f32 2.0, %v1393
    %v1410 = vsub.f32 2.0, %v1394
    %v1411 = vsub.f32 2.0, %v1395
    %v1412 = vsub.f32 2.0, %v1396
    %v1413 = vsub.f32 2.0, %v1397
    %v1414 = vsub.f32 2.0, %v1398
    %v1415 = vsub.f32 2.0, %v1399
    %v1416 = vsub.f32 2.0, %v1400
    %v1417 = vsub.f32 2.0, %v1401
    %v1418 = vmul.f32 %v1370, %v1402
    %v1419 = vmul.f32 %v1371, %v1403
    %v1420 = vmul.f32 %v1372, %v1404
    %v1421 = vmul.f32 %v1373, %v1405
    %v1422 = vmul.f32 %v1374, %v1406
    %v1423 = vmul.f32 %v1375, %v1407
    %v1424 = vmul.f32 %v1376, %v1408
    %v1425 = vmul.f32 %v1377, %v1409
    %v1426 = vmul.f32 %v1378, %v1410
    %v1427 = vmul.f32 %v1379, %v1411
    %v1428 = vmul.f32 %v1380, %v1412
    %v1429 = vmul.f32 %v1381, %v1413
    %v1430 = vmul.f32 %v1382, %v1414
    %v1431 = vmul.f32 %v1383, %v1415
    %v1432 = vmul.f32 %v1384, %v1416
    %v1433 = vmul.f32 %v1385, %v1417
    %v1434 = vmul.f32 %v1291, %v1418
    %v1435 = vmul.f32 %v1293, %v1419
    %v1436 = vmul.f32 %v1295, %v1420
    %v1437 = vmul.f32 %v1297, %v1421
    %v1438 = vmul.f32 %v1299, %v1422
    %v1439 = vmul.f32 %v1301, %v1423
    %v1440 = vmul.f32 %v1303, %v1424
    %v1441 = vmul.f32 %v1305, %v1425
    %v1442 = vmul.f32 %v1307, %v1426
    %v1443 = vmul.f32 %v1309, %v1427
    %v1444 = vmul.f32 %v1311, %v1428
    %v1445 = vmul.f32 %v1313, %v1429
    %v1446 = vmul.f32 %v1315, %v1430
    %v1447 = vmul.f32 %v1317, %v1431
    %v1448 = vmul.f32 %v1319, %v1432
    %v1449 = vmul.f32 %v1321, %v1433
    %v1451 = vsel %vm1225, %v1434, 0
    %v1454 = vsel %vm1225, %v1435, 0
    %1456 = vmatprep.subr.mxu0 0.0
    %1457 = vmatpush1.msra.mxu0 %v405
    %1458 = vmatprep.subr.mxu0 0.0
    %1459 = vmatpush1.msra.mxu0 %v410
    %1460 = vmatprep.subr.mxu0 0.0
    %1461 = vmatpush1.msra.mxu0 0.0
    %1462 = vmatprep.subr.mxu0 0.0
    %1463 = vmatpush1.msra.mxu0 0.0
    %1464 = vmatprep.subr.mxu0 0.0
    %1465 = vmatpush1.msra.mxu0 0.0
    %1466 = vmatprep.subr.mxu0 0.0
    %1467 = vmatpush1.msra.mxu0 0.0
    %1468 = vmatprep.subr.mxu0 0.0
    %1469 = vmatpush1.msra.mxu0 0.0
    %1470 = vmatprep.subr.mxu0 0.0
    %1471 = vmatpush1.msra.mxu0 0.0
    %1472 = vmatprep.subr.mxu0 0.0
    %1473 = vmatpush1.msra.mxu0 0.0
    %1474 = vmatprep.subr.mxu0 0.0
    %1475 = vmatpush1.msra.mxu0 0.0
    %1476 = vmatprep.subr.mxu0 0.0
    %1477 = vmatpush1.msra.mxu0 0.0
    %1478 = vmatprep.subr.mxu0 0.0
    %1479 = vmatpush1.msra.mxu0 0.0
    %1480 = vmatprep.subr.mxu0 0.0
    %1481 = vmatpush1.msra.mxu0 0.0
    %1482 = vmatprep.subr.mxu0 0.0
    %1483 = vmatpush1.msra.mxu0 0.0
    %1484 = vmatprep.subr.mxu0 0.0
    %1485 = vmatpush1.msra.mxu0 0.0
    %1486 = vmatprep.subr.mxu0 0.0
    %1487 = vmatpush1.msra.mxu0 0.0
    %1488 = vmatprep.subr.mxu0 0.0
    %1489 = vmatpush1.msra.mxu0 0.0
    %1490 = vmatprep.subr.mxu0 0.0
    %1491 = vmatpush1.msra.mxu0 0.0
    %1492 = vmatprep.subr.mxu0 0.0
    %1493 = vmatpush1.msra.mxu0 0.0
    %1494 = vmatprep.subr.mxu0 0.0
    %1495 = vmatpush1.msra.mxu0 0.0
    %1496 = vmatprep.subr.mxu0 0.0
    %1497 = vmatpush1.msra.mxu0 0.0
    %1498 = vmatprep.subr.mxu0 0.0
    %1499 = vmatpush1.msra.mxu0 0.0
    %1500 = vmatprep.subr.mxu0 0.0
    %1501 = vmatpush1.msra.mxu0 0.0
    %1502 = vmatprep.subr.mxu0 0.0
    %1503 = vmatpush1.msra.mxu0 0.0
    %1504 = vmatprep.subr.mxu0 0.0
    %1505 = vmatpush1.msra.mxu0 0.0
    %1506 = vmatprep.subr.mxu0 0.0
    %1507 = vmatpush1.msra.mxu0 0.0
    %1508 = vmatprep.subr.mxu0 0.0
    %1509 = vmatpush1.msra.mxu0 0.0
    %1510 = vmatprep.subr.mxu0 0.0
    %1511 = vmatpush1.msra.mxu0 0.0
    %1512 = vmatprep.subr.mxu0 0.0
    %1513 = vmatpush1.msra.mxu0 0.0
    %1514 = vmatprep.subr.mxu0 0.0
    %1515 = vmatpush1.msra.mxu0 0.0
    %1516 = vmatprep.subr.mxu0 0.0
    %1517 = vmatpush1.msra.mxu0 0.0
    %1518 = vmatprep.subr.mxu0 0.0
    %1519 = vmatpush1.msra.mxu0 0.0
    %1520 = vmatprep.mubr.f32.mxu0 0.0
    %1521 = vmatmul.mubr.f32.gmra.mrb[0].mxu0 %v1451
    %v1522 = vpop.f32.mrb[0].mxu0
    %v1523 = vadd.f32 0.0, %v1522
    %v1524 = vpop.f32.mrb[0].mxu0
    %1525 = vmatprep.mubr.f32.mxu0 0.0
    %1526 = vmatmul.mubr.f32.gmra.mrb[0].mxu0 %v1454
    %v1527 = vpop.f32.mrb[0].mxu0
    %v1528 = vadd.f32 0.0, %v1527
    %v1529 = vpop.f32.mrb[0].mxu0
    %1530 = vdwg.mxu0
    %v1532 = vsel %vm1225, %v1436, 0
    %v1535 = vsel %vm1225, %v1437, 0
    %1537 = vmatprep.subr.mxu0 0.0
    %1538 = vmatpush1.msra.mxu0 %v482
    %1539 = vmatprep.subr.mxu0 0.0
    %1540 = vmatpush1.msra.mxu0 %v484
    %1541 = vmatprep.subr.mxu0 0.0
    %1542 = vmatpush1.msra.mxu0 0.0
    %1543 = vmatprep.subr.mxu0 0.0
    %1544 = vmatpush1.msra.mxu0 0.0
    %1545 = vmatprep.subr.mxu0 0.0
    %1546 = vmatpush1.msra.mxu0 0.0
    %1547 = vmatprep.subr.mxu0 0.0
    %1548 = vmatpush1.msra.mxu0 0.0
    %1549 = vmatprep.subr.mxu0 0.0
    %1550 = vmatpush1.msra.mxu0 0.0
    %1551 = vmatprep.subr.mxu0 0.0
    %1552 = vmatpush1.msra.mxu0 0.0
    %1553 = vmatprep.subr.mxu0 0.0
    %1554 = vmatpush1.msra.mxu0 0.0
    %1555 = vmatprep.subr.mxu0 0.0
    %1556 = vmatpush1.msra.mxu0 0.0
    %1557 = vmatprep.subr.mxu0 0.0
    %1558 = vmatpush1.msra.mxu0 0.0
    %1559 = vmatprep.subr.mxu0 0.0
    %1560 = vmatpush1.msra.mxu0 0.0
    %1561 = vmatprep.subr.mxu0 0.0
    %1562 = vmatpush1.msra.mxu0 0.0
    %1563 = vmatprep.subr.mxu0 0.0
    %1564 = vmatpush1.msra.mxu0 0.0
    %1565 = vmatprep.subr.mxu0 0.0
    %1566 = vmatpush1.msra.mxu0 0.0
    %1567 = vmatprep.subr.mxu0 0.0
    %1568 = vmatpush1.msra.mxu0 0.0
    %1569 = vmatprep.subr.mxu0 0.0
    %1570 = vmatpush1.msra.mxu0 0.0
    %1571 = vmatprep.subr.mxu0 0.0
    %1572 = vmatpush1.msra.mxu0 0.0
    %1573 = vmatprep.subr.mxu0 0.0
    %1574 = vmatpush1.msra.mxu0 0.0
    %1575 = vmatprep.subr.mxu0 0.0
    %1576 = vmatpush1.msra.mxu0 0.0
    %1577 = vmatprep.subr.mxu0 0.0
    %1578 = vmatpush1.msra.mxu0 0.0
    %1579 = vmatprep.subr.mxu0 0.0
    %1580 = vmatpush1.msra.mxu0 0.0
    %1581 = vmatprep.subr.mxu0 0.0
    %1582 = vmatpush1.msra.mxu0 0.0
    %1583 = vmatprep.subr.mxu0 0.0
    %1584 = vmatpush1.msra.mxu0 0.0
    %1585 = vmatprep.subr.mxu0 0.0
    %1586 = vmatpush1.msra.mxu0 0.0
    %1587 = vmatprep.subr.mxu0 0.0
    %1588 = vmatpush1.msra.mxu0 0.0
    %1589 = vmatprep.subr.mxu0 0.0
    %1590 = vmatpush1.msra.mxu0 0.0
    %1591 = vmatprep.subr.mxu0 0.0
    %1592 = vmatpush1.msra.mxu0 0.0
    %1593 = vmatprep.subr.mxu0 0.0
    %1594 = vmatpush1.msra.mxu0 0.0
    %1595 = vmatprep.subr.mxu0 0.0
    %1596 = vmatpush1.msra.mxu0 0.0
    %1597 = vmatprep.subr.mxu0 0.0
    %1598 = vmatpush1.msra.mxu0 0.0
    %1599 = vmatprep.subr.mxu0 0.0
    %1600 = vmatpush1.msra.mxu0 0.0
    %1601 = vmatprep.mubr.f32.mxu0 0.0
    %1602 = vmatmul.mubr.f32.gmra.mrb[0].mxu0 %v1532
    %v1603 = vpop.f32.mrb[0].mxu0
    %v1604 = vadd.f32 0.0, %v1603
    %v1605 = vpop.f32.mrb[0].mxu0
    %1606 = vmatprep.mubr.f32.mxu0 0.0
    %1607 = vmatmul.mubr.f32.gmra.mrb[0].mxu0 %v1535
    %v1608 = vpop.f32.mrb[0].mxu0
    %v1609 = vadd.f32 0.0, %v1608
    %v1610 = vpop.f32.mrb[0].mxu0
    %1611 = vdwg.mxu0
    %v1613 = vsel %vm1225, %v1438, 0
    %v1616 = vsel %vm1225, %v1439, 0
    %1618 = vmatprep.subr.mxu0 0.0
    %1619 = vmatpush1.msra.mxu0 %v488
    %1620 = vmatprep.subr.mxu0 0.0
    %1621 = vmatpush1.msra.mxu0 %v490
    %1622 = vmatprep.subr.mxu0 0.0
    %1623 = vmatpush1.msra.mxu0 0.0
    %1624 = vmatprep.subr.mxu0 0.0
    %1625 = vmatpush1.msra.mxu0 0.0
    %1626 = vmatprep.subr.mxu0 0.0
    %1627 = vmatpush1.msra.mxu0 0.0
    %1628 = vmatprep.subr.mxu0 0.0
    %1629 = vmatpush1.msra.mxu0 0.0
    %1630 = vmatprep.subr.mxu0 0.0
    %1631 = vmatpush1.msra.mxu0 0.0
    %1632 = vmatprep.subr.mxu0 0.0
    %1633 = vmatpush1.msra.mxu0 0.0
    %1634 = vmatprep.subr.mxu0 0.0
    %1635 = vmatpush1.msra.mxu0 0.0
    %1636 = vmatprep.subr.mxu0 0.0
    %1637 = vmatpush1.msra.mxu0 0.0
    %1638 = vmatprep.subr.mxu0 0.0
    %1639 = vmatpush1.msra.mxu0 0.0
    %1640 = vmatprep.subr.mxu0 0.0
    %1641 = vmatpush1.msra.mxu0 0.0
    %1642 = vmatprep.subr.mxu0 0.0
    %1643 = vmatpush1.msra.mxu0 0.0
    %1644 = vmatprep.subr.mxu0 0.0
    %1645 = vmatpush1.msra.mxu0 0.0
    %1646 = vmatprep.subr.mxu0 0.0
    %1647 = vmatpush1.msra.mxu0 0.0
    %1648 = vmatprep.subr.mxu0 0.0
    %1649 = vmatpush1.msra.mxu0 0.0
    %1650 = vmatprep.subr.mxu0 0.0
    %1651 = vmatpush1.msra.mxu0 0.0
    %1652 = vmatprep.subr.mxu0 0.0
    %1653 = vmatpush1.msra.mxu0 0.0
    %1654 = vmatprep.subr.mxu0 0.0
    %1655 = vmatpush1.msra.mxu0 0.0
    %1656 = vmatprep.subr.mxu0 0.0
    %1657 = vmatpush1.msra.mxu0 0.0
    %1658 = vmatprep.subr.mxu0 0.0
    %1659 = vmatpush1.msra.mxu0 0.0
    %1660 = vmatprep.subr.mxu0 0.0
    %1661 = vmatpush1.msra.mxu0 0.0
    %1662 = vmatprep.subr.mxu0 0.0
    %1663 = vmatpush1.msra.mxu0 0.0
    %1664 = vmatprep.subr.mxu0 0.0
    %1665 = vmatpush1.msra.mxu0 0.0
    %1666 = vmatprep.subr.mxu0 0.0
    %1667 = vmatpush1.msra.mxu0 0.0
    %1668 = vmatprep.subr.mxu0 0.0
    %1669 = vmatpush1.msra.mxu0 0.0
    %1670 = vmatprep.subr.mxu0 0.0
    %1671 = vmatpush1.msra.mxu0 0.0
    %1672 = vmatprep.subr.mxu0 0.0
    %1673 = vmatpush1.msra.mxu0 0.0
    %1674 = vmatprep.subr.mxu0 0.0
    %1675 = vmatpush1.msra.mxu0 0.0
    %1676 = vmatprep.subr.mxu0 0.0
    %1677 = vmatpush1.msra.mxu0 0.0
    %1678 = vmatprep.subr.mxu0 0.0
    %1679 = vmatpush1.msra.mxu0 0.0
    %1680 = vmatprep.subr.mxu0 0.0
    %1681 = vmatpush1.msra.mxu0 0.0
    %1682 = vmatprep.mubr.f32.mxu0 0.0
    %1683 = vmatmul.mubr.f32.gmra.mrb[0].mxu0 %v1613
    %v1684 = vpop.f32.mrb[0].mxu0
    %v1685 = vadd.f32 0.0, %v1684
    %v1686 = vpop.f32.mrb[0].mxu0
    %1687 = vmatprep.mubr.f32.mxu0 0.0
    %1688 = vmatmul.mubr.f32.gmra.mrb[0].mxu0 %v1616
    %v1689 = vpop.f32.mrb[0].mxu0
    %v1690 = vadd.f32 0.0, %v1689
    %v1691 = vpop.f32.mrb[0].mxu0
    %1692 = vdwg.mxu0
    %v1694 = vsel %vm1225, %v1440, 0
    %v1697 = vsel %vm1225, %v1441, 0
    %1699 = vmatprep.subr.mxu0 0.0
    %1700 = vmatpush1.msra.mxu0 %v494
    %1701 = vmatprep.subr.mxu0 0.0
    %1702 = vmatpush1.msra.mxu0 %v496
    %1703 = vmatprep.subr.mxu0 0.0
    %1704 = vmatpush1.msra.mxu0 0.0
    %1705 = vmatprep.subr.mxu0 0.0
    %1706 = vmatpush1.msra.mxu0 0.0
    %1707 = vmatprep.subr.mxu0 0.0
    %1708 = vmatpush1.msra.mxu0 0.0
    %1709 = vmatprep.subr.mxu0 0.0
    %1710 = vmatpush1.msra.mxu0 0.0
    %1711 = vmatprep.subr.mxu0 0.0
    %1712 = vmatpush1.msra.mxu0 0.0
    %1713 = vmatprep.subr.mxu0 0.0
    %1714 = vmatpush1.msra.mxu0 0.0
    %1715 = vmatprep.subr.mxu0 0.0
    %1716 = vmatpush1.msra.mxu0 0.0
    %1717 = vmatprep.subr.mxu0 0.0
    %1718 = vmatpush1.msra.mxu0 0.0
    %1719 = vmatprep.subr.mxu0 0.0
    %1720 = vmatpush1.msra.mxu0 0.0
    %1721 = vmatprep.subr.mxu0 0.0
    %1722 = vmatpush1.msra.mxu0 0.0
    %1723 = vmatprep.subr.mxu0 0.0
    %1724 = vmatpush1.msra.mxu0 0.0
    %1725 = vmatprep.subr.mxu0 0.0
    %1726 = vmatpush1.msra.mxu0 0.0
    %1727 = vmatprep.subr.mxu0 0.0
    %1728 = vmatpush1.msra.mxu0 0.0
    %1729 = vmatprep.subr.mxu0 0.0
    %1730 = vmatpush1.msra.mxu0 0.0
    %1731 = vmatprep.subr.mxu0 0.0
    %1732 = vmatpush1.msra.mxu0 0.0
    %1733 = vmatprep.subr.mxu0 0.0
    %1734 = vmatpush1.msra.mxu0 0.0
    %1735 = vmatprep.subr.mxu0 0.0
    %1736 = vmatpush1.msra.mxu0 0.0
    %1737 = vmatprep.subr.mxu0 0.0
    %1738 = vmatpush1.msra.mxu0 0.0
    %1739 = vmatprep.subr.mxu0 0.0
    %1740 = vmatpush1.msra.mxu0 0.0
    %1741 = vmatprep.subr.mxu0 0.0
    %1742 = vmatpush1.msra.mxu0 0.0
    %1743 = vmatprep.subr.mxu0 0.0
    %1744 = vmatpush1.msra.mxu0 0.0
    %1745 = vmatprep.subr.mxu0 0.0
    %1746 = vmatpush1.msra.mxu0 0.0
    %1747 = vmatprep.subr.mxu0 0.0
    %1748 = vmatpush1.msra.mxu0 0.0
    %1749 = vmatprep.subr.mxu0 0.0
    %1750 = vmatpush1.msra.mxu0 0.0
    %1751 = vmatprep.subr.mxu0 0.0
    %1752 = vmatpush1.msra.mxu0 0.0
    %1753 = vmatprep.subr.mxu0 0.0
    %1754 = vmatpush1.msra.mxu0 0.0
    %1755 = vmatprep.subr.mxu0 0.0
    %1756 = vmatpush1.msra.mxu0 0.0
    %1757 = vmatprep.subr.mxu0 0.0
    %1758 = vmatpush1.msra.mxu0 0.0
    %1759 = vmatprep.subr.mxu0 0.0
    %1760 = vmatpush1.msra.mxu0 0.0
    %1761 = vmatprep.subr.mxu0 0.0
    %1762 = vmatpush1.msra.mxu0 0.0
    %1763 = vmatprep.mubr.f32.mxu0 0.0
    %1764 = vmatmul.mubr.f32.gmra.mrb[0].mxu0 %v1694
    %v1765 = vpop.f32.mrb[0].mxu0
    %v1766 = vadd.f32 0.0, %v1765
    %v1767 = vpop.f32.mrb[0].mxu0
    %1768 = vmatprep.mubr.f32.mxu0 0.0
    %1769 = vmatmul.mubr.f32.gmra.mrb[0].mxu0 %v1697
    %v1770 = vpop.f32.mrb[0].mxu0
    %v1771 = vadd.f32 0.0, %v1770
    %v1772 = vpop.f32.mrb[0].mxu0
    %1773 = vdwg.mxu0
    %v1775 = vsel %vm1225, %v1442, 0
    %v1778 = vsel %vm1225, %v1443, 0
    %1780 = vmatprep.subr.mxu0 0.0
    %1781 = vmatpush1.msra.mxu0 %v415
    %1782 = vmatprep.subr.mxu0 0.0
    %1783 = vmatpush1.msra.mxu0 %v420
    %1784 = vmatprep.subr.mxu0 0.0
    %1785 = vmatpush1.msra.mxu0 0.0
    %1786 = vmatprep.subr.mxu0 0.0
    %1787 = vmatpush1.msra.mxu0 0.0
    %1788 = vmatprep.subr.mxu0 0.0
    %1789 = vmatpush1.msra.mxu0 0.0
    %1790 = vmatprep.subr.mxu0 0.0
    %1791 = vmatpush1.msra.mxu0 0.0
    %1792 = vmatprep.subr.mxu0 0.0
    %1793 = vmatpush1.msra.mxu0 0.0
    %1794 = vmatprep.subr.mxu0 0.0
    %1795 = vmatpush1.msra.mxu0 0.0
    %1796 = vmatprep.subr.mxu0 0.0
    %1797 = vmatpush1.msra.mxu0 0.0
    %1798 = vmatprep.subr.mxu0 0.0
    %1799 = vmatpush1.msra.mxu0 0.0
    %1800 = vmatprep.subr.mxu0 0.0
    %1801 = vmatpush1.msra.mxu0 0.0
    %1802 = vmatprep.subr.mxu0 0.0
    %1803 = vmatpush1.msra.mxu0 0.0
    %1804 = vmatprep.subr.mxu0 0.0
    %1805 = vmatpush1.msra.mxu0 0.0
    %1806 = vmatprep.subr.mxu0 0.0
    %1807 = vmatpush1.msra.mxu0 0.0
    %1808 = vmatprep.subr.mxu0 0.0
    %1809 = vmatpush1.msra.mxu0 0.0
    %1810 = vmatprep.subr.mxu0 0.0
    %1811 = vmatpush1.msra.mxu0 0.0
    %1812 = vmatprep.subr.mxu0 0.0
    %1813 = vmatpush1.msra.mxu0 0.0
    %1814 = vmatprep.subr.mxu0 0.0
    %1815 = vmatpush1.msra.mxu0 0.0
    %1816 = vmatprep.subr.mxu0 0.0
    %1817 = vmatpush1.msra.mxu0 0.0
    %1818 = vmatprep.subr.mxu0 0.0
    %1819 = vmatpush1.msra.mxu0 0.0
    %1820 = vmatprep.subr.mxu0 0.0
    %1821 = vmatpush1.msra.mxu0 0.0
    %1822 = vmatprep.subr.mxu0 0.0
    %1823 = vmatpush1.msra.mxu0 0.0
    %1824 = vmatprep.subr.mxu0 0.0
    %1825 = vmatpush1.msra.mxu0 0.0
    %1826 = vmatprep.subr.mxu0 0.0
    %1827 = vmatpush1.msra.mxu0 0.0
    %1828 = vmatprep.subr.mxu0 0.0
    %1829 = vmatpush1.msra.mxu0 0.0
    %1830 = vmatprep.subr.mxu0 0.0
    %1831 = vmatpush1.msra.mxu0 0.0
    %1832 = vmatprep.subr.mxu0 0.0
    %1833 = vmatpush1.msra.mxu0 0.0
    %1834 = vmatprep.subr.mxu0 0.0
    %1835 = vmatpush1.msra.mxu0 0.0
    %1836 = vmatprep.subr.mxu0 0.0
    %1837 = vmatpush1.msra.mxu0 0.0
    %1838 = vmatprep.subr.mxu0 0.0
    %1839 = vmatpush1.msra.mxu0 0.0
    %1840 = vmatprep.subr.mxu0 0.0
    %1841 = vmatpush1.msra.mxu0 0.0
    %1842 = vmatprep.subr.mxu0 0.0
    %1843 = vmatpush1.msra.mxu0 0.0
    %1844 = vmatprep.mubr.f32.mxu0 0.0
    %1845 = vmatmul.mubr.f32.gmra.mrb[0].mxu0 %v1775
    %v1846 = vpop.f32.mrb[0].mxu0
    %v1847 = vadd.f32 0.0, %v1846
    %v1848 = vpop.f32.mrb[0].mxu0
    %1849 = vmatprep.mubr.f32.mxu0 0.0
    %1850 = vmatmul.mubr.f32.gmra.mrb[0].mxu0 %v1778
    %v1851 = vpop.f32.mrb[0].mxu0
    %v1852 = vadd.f32 0.0, %v1851
    %v1853 = vpop.f32.mrb[0].mxu0
    %1854 = vdwg.mxu0
    %v1856 = vsel %vm1225, %v1444, 0
    %v1859 = vsel %vm1225, %v1445, 0
    %1861 = vmatprep.subr.mxu0 0.0
    %1862 = vmatpush1.msra.mxu0 %v502
    %1863 = vmatprep.subr.mxu0 0.0
    %1864 = vmatpush1.msra.mxu0 %v504
    %1865 = vmatprep.subr.mxu0 0.0
    %1866 = vmatpush1.msra.mxu0 0.0
    %1867 = vmatprep.subr.mxu0 0.0
    %1868 = vmatpush1.msra.mxu0 0.0
    %1869 = vmatprep.subr.mxu0 0.0
    %1870 = vmatpush1.msra.mxu0 0.0
    %1871 = vmatprep.subr.mxu0 0.0
    %1872 = vmatpush1.msra.mxu0 0.0
    %1873 = vmatprep.subr.mxu0 0.0
    %1874 = vmatpush1.msra.mxu0 0.0
    %1875 = vmatprep.subr.mxu0 0.0
    %1876 = vmatpush1.msra.mxu0 0.0
    %1877 = vmatprep.subr.mxu0 0.0
    %1878 = vmatpush1.msra.mxu0 0.0
    %1879 = vmatprep.subr.mxu0 0.0
    %1880 = vmatpush1.msra.mxu0 0.0
    %1881 = vmatprep.subr.mxu0 0.0
    %1882 = vmatpush1.msra.mxu0 0.0
    %1883 = vmatprep.subr.mxu0 0.0
    %1884 = vmatpush1.msra.mxu0 0.0
    %1885 = vmatprep.subr.mxu0 0.0
    %1886 = vmatpush1.msra.mxu0 0.0
    %1887 = vmatprep.subr.mxu0 0.0
    %1888 = vmatpush1.msra.mxu0 0.0
    %1889 = vmatprep.subr.mxu0 0.0
    %1890 = vmatpush1.msra.mxu0 0.0
    %1891 = vmatprep.subr.mxu0 0.0
    %1892 = vmatpush1.msra.mxu0 0.0
    %1893 = vmatprep.subr.mxu0 0.0
    %1894 = vmatpush1.msra.mxu0 0.0
    %1895 = vmatprep.subr.mxu0 0.0
    %1896 = vmatpush1.msra.mxu0 0.0
    %1897 = vmatprep.subr.mxu0 0.0
    %1898 = vmatpush1.msra.mxu0 0.0
    %1899 = vmatprep.subr.mxu0 0.0
    %1900 = vmatpush1.msra.mxu0 0.0
    %1901 = vmatprep.subr.mxu0 0.0
    %1902 = vmatpush1.msra.mxu0 0.0
    %1903 = vmatprep.subr.mxu0 0.0
    %1904 = vmatpush1.msra.mxu0 0.0
    %1905 = vmatprep.subr.mxu0 0.0
    %1906 = vmatpush1.msra.mxu0 0.0
    %1907 = vmatprep.subr.mxu0 0.0
    %1908 = vmatpush1.msra.mxu0 0.0
    %1909 = vmatprep.subr.mxu0 0.0
    %1910 = vmatpush1.msra.mxu0 0.0
    %1911 = vmatprep.subr.mxu0 0.0
    %1912 = vmatpush1.msra.mxu0 0.0
    %1913 = vmatprep.subr.mxu0 0.0
    %1914 = vmatpush1.msra.mxu0 0.0
    %1915 = vmatprep.subr.mxu0 0.0
    %1916 = vmatpush1.msra.mxu0 0.0
    %1917 = vmatprep.subr.mxu0 0.0
    %1918 = vmatpush1.msra.mxu0 0.0
    %1919 = vmatprep.subr.mxu0 0.0
    %1920 = vmatpush1.msra.mxu0 0.0
    %1921 = vmatprep.subr.mxu0 0.0
    %1922 = vmatpush1.msra.mxu0 0.0
    %1923 = vmatprep.subr.mxu0 0.0
    %1924 = vmatpush1.msra.mxu0 0.0
    %1925 = vmatprep.mubr.f32.mxu0 0.0
    %1926 = vmatmul.mubr.f32.gmra.mrb[0].mxu0 %v1856
    %v1927 = vpop.f32.mrb[0].mxu0
    %v1928 = vadd.f32 0.0, %v1927
    %v1929 = vpop.f32.mrb[0].mxu0
    %1930 = vmatprep.mubr.f32.mxu0 0.0
    %1931 = vmatmul.mubr.f32.gmra.mrb[0].mxu0 %v1859
    %v1932 = vpop.f32.mrb[0].mxu0
    %v1933 = vadd.f32 0.0, %v1932
    %v1934 = vpop.f32.mrb[0].mxu0
    %1935 = vdwg.mxu0
    %v1937 = vsel %vm1225, %v1446, 0
    %v1940 = vsel %vm1225, %v1447, 0
    %1942 = vmatprep.subr.mxu0 0.0
    %1943 = vmatpush1.msra.mxu0 %v508
    %1944 = vmatprep.subr.mxu0 0.0
    %1945 = vmatpush1.msra.mxu0 %v510
    %1946 = vmatprep.subr.mxu0 0.0
    %1947 = vmatpush1.msra.mxu0 0.0
    %1948 = vmatprep.subr.mxu0 0.0
    %1949 = vmatpush1.msra.mxu0 0.0
    %1950 = vmatprep.subr.mxu0 0.0
    %1951 = vmatpush1.msra.mxu0 0.0
    %1952 = vmatprep.subr.mxu0 0.0
    %1953 = vmatpush1.msra.mxu0 0.0
    %1954 = vmatprep.subr.mxu0 0.0
    %1955 = vmatpush1.msra.mxu0 0.0
    %1956 = vmatprep.subr.mxu0 0.0
    %1957 = vmatpush1.msra.mxu0 0.0
    %1958 = vmatprep.subr.mxu0 0.0
    %1959 = vmatpush1.msra.mxu0 0.0
    %1960 = vmatprep.subr.mxu0 0.0
    %1961 = vmatpush1.msra.mxu0 0.0
    %1962 = vmatprep.subr.mxu0 0.0
    %1963 = vmatpush1.msra.mxu0 0.0
    %1964 = vmatprep.subr.mxu0 0.0
    %1965 = vmatpush1.msra.mxu0 0.0
    %1966 = vmatprep.subr.mxu0 0.0
    %1967 = vmatpush1.msra.mxu0 0.0
    %1968 = vmatprep.subr.mxu0 0.0
    %1969 = vmatpush1.msra.mxu0 0.0
    %1970 = vmatprep.subr.mxu0 0.0
    %1971 = vmatpush1.msra.mxu0 0.0
    %1972 = vmatprep.subr.mxu0 0.0
    %1973 = vmatpush1.msra.mxu0 0.0
    %1974 = vmatprep.subr.mxu0 0.0
    %1975 = vmatpush1.msra.mxu0 0.0
    %1976 = vmatprep.subr.mxu0 0.0
    %1977 = vmatpush1.msra.mxu0 0.0
    %1978 = vmatprep.subr.mxu0 0.0
    %1979 = vmatpush1.msra.mxu0 0.0
    %1980 = vmatprep.subr.mxu0 0.0
    %1981 = vmatpush1.msra.mxu0 0.0
    %1982 = vmatprep.subr.mxu0 0.0
    %1983 = vmatpush1.msra.mxu0 0.0
    %1984 = vmatprep.subr.mxu0 0.0
    %1985 = vmatpush1.msra.mxu0 0.0
    %1986 = vmatprep.subr.mxu0 0.0
    %1987 = vmatpush1.msra.mxu0 0.0
    %1988 = vmatprep.subr.mxu0 0.0
    %1989 = vmatpush1.msra.mxu0 0.0
    %1990 = vmatprep.subr.mxu0 0.0
    %1991 = vmatpush1.msra.mxu0 0.0
    %1992 = vmatprep.subr.mxu0 0.0
    %1993 = vmatpush1.msra.mxu0 0.0
    %1994 = vmatprep.subr.mxu0 0.0
    %1995 = vmatpush1.msra.mxu0 0.0
    %1996 = vmatprep.subr.mxu0 0.0
    %1997 = vmatpush1.msra.mxu0 0.0
    %1998 = vmatprep.subr.mxu0 0.0
    %1999 = vmatpush1.msra.mxu0 0.0
    %2000 = vmatprep.subr.mxu0 0.0
    %2001 = vmatpush1.msra.mxu0 0.0
    %2002 = vmatprep.subr.mxu0 0.0
    %2003 = vmatpush1.msra.mxu0 0.0
    %2004 = vmatprep.subr.mxu0 0.0
    %2005 = vmatpush1.msra.mxu0 0.0
    %2006 = vmatprep.mubr.f32.mxu0 0.0
    %2007 = vmatmul.mubr.f32.gmra.mrb[0].mxu0 %v1937
    %v2008 = vpop.f32.mrb[0].mxu0
    %v2009 = vadd.f32 0.0, %v2008
    %v2010 = vpop.f32.mrb[0].mxu0
    %2011 = vmatprep.mubr.f32.mxu0 0.0
    %2012 = vmatmul.mubr.f32.gmra.mrb[0].mxu0 %v1940
    %v2013 = vpop.f32.mrb[0].mxu0
    %v2014 = vadd.f32 0.0, %v2013
    %v2015 = vpop.f32.mrb[0].mxu0
    %2016 = vdwg.mxu0
    %v2018 = vsel %vm1225, %v1448, 0
    %v2021 = vsel %vm1225, %v1449, 0
    %2023 = vmatprep.subr.mxu0 0.0
    %2024 = vmatpush1.msra.mxu0 %v514
    %2025 = vmatprep.subr.mxu0 0.0
    %2026 = vmatpush1.msra.mxu0 %v516
    %2027 = vmatprep.subr.mxu0 0.0
    %2028 = vmatpush1.msra.mxu0 0.0
    %2029 = vmatprep.subr.mxu0 0.0
    %2030 = vmatpush1.msra.mxu0 0.0
    %2031 = vmatprep.subr.mxu0 0.0
    %2032 = vmatpush1.msra.mxu0 0.0
    %2033 = vmatprep.subr.mxu0 0.0
    %2034 = vmatpush1.msra.mxu0 0.0
    %2035 = vmatprep.subr.mxu0 0.0
    %2036 = vmatpush1.msra.mxu0 0.0
    %2037 = vmatprep.subr.mxu0 0.0
    %2038 = vmatpush1.msra.mxu0 0.0
    %2039 = vmatprep.subr.mxu0 0.0
    %2040 = vmatpush1.msra.mxu0 0.0
    %2041 = vmatprep.subr.mxu0 0.0
    %2042 = vmatpush1.msra.mxu0 0.0
    %2043 = vmatprep.subr.mxu0 0.0
    %2044 = vmatpush1.msra.mxu0 0.0
    %2045 = vmatprep.subr.mxu0 0.0
    %2046 = vmatpush1.msra.mxu0 0.0
    %2047 = vmatprep.subr.mxu0 0.0
    %2048 = vmatpush1.msra.mxu0 0.0
    %2049 = vmatprep.subr.mxu0 0.0
    %2050 = vmatpush1.msra.mxu0 0.0
    %2051 = vmatprep.subr.mxu0 0.0
    %2052 = vmatpush1.msra.mxu0 0.0
    %2053 = vmatprep.subr.mxu0 0.0
    %2054 = vmatpush1.msra.mxu0 0.0
    %2055 = vmatprep.subr.mxu0 0.0
    %2056 = vmatpush1.msra.mxu0 0.0
    %2057 = vmatprep.subr.mxu0 0.0
    %2058 = vmatpush1.msra.mxu0 0.0
    %2059 = vmatprep.subr.mxu0 0.0
    %2060 = vmatpush1.msra.mxu0 0.0
    %2061 = vmatprep.subr.mxu0 0.0
    %2062 = vmatpush1.msra.mxu0 0.0
    %2063 = vmatprep.subr.mxu0 0.0
    %2064 = vmatpush1.msra.mxu0 0.0
    %2065 = vmatprep.subr.mxu0 0.0
    %2066 = vmatpush1.msra.mxu0 0.0
    %2067 = vmatprep.subr.mxu0 0.0
    %2068 = vmatpush1.msra.mxu0 0.0
    %2069 = vmatprep.subr.mxu0 0.0
    %2070 = vmatpush1.msra.mxu0 0.0
    %2071 = vmatprep.subr.mxu0 0.0
    %2072 = vmatpush1.msra.mxu0 0.0
    %2073 = vmatprep.subr.mxu0 0.0
    %2074 = vmatpush1.msra.mxu0 0.0
    %2075 = vmatprep.subr.mxu0 0.0
    %2076 = vmatpush1.msra.mxu0 0.0
    %2077 = vmatprep.subr.mxu0 0.0
    %2078 = vmatpush1.msra.mxu0 0.0
    %2079 = vmatprep.subr.mxu0 0.0
    %2080 = vmatpush1.msra.mxu0 0.0
    %2081 = vmatprep.subr.mxu0 0.0
    %2082 = vmatpush1.msra.mxu0 0.0
    %2083 = vmatprep.subr.mxu0 0.0
    %2084 = vmatpush1.msra.mxu0 0.0
    %2085 = vmatprep.subr.mxu0 0.0
    %2086 = vmatpush1.msra.mxu0 0.0
    %2087 = vmatprep.mubr.f32.mxu0 0.0
    %2088 = vmatmul.mubr.f32.gmra.mrb[0].mxu0 %v2018
    %v2089 = vpop.f32.mrb[0].mxu0
    %v2090 = vadd.f32 0.0, %v2089
    %v2091 = vpop.f32.mrb[0].mxu0
    %2092 = vmatprep.mubr.f32.mxu0 0.0
    %2093 = vmatmul.mubr.f32.gmra.mrb[0].mxu0 %v2021
    %v2094 = vpop.f32.mrb[0].mxu0
    %v2095 = vadd.f32 0.0, %v2094
    %v2096 = vpop.f32.mrb[0].mxu0
    %2097 = vdwg.mxu0
    %2100 = vrot.lane.b32.xlu0 %v1604, 32
    %v2101 = vpop.permute.xlu0 %2100
    %2102 = vrot.lane.b32.xlu0 %v1609, 32
    %v2103 = vpop.permute.xlu0 %2102
    %2108 = vrot.lane.b32.xlu0 %v1685, 64
    %v2109 = vpop.permute.xlu0 %2108
    %2110 = vrot.lane.b32.xlu0 %v1690, 64
    %v2111 = vpop.permute.xlu0 %2110
    %2116 = vrot.lane.b32.xlu0 %v1766, 96
    %v2117 = vpop.permute.xlu0 %2116
    %2118 = vrot.lane.b32.xlu0 %v1771, 96
    %v2119 = vpop.permute.xlu0 %2118
    %v2122 = vsel %vm519, %v1523, %v2101
    %v2123 = vsel %vm519, %v1528, %v2103
    %vm2124 = vcmask 523264
    %v2125 = vsel %vm2124, %v2122, %v2109
    %v2126 = vsel %vm2124, %v2123, %v2111
    %vm2127 = vcmask 785408
    %v2128 = vsel %vm2127, %v2125, %v2117
    %v2129 = vsel %vm2127, %v2126, %v2119
    %2132 = vrot.lane.b32.xlu0 %v1928, 32
    %v2133 = vpop.permute.xlu0 %2132
    %2134 = vrot.lane.b32.xlu0 %v1933, 32
    %v2135 = vpop.permute.xlu0 %2134
    %2140 = vrot.lane.b32.xlu0 %v2009, 64
    %v2141 = vpop.permute.xlu0 %2140
    %2142 = vrot.lane.b32.xlu0 %v2014, 64
    %v2143 = vpop.permute.xlu0 %2142
    %2148 = vrot.lane.b32.xlu0 %v2090, 96
    %v2149 = vpop.permute.xlu0 %2148
    %2150 = vrot.lane.b32.xlu0 %v2095, 96
    %v2151 = vpop.permute.xlu0 %2150
    %v2154 = vsel %vm519, %v1847, %v2133
    %v2155 = vsel %vm519, %v1852, %v2135
    %v2156 = vsel %vm2124, %v2154, %v2141
    %v2157 = vsel %vm2124, %v2155, %v2143
    %v2158 = vsel %vm2127, %v2156, %v2149
    %v2159 = vsel %vm2127, %v2157, %v2151
    %v2160 = vld [vmem:[#allocation7] sm:$0xff]
    %v2161 = vld [vmem:[#allocation7 + $0x8] sm:$0xff]
    %v2162 = vld [vmem:[#allocation7 + $0x10] sm:$0xff]
    %v2163 = vld [vmem:[#allocation7 + $0x18] sm:$0xff]
    %v2164 = vld [vmem:[#allocation7 + $0x20] sm:$0xff]
    %v2165 = vld [vmem:[#allocation7 + $0x28] sm:$0xff]
    %v2166 = vld [vmem:[#allocation7 + $0x30] sm:$0xff]
    %v2167 = vld [vmem:[#allocation7 + $0x38] sm:$0xff]
    %v2168 = vld [vmem:[#allocation7 + $0x40] sm:$0xff]
    %v2169 = vld [vmem:[#allocation7 + $0x48] sm:$0xff]
    %v2170 = vld [vmem:[#allocation7 + $0x50] sm:$0xff]
    %v2171 = vld [vmem:[#allocation7 + $0x58] sm:$0xff]
    %v2172 = vld [vmem:[#allocation7 + $0x60] sm:$0xff]
    %v2173 = vld [vmem:[#allocation7 + $0x68] sm:$0xff]
    %v2174 = vld [vmem:[#allocation7 + $0x70] sm:$0xff]
    %v2175 = vld [vmem:[#allocation7 + $0x78] sm:$0xff]
    %v2176 = vld [vmem:[%s6] sm:$0x1]
    %v2178 = vlaneseq
    %v2179 = vshrl.u32 %v2178, 7
    %v2180 = vsub.s32 0, %v2179
    %v2181 = vrot.slane %v2176, %v2180
    %2183 = vmatprep.subr.mxu0 0.0
    %2184 = vmatpush1.msra.mxu0 %v2160
    %2185 = vmatprep.subr.mxu0 0.0
    %2186 = vmatpush1.msra.mxu0 %v2161
    %2187 = vmatprep.subr.mxu0 0.0
    %2188 = vmatpush1.msra.mxu0 %v2162
    %2189 = vmatprep.subr.mxu0 0.0
    %2190 = vmatpush1.msra.mxu0 %v2163
    %2191 = vmatprep.subr.mxu0 0.0
    %2192 = vmatpush1.msra.mxu0 %v2164
    %2193 = vmatprep.subr.mxu0 0.0
    %2194 = vmatpush1.msra.mxu0 %v2165
    %2195 = vmatprep.subr.mxu0 0.0
    %2196 = vmatpush1.msra.mxu0 %v2166
    %2197 = vmatprep.subr.mxu0 0.0
    %2198 = vmatpush1.msra.mxu0 %v2167
    %2199 = vmatprep.subr.mxu0 0.0
    %2200 = vmatpush1.msra.mxu0 %v2168
    %2201 = vmatprep.subr.mxu0 0.0
    %2202 = vmatpush1.msra.mxu0 %v2169
    %2203 = vmatprep.subr.mxu0 0.0
    %2204 = vmatpush1.msra.mxu0 %v2170
    %2205 = vmatprep.subr.mxu0 0.0
    %2206 = vmatpush1.msra.mxu0 %v2171
    %2207 = vmatprep.subr.mxu0 0.0
    %2208 = vmatpush1.msra.mxu0 %v2172
    %2209 = vmatprep.subr.mxu0 0.0
    %2210 = vmatpush1.msra.mxu0 %v2173
    %2211 = vmatprep.subr.mxu0 0.0
    %2212 = vmatpush1.msra.mxu0 %v2174
    %2213 = vmatprep.subr.mxu0 0.0
    %2214 = vmatpush1.msra.mxu0 %v2175
    %2215 = vmatprep.subr.mxu0 0.0
    %2216 = vmatpush1.msra.mxu0 0.0
    %2217 = vmatprep.subr.mxu0 0.0
    %2218 = vmatpush1.msra.mxu0 0.0
    %2219 = vmatprep.subr.mxu0 0.0
    %2220 = vmatpush1.msra.mxu0 0.0
    %2221 = vmatprep.subr.mxu0 0.0
    %2222 = vmatpush1.msra.mxu0 0.0
    %2223 = vmatprep.subr.mxu0 0.0
    %2224 = vmatpush1.msra.mxu0 0.0
    %2225 = vmatprep.subr.mxu0 0.0
    %2226 = vmatpush1.msra.mxu0 0.0
    %2227 = vmatprep.subr.mxu0 0.0
    %2228 = vmatpush1.msra.mxu0 0.0
    %2229 = vmatprep.subr.mxu0 0.0
    %2230 = vmatpush1.msra.mxu0 0.0
    %2231 = vmatprep.subr.mxu0 0.0
    %2232 = vmatpush1.msra.mxu0 0.0
    %2233 = vmatprep.subr.mxu0 0.0
    %2234 = vmatpush1.msra.mxu0 0.0
    %2235 = vmatprep.subr.mxu0 0.0
    %2236 = vmatpush1.msra.mxu0 0.0
    %2237 = vmatprep.subr.mxu0 0.0
    %2238 = vmatpush1.msra.mxu0 0.0
    %2239 = vmatprep.subr.mxu0 0.0
    %2240 = vmatpush1.msra.mxu0 0.0
    %2241 = vmatprep.subr.mxu0 0.0
    %2242 = vmatpush1.msra.mxu0 0.0
    %2243 = vmatprep.subr.mxu0 0.0
    %2244 = vmatpush1.msra.mxu0 0.0
    %2245 = vmatprep.subr.mxu0 0.0
    %2246 = vmatpush1.msra.mxu0 0.0
    %2247 = vmatprep.mubr.f32.mxu0 0.0
    %2248 = vmatmul.mubr.f32.gmra.mrb[0].mxu0 %v2128
    %v2249 = vpop.f32.mrb[0].mxu0
    %v2250 = vadd.f32 %v2181, %v2249
    %v2251 = vpop.f32.mrb[0].mxu0
    %2252 = vmatprep.mubr.f32.mxu0 0.0
    %2253 = vmatmul.mubr.f32.gmra.mrb[0].mxu0 %v2129
    %v2254 = vpop.f32.mrb[0].mxu0
    %v2255 = vadd.f32 %v2181, %v2254
    %v2256 = vpop.f32.mrb[0].mxu0
    %2257 = vmatprep.mubr.f32.mxu0 0.0
    %2258 = vmatmul.mubr.f32.gmra.mrb[0].mxu0 %v2158
    %v2259 = vpop.f32.mrb[0].mxu0
    %v2260 = vadd.f32 %v2181, %v2259
    %v2261 = vpop.f32.mrb[0].mxu0
    %2262 = vmatprep.mubr.f32.mxu0 0.0
    %2263 = vmatmul.mubr.f32.gmra.mrb[0].mxu0 %v2159
    %v2264 = vpop.f32.mrb[0].mxu0
    %v2265 = vadd.f32 %v2181, %v2264
    %v2266 = vpop.f32.mrb[0].mxu0
    %2267 = vdwg.mxu0
    %v2268 = vadd.f32 %v2250, %v113
    %v2269 = vadd.f32 %v2255, %v114
    %v2270 = vadd.f32 %v2260, %v115
    %v2271 = vadd.f32 %v2265, %v116
    %v2272 = vld [vmem:[%s7] sm:$0x1]
    %v2273 = vld [vmem:[%s8] sm:$0x1]
    %2274 = vadd.xlane.f32.xlu0 %v2268
    %v2275 = vpop.xlane.xlu0 %2274
    %2276 = vadd.xlane.f32.xlu0 %v2269
    %v2277 = vpop.xlane.xlu0 %2276
    %2278 = vadd.xlane.f32.xlu0 %v2270
    %v2279 = vpop.xlane.xlu0 %2278
    %2280 = vadd.xlane.f32.xlu0 %v2271
    %v2281 = vpop.xlane.xlu0 %2280
    %v2282 = vmul.f32 %v2275, %v127
    %v2283 = vmul.f32 %v2277, %v127
    %v2284 = vmul.f32 %v2279, %v127
    %v2285 = vmul.f32 %v2281, %v127
    %v2286 = vsub.f32 %v2268, %v2282
    %v2287 = vsub.f32 %v2269, %v2283
    %v2288 = vsub.f32 %v2270, %v2284
    %v2289 = vsub.f32 %v2271, %v2285
    %v2290 = vmul.f32 %v2286, %v2286
    %v2291 = vmul.f32 %v2287, %v2287
    %v2292 = vmul.f32 %v2288, %v2288
    %v2293 = vmul.f32 %v2289, %v2289
    %2294 = vadd.xlane.f32.xlu0 %v2290
    %v2295 = vpop.xlane.xlu0 %2294
    %2296 = vadd.xlane.f32.xlu0 %v2291
    %v2297 = vpop.xlane.xlu0 %2296
    %2298 = vadd.xlane.f32.xlu0 %v2292
    %v2299 = vpop.xlane.xlu0 %2298
    %2300 = vadd.xlane.f32.xlu0 %v2293
    %v2301 = vpop.xlane.xlu0 %2300
    %v2302 = vmul.f32 %v2295, %v127
    %v2303 = vmul.f32 %v2297, %v127
    %v2304 = vmul.f32 %v2299, %v127
    %v2305 = vmul.f32 %v2301, %v127
    %v2306 = vadd.f32 %v2302, 1e-05
    %v2307 = vadd.f32 %v2303, 1e-05
    %v2308 = vadd.f32 %v2304, 1e-05
    %v2309 = vadd.f32 %v2305, 1e-05
    %v2310 = vrsqrt.pop %v2306
    %v2311 = vrsqrt.pop %v2307
    %v2312 = vrsqrt.pop %v2308
    %v2313 = vrsqrt.pop %v2309
    %v2314 = vmul.f32 %v2286, %v2310
    %v2315 = vmul.f32 %v2287, %v2311
    %v2316 = vmul.f32 %v2288, %v2312
    %v2317 = vmul.f32 %v2289, %v2313
    %v2319 = vlaneseq
    %v2320 = vshrl.u32 %v2319, 7
    %v2321 = vsub.s32 0, %v2320
    %v2322 = vrot.slane %v2272, %v2321
    %v2324 = vmul.f32 %v2314, %v2322
    %v2325 = vmul.f32 %v2315, %v2322
    %v2326 = vmul.f32 %v2316, %v2322
    %v2327 = vmul.f32 %v2317, %v2322
    %v2329 = vlaneseq
    %v2330 = vshrl.u32 %v2329, 7
    %v2331 = vsub.s32 0, %v2330
    %v2332 = vrot.slane %v2273, %v2331
    %v2334 = vadd.f32 %v2324, %v2332
    %v2335 = vadd.f32 %v2325, %v2332
    %v2336 = vadd.f32 %v2326, %v2332
    %v2337 = vadd.f32 %v2327, %v2332
    %v2338 = vadd.s32 %v1201, 16
    %v2339 = vadd.s32 %v1201, 24
    %vm2340 = vcmp.eq.s32.totalorder %v1201, 0
    %vm2341 = vcmp.eq.s32.totalorder %v1202, 0
    %vm2342 = vcmp.eq.s32.totalorder %v2338, 0
    %vm2343 = vcmp.eq.s32.totalorder %v2339, 0
    %vm2344 = vcmp.eq.s32.totalorder %v1201, 16
    %vm2345 = vcmp.eq.s32.totalorder %v1202, 16
    %vm2346 = vcmp.eq.s32.totalorder %v2338, 16
    %vm2347 = vcmp.eq.s32.totalorder %v2339, 16
    %vm2348 = vmor %vm2340, %vm2344
    %vm2349 = vmor %vm2341, %vm2345
    %vm2350 = vmor %vm2342, %vm2346
    %vm2351 = vmor %vm2343, %vm2347
    %vm2352 = vcmp.eq.s32.totalorder %v1201, 15
    %vm2353 = vcmp.eq.s32.totalorder %v1202, 15
    %vm2354 = vcmp.eq.s32.totalorder %v2338, 15
    %vm2355 = vcmp.eq.s32.totalorder %v2339, 15
    %vm2356 = vcmp.eq.s32.totalorder %v1201, 31
    %vm2357 = vcmp.eq.s32.totalorder %v1202, 31
    %vm2358 = vcmp.eq.s32.totalorder %v2338, 31
    %vm2359 = vcmp.eq.s32.totalorder %v2339, 31
    %vm2360 = vmor %vm2352, %vm2356
    %vm2361 = vmor %vm2353, %vm2357
    %vm2362 = vmor %vm2354, %vm2358
    %vm2363 = vmor %vm2355, %vm2359
    %vm2364 = vmxor %vm2348, 1
    %vm2365 = vmxor %vm2349, 1
    %vm2366 = vmxor %vm2350, 1
    %vm2367 = vmxor %vm2351, 1
    %vm2368 = vmxor %vm2360, 1
    %vm2369 = vmxor %vm2361, 1
    %vm2370 = vmxor %vm2362, 1
    %vm2371 = vmxor %vm2363, 1
    %vm2376 = vcmask 1040384
    %v2377 = vrot.slane %v2334, 7
    %v2378 = vrot.slane %v2335, 7
    %v2379 = vsel %vm2376, %v2377, %v2378
    %v2380 = vrot.slane %v2336, 7
    %v2381 = vsel %vm2376, %v2378, %v2380
    %v2382 = vrot.slane %v2337, 7
    %v2383 = vsel %vm2376, %v2380, %v2382
    %v2388 = vsel %vm2376, 0.0, %v2377
    %vm2389 = vcmask 1046528
    %v2390 = vrot.slane %v2334, 1
    %v2391 = vrot.slane %v2335, 1
    %v2392 = vsel %vm2389, %v2390, %v2391
    %v2393 = vrot.slane %v2336, 1
    %v2394 = vsel %vm2389, %v2391, %v2393
    %v2395 = vrot.slane %v2337, 1
    %v2396 = vsel %vm2389, %v2393, %v2395
    %v2401 = vsel %vm2389, %v2395, 0.0
    %v2402 = vsel %vm2364, 1, 0
    %v2403 = vsel %vm2365, 1, 0
    %v2404 = vsel %vm2366, 1, 0
    %v2405 = vsel %vm2367, 1, 0
    %vm2406 = vcmp.eq.s32.totalorder %v2402, 1
    %vm2407 = vcmp.eq.s32.totalorder %v2403, 1
    %vm2408 = vcmp.eq.s32.totalorder %v2404, 1
    %vm2409 = vcmp.eq.s32.totalorder %v2405, 1
    %v2410 = vsel %vm2406, %v2388, 0.0
    %v2411 = vsel %vm2407, %v2379, 0.0
    %v2412 = vsel %vm2408, %v2381, 0.0
    %v2413 = vsel %vm2409, %v2383, 0.0
    %v2414 = vsel %vm2368, 1, 0
    %v2415 = vsel %vm2369, 1, 0
    %v2416 = vsel %vm2370, 1, 0
    %v2417 = vsel %vm2371, 1, 0
    %vm2418 = vcmp.eq.s32.totalorder %v2414, 1
    %vm2419 = vcmp.eq.s32.totalorder %v2415, 1
    %vm2420 = vcmp.eq.s32.totalorder %v2416, 1
    %vm2421 = vcmp.eq.s32.totalorder %v2417, 1
    %v2422 = vsel %vm2418, %v2392, 0.0
    %v2423 = vsel %vm2419, %v2394, 0.0
    %v2424 = vsel %vm2420, %v2396, 0.0
    %v2425 = vsel %vm2421, %v2401, 0.0
    %v2426 = vld [vmem:[#allocation8] sm:$0xff]
    %v2427 = vld [vmem:[#allocation8 + $0x8] sm:$0xff]
    %v2428 = vld [vmem:[#allocation8 + $0x10] sm:$0xff]
    %v2429 = vld [vmem:[#allocation8 + $0x18] sm:$0xff]
    %v2430 = vld [vmem:[#allocation8 + $0x20] sm:$0xff]
    %v2431 = vld [vmem:[#allocation8 + $0x28] sm:$0xff]
    %v2432 = vld [vmem:[#allocation8 + $0x30] sm:$0xff]
    %v2433 = vld [vmem:[#allocation8 + $0x38] sm:$0xff]
    %v2434 = vld [vmem:[#allocation8 + $0x40] sm:$0xff]
    %v2435 = vld [vmem:[#allocation8 + $0x48] sm:$0xff]
    %v2436 = vld [vmem:[#allocation8 + $0x50] sm:$0xff]
    %v2437 = vld [vmem:[#allocation8 + $0x58] sm:$0xff]
    %v2438 = vld [vmem:[#allocation8 + $0x60] sm:$0xff]
    %v2439 = vld [vmem:[#allocation8 + $0x68] sm:$0xff]
    %v2440 = vld [vmem:[#allocation8 + $0x70] sm:$0xff]
    %v2441 = vld [vmem:[#allocation8 + $0x78] sm:$0xff]
    %v2442 = vld [vmem:[#allocation8 + $0x80] sm:$0xff]
    %v2443 = vld [vmem:[#allocation8 + $0x88] sm:$0xff]
    %v2444 = vld [vmem:[#allocation8 + $0x90] sm:$0xff]
    %v2445 = vld [vmem:[#allocation8 + $0x98] sm:$0xff]
    %v2446 = vld [vmem:[#allocation8 + $0xa0] sm:$0xff]
    %v2447 = vld [vmem:[#allocation8 + $0xa8] sm:$0xff]
    %v2448 = vld [vmem:[#allocation8 + $0xb0] sm:$0xff]
    %v2449 = vld [vmem:[#allocation8 + $0xb8] sm:$0xff]
    %v2450 = vld [vmem:[#allocation8 + $0xc0] sm:$0xff]
    %v2451 = vld [vmem:[#allocation8 + $0xc8] sm:$0xff]
    %v2452 = vld [vmem:[#allocation8 + $0xd0] sm:$0xff]
    %v2453 = vld [vmem:[#allocation8 + $0xd8] sm:$0xff]
    %v2454 = vld [vmem:[#allocation8 + $0xe0] sm:$0xff]
    %v2455 = vld [vmem:[#allocation8 + $0xe8] sm:$0xff]
    %v2456 = vld [vmem:[#allocation8 + $0xf0] sm:$0xff]
    %v2457 = vld [vmem:[#allocation8 + $0xf8] sm:$0xff]
    %v2458 = vld [vmem:[#allocation8 + $0x100] sm:$0xff]
    %v2459 = vld [vmem:[#allocation8 + $0x108] sm:$0xff]
    %v2460 = vld [vmem:[#allocation8 + $0x110] sm:$0xff]
    %v2461 = vld [vmem:[#allocation8 + $0x118] sm:$0xff]
    %v2462 = vld [vmem:[#allocation8 + $0x120] sm:$0xff]
    %v2463 = vld [vmem:[#allocation8 + $0x128] sm:$0xff]
    %v2464 = vld [vmem:[#allocation8 + $0x130] sm:$0xff]
    %v2465 = vld [vmem:[#allocation8 + $0x138] sm:$0xff]
    %v2466 = vld [vmem:[#allocation8 + $0x140] sm:$0xff]
    %v2467 = vld [vmem:[#allocation8 + $0x148] sm:$0xff]
    %v2468 = vld [vmem:[#allocation8 + $0x150] sm:$0xff]
    %v2469 = vld [vmem:[#allocation8 + $0x158] sm:$0xff]
    %v2470 = vld [vmem:[#allocation8 + $0x160] sm:$0xff]
    %v2471 = vld [vmem:[#allocation8 + $0x168] sm:$0xff]
    %v2472 = vld [vmem:[#allocation8 + $0x170] sm:$0xff]
    %v2473 = vld [vmem:[#allocation8 + $0x178] sm:$0xff]
    %v2474 = vld [vmem:[%s10] sm:$0x1]
    %v2476 = vlaneseq
    %v2477 = vshrl.u32 %v2476, 7
    %v2478 = vsub.s32 0, %v2477
    %v2479 = vrot.slane %v2474, %v2478
    %2481 = vmatprep.subr.mxu0 0.0
    %2482 = vmatpush1.msra.mxu0 %v2426
    %2483 = vmatprep.subr.mxu0 0.0
    %2484 = vmatpush1.msra.mxu0 %v2427
    %2485 = vmatprep.subr.mxu0 0.0
    %2486 = vmatpush1.msra.mxu0 %v2428
    %2487 = vmatprep.subr.mxu0 0.0
    %2488 = vmatpush1.msra.mxu0 %v2429
    %2489 = vmatprep.subr.mxu0 0.0
    %2490 = vmatpush1.msra.mxu0 %v2430
    %2491 = vmatprep.subr.mxu0 0.0
    %2492 = vmatpush1.msra.mxu0 %v2431
    %2493 = vmatprep.subr.mxu0 0.0
    %2494 = vmatpush1.msra.mxu0 %v2432
    %2495 = vmatprep.subr.mxu0 0.0
    %2496 = vmatpush1.msra.mxu0 %v2433
    %2497 = vmatprep.subr.mxu0 0.0
    %2498 = vmatpush1.msra.mxu0 %v2434
    %2499 = vmatprep.subr.mxu0 0.0
    %2500 = vmatpush1.msra.mxu0 %v2435
    %2501 = vmatprep.subr.mxu0 0.0
    %2502 = vmatpush1.msra.mxu0 %v2436
    %2503 = vmatprep.subr.mxu0 0.0
    %2504 = vmatpush1.msra.mxu0 %v2437
    %2505 = vmatprep.subr.mxu0 0.0
    %2506 = vmatpush1.msra.mxu0 %v2438
    %2507 = vmatprep.subr.mxu0 0.0
    %2508 = vmatpush1.msra.mxu0 %v2439
    %2509 = vmatprep.subr.mxu0 0.0
    %2510 = vmatpush1.msra.mxu0 %v2440
    %2511 = vmatprep.subr.mxu0 0.0
    %2512 = vmatpush1.msra.mxu0 %v2441
    %2513 = vmatprep.subr.mxu0 0.0
    %2514 = vmatpush1.msra.mxu0 %v2442
    %2515 = vmatprep.subr.mxu0 0.0
    %2516 = vmatpush1.msra.mxu0 %v2443
    %2517 = vmatprep.subr.mxu0 0.0
    %2518 = vmatpush1.msra.mxu0 %v2444
    %2519 = vmatprep.subr.mxu0 0.0
    %2520 = vmatpush1.msra.mxu0 %v2445
    %2521 = vmatprep.subr.mxu0 0.0
    %2522 = vmatpush1.msra.mxu0 %v2446
    %2523 = vmatprep.subr.mxu0 0.0
    %2524 = vmatpush1.msra.mxu0 %v2447
    %2525 = vmatprep.subr.mxu0 0.0
    %2526 = vmatpush1.msra.mxu0 %v2448
    %2527 = vmatprep.subr.mxu0 0.0
    %2528 = vmatpush1.msra.mxu0 %v2449
    %2529 = vmatprep.subr.mxu0 0.0
    %2530 = vmatpush1.msra.mxu0 %v2450
    %2531 = vmatprep.subr.mxu0 0.0
    %2532 = vmatpush1.msra.mxu0 %v2451
    %2533 = vmatprep.subr.mxu0 0.0
    %2534 = vmatpush1.msra.mxu0 %v2452
    %2535 = vmatprep.subr.mxu0 0.0
    %2536 = vmatpush1.msra.mxu0 %v2453
    %2537 = vmatprep.subr.mxu0 0.0
    %2538 = vmatpush1.msra.mxu0 %v2454
    %2539 = vmatprep.subr.mxu0 0.0
    %2540 = vmatpush1.msra.mxu0 %v2455
    %2541 = vmatprep.subr.mxu0 0.0
    %2542 = vmatpush1.msra.mxu0 %v2456
    %2543 = vmatprep.subr.mxu0 0.0
    %2544 = vmatpush1.msra.mxu0 %v2457
    %2545 = vmatprep.mubr.f32.mxu0 %v2334
    %2546 = vmatmul.mubr.f32.gmra.mrb[0].mxu0 %v2410
    %v2547 = vpop.f32.mrb[0].mxu0
    %v2548 = vadd.f32 %v2479, %v2547
    %v2549 = vpop.f32.mrb[0].mxu0
    %2550 = vmatprep.mubr.f32.mxu0 %v2335
    %2551 = vmatmul.mubr.f32.gmra.mrb[0].mxu0 %v2411
    %v2552 = vpop.f32.mrb[0].mxu0
    %v2553 = vadd.f32 %v2479, %v2552
    %v2554 = vpop.f32.mrb[0].mxu0
    %2555 = vmatprep.mubr.f32.mxu0 %v2336
    %2556 = vmatmul.mubr.f32.gmra.mrb[0].mxu0 %v2412
    %v2557 = vpop.f32.mrb[0].mxu0
    %v2558 = vadd.f32 %v2479, %v2557
    %v2559 = vpop.f32.mrb[0].mxu0
    %2560 = vmatprep.mubr.f32.mxu0 %v2337
    %2561 = vmatmul.mubr.f32.gmra.mrb[0].mxu0 %v2413
    %v2562 = vpop.f32.mrb[0].mxu0
    %v2563 = vadd.f32 %v2479, %v2562
    %v2564 = vpop.f32.mrb[0].mxu0
    %2565 = vdwg.mxu0
    %2566 = vmatprep.subr.mxu0 0.0
    %2567 = vmatpush1.msra.mxu0 %v2458
    %2568 = vmatprep.subr.mxu0 0.0
    %2569 = vmatpush1.msra.mxu0 %v2459
    %2570 = vmatprep.subr.mxu0 0.0
    %2571 = vmatpush1.msra.mxu0 %v2460
    %2572 = vmatprep.subr.mxu0 0.0
    %2573 = vmatpush1.msra.mxu0 %v2461
    %2574 = vmatprep.subr.mxu0 0.0
    %2575 = vmatpush1.msra.mxu0 %v2462
    %2576 = vmatprep.subr.mxu0 0.0
    %2577 = vmatpush1.msra.mxu0 %v2463
    %2578 = vmatprep.subr.mxu0 0.0
    %2579 = vmatpush1.msra.mxu0 %v2464
    %2580 = vmatprep.subr.mxu0 0.0
    %2581 = vmatpush1.msra.mxu0 %v2465
    %2582 = vmatprep.subr.mxu0 0.0
    %2583 = vmatpush1.msra.mxu0 %v2466
    %2584 = vmatprep.subr.mxu0 0.0
    %2585 = vmatpush1.msra.mxu0 %v2467
    %2586 = vmatprep.subr.mxu0 0.0
    %2587 = vmatpush1.msra.mxu0 %v2468
    %2588 = vmatprep.subr.mxu0 0.0
    %2589 = vmatpush1.msra.mxu0 %v2469
    %2590 = vmatprep.subr.mxu0 0.0
    %2591 = vmatpush1.msra.mxu0 %v2470
    %2592 = vmatprep.subr.mxu0 0.0
    %2593 = vmatpush1.msra.mxu0 %v2471
    %2594 = vmatprep.subr.mxu0 0.0
    %2595 = vmatpush1.msra.mxu0 %v2472
    %2596 = vmatprep.subr.mxu0 0.0
    %2597 = vmatpush1.msra.mxu0 %v2473
    %2598 = vmatprep.subr.mxu0 0.0
    %2599 = vmatpush1.msra.mxu0 0.0
    %2600 = vmatprep.subr.mxu0 0.0
    %2601 = vmatpush1.msra.mxu0 0.0
    %2602 = vmatprep.subr.mxu0 0.0
    %2603 = vmatpush1.msra.mxu0 0.0
    %2604 = vmatprep.subr.mxu0 0.0
    %2605 = vmatpush1.msra.mxu0 0.0
    %2606 = vmatprep.subr.mxu0 0.0
    %2607 = vmatpush1.msra.mxu0 0.0
    %2608 = vmatprep.subr.mxu0 0.0
    %2609 = vmatpush1.msra.mxu0 0.0
    %2610 = vmatprep.subr.mxu0 0.0
    %2611 = vmatpush1.msra.mxu0 0.0
    %2612 = vmatprep.subr.mxu0 0.0
    %2613 = vmatpush1.msra.mxu0 0.0
    %2614 = vmatprep.subr.mxu0 0.0
    %2615 = vmatpush1.msra.mxu0 0.0
    %2616 = vmatprep.subr.mxu0 0.0
    %2617 = vmatpush1.msra.mxu0 0.0
    %2618 = vmatprep.subr.mxu0 0.0
    %2619 = vmatpush1.msra.mxu0 0.0
    %2620 = vmatprep.subr.mxu0 0.0
    %2621 = vmatpush1.msra.mxu0 0.0
    %2622 = vmatprep.subr.mxu0 0.0
    %2623 = vmatpush1.msra.mxu0 0.0
    %2624 = vmatprep.subr.mxu0 0.0
    %2625 = vmatpush1.msra.mxu0 0.0
    %2626 = vmatprep.subr.mxu0 0.0
    %2627 = vmatpush1.msra.mxu0 0.0
    %2628 = vmatprep.subr.mxu0 0.0
    %2629 = vmatpush1.msra.mxu0 0.0
    %2630 = vmatprep.mubr.f32.mxu0 0.0
    %2631 = vmatmul.mubr.f32.gmra.mrb[0].mxu0 %v2422
    %v2632 = vpop.f32.mrb[0].mxu0
    %v2633 = vadd.f32 %v2548, %v2632
    %v2634 = vpop.f32.mrb[0].mxu0
    %2635 = vmatprep.mubr.f32.mxu0 0.0
    %2636 = vmatmul.mubr.f32.gmra.mrb[0].mxu0 %v2423
    %v2637 = vpop.f32.mrb[0].mxu0
    %v2638 = vadd.f32 %v2553, %v2637
    %v2639 = vpop.f32.mrb[0].mxu0
    %2640 = vmatprep.mubr.f32.mxu0 0.0
    %2641 = vmatmul.mubr.f32.gmra.mrb[0].mxu0 %v2424
    %v2642 = vpop.f32.mrb[0].mxu0
    %v2643 = vadd.f32 %v2558, %v2642
    %v2644 = vpop.f32.mrb[0].mxu0
    %2645 = vmatprep.mubr.f32.mxu0 0.0
    %2646 = vmatmul.mubr.f32.gmra.mrb[0].mxu0 %v2425
    %v2647 = vpop.f32.mrb[0].mxu0
    %v2648 = vadd.f32 %v2563, %v2647
    %v2649 = vpop.f32.mrb[0].mxu0
    %2650 = vdwg.mxu0
    %v2651 = vmul.f32 %v2633, 0.5
    %v2652 = vmul.f32 %v2638, 0.5
    %v2653 = vmul.f32 %v2643, 0.5
    %v2654 = vmul.f32 %v2648, 0.5
    %v2655 = vmul.f32 %v2633, 0.70710677
    %v2656 = vmul.f32 %v2638, 0.70710677
    %v2657 = vmul.f32 %v2643, 0.70710677
    %v2658 = vmul.f32 %v2648, 0.70710677
    %vm2659 = vcmp.ge.f32.partialorder %v2655, 0.0
    %vm2660 = vcmp.ge.f32.partialorder %v2656, 0.0
    %vm2661 = vcmp.ge.f32.partialorder %v2657, 0.0
    %vm2662 = vcmp.ge.f32.partialorder %v2658, 0.0
    %v2663 = vsel %vm2659, 1.0, -1.0
    %v2664 = vsel %vm2660, 1.0, -1.0
    %v2665 = vsel %vm2661, 1.0, -1.0
    %v2666 = vsel %vm2662, 1.0, -1.0
    %v2667 = vand.u32 2147483647, %v2655
    %v2668 = vand.u32 2147483647, %v2656
    %v2669 = vand.u32 2147483647, %v2657
    %v2670 = vand.u32 2147483647, %v2658
    %v2671 = vmul.f32 %v2667, 0.3275911
    %v2672 = vmul.f32 %v2668, 0.3275911
    %v2673 = vmul.f32 %v2669, 0.3275911
    %v2674 = vmul.f32 %v2670, 0.3275911
    %v2675 = vadd.f32 %v2671, 1.0
    %v2676 = vadd.f32 %v2672, 1.0
    %v2677 = vadd.f32 %v2673, 1.0
    %v2678 = vadd.f32 %v2674, 1.0
    %v2679 = vrcp.pop %v2675
    %v2680 = vrcp.pop %v2676
    %v2681 = vrcp.pop %v2677
    %v2682 = vrcp.pop %v2678
    %v2683 = vmul.f32 %v2675, %v2679
    %v2684 = vmul.f32 %v2676, %v2680
    %v2685 = vmul.f32 %v2677, %v2681
    %v2686 = vmul.f32 %v2678, %v2682
    %v2687 = vsub.f32 2.0, %v2683
    %v2688 = vsub.f32 2.0, %v2684
    %v2689 = vsub.f32 2.0, %v2685
    %v2690 = vsub.f32 2.0, %v2686
    %v2691 = vmul.f32 %v2679, %v2687
    %v2692 = vmul.f32 %v2680, %v2688
    %v2693 = vmul.f32 %v2681, %v2689
    %v2694 = vmul.f32 %v2682, %v2690
    %v2695 = vmul.f32 %v2691, 1.0614054
    %v2696 = vmul.f32 %v2692, 1.0614054
    %v2697 = vmul.f32 %v2693, 1.0614054
    %v2698 = vmul.f32 %v2694, 1.0614054
    %v2699 = vadd.f32 %v2695, -1.4531521
    %v2700 = vadd.f32 %v2696, -1.4531521
    %v2701 = vadd.f32 %v2697, -1.4531521
    %v2702 = vadd.f32 %v2698, -1.4531521
    %v2703 = vmul.f32 %v2699, %v2691
    %v2704 = vmul.f32 %v2700, %v2692
    %v2705 = vmul.f32 %v2701, %v2693
    %v2706 = vmul.f32 %v2702, %v2694
    %v2707 = vadd.f32 %v2703, 1.4214138
    %v2708 = vadd.f32 %v2704, 1.4214138
    %v2709 = vadd.f32 %v2705, 1.4214138
    %v2710 = vadd.f32 %v2706, 1.4214138
    %v2711 = vmul.f32 %v2707, %v2691
    %v2712 = vmul.f32 %v2708, %v2692
    %v2713 = vmul.f32 %v2709, %v2693
    %v2714 = vmul.f32 %v2710, %v2694
    %v2715 = vadd.f32 %v2711, -0.28449672
    %v2716 = vadd.f32 %v2712, -0.28449672
    %v2717 = vadd.f32 %v2713, -0.28449672
    %v2718 = vadd.f32 %v2714, -0.28449672
    %v2719 = vmul.f32 %v2715, %v2691
    %v2720 = vmul.f32 %v2716, %v2692
    %v2721 = vmul.f32 %v2717, %v2693
    %v2722 = vmul.f32 %v2718, %v2694
    %v2723 = vadd.f32 %v2719, 0.2548296
    %v2724 = vadd.f32 %v2720, 0.2548296
    %v2725 = vadd.f32 %v2721, 0.2548296
    %v2726 = vadd.f32 %v2722, 0.2548296
    %v2727 = vmul.f32 %v2723, %v2691
    %v2728 = vmul.f32 %v2724, %v2692
    %v2729 = vmul.f32 %v2725, %v2693
    %v2730 = vmul.f32 %v2726, %v2694
    %v2731 = vsub.f32 0.0, %v2667
    %v2732 = vsub.f32 0.0, %v2668
    %v2733 = vsub.f32 0.0, %v2669
    %v2734 = vsub.f32 0.0, %v2670
    %v2735 = vmul.f32 %v2731, %v2667
    %v2736 = vmul.f32 %v2732, %v2668
    %v2737 = vmul.f32 %v2733, %v2669
    %v2738 = vmul.f32 %v2734, %v2670
    %v2739 = vmul.f32 %v2735, 1.442695
    %v2740 = vpow.pop %v2739
    %v2741 = vmul.f32 %v2736, 1.442695
    %v2742 = vpow.pop %v2741
    %v2743 = vmul.f32 %v2737, 1.442695
    %v2744 = vpow.pop %v2743
    %v2745 = vmul.f32 %v2738, 1.442695
    %v2746 = vpow.pop %v2745
    %v2747 = vmul.f32 %v2727, %v2740
    %v2748 = vmul.f32 %v2728, %v2742
    %v2749 = vmul.f32 %v2729, %v2744
    %v2750 = vmul.f32 %v2730, %v2746
    %v2751 = vsub.f32 1.0, %v2747
    %v2752 = vsub.f32 1.0, %v2748
    %v2753 = vsub.f32 1.0, %v2749
    %v2754 = vsub.f32 1.0, %v2750
    %v2755 = vmul.f32 %v2663, %v2751
    %v2756 = vmul.f32 %v2664, %v2752
    %v2757 = vmul.f32 %v2665, %v2753
    %v2758 = vmul.f32 %v2666, %v2754
    %v2759 = vadd.f32 %v2755, 1.0
    %v2760 = vadd.f32 %v2756, 1.0
    %v2761 = vadd.f32 %v2757, 1.0
    %v2762 = vadd.f32 %v2758, 1.0
    %v2763 = vmul.f32 %v2651, %v2759
    %v2764 = vmul.f32 %v2652, %v2760
    %v2765 = vmul.f32 %v2653, %v2761
    %v2766 = vmul.f32 %v2654, %v2762
    %v2771 = vrot.slane %v2763, 7
    %v2772 = vrot.slane %v2764, 7
    %v2773 = vsel %vm2376, %v2771, %v2772
    %v2774 = vrot.slane %v2765, 7
    %v2775 = vsel %vm2376, %v2772, %v2774
    %v2776 = vrot.slane %v2766, 7
    %v2777 = vsel %vm2376, %v2774, %v2776
    %v2782 = vsel %vm2376, 0.0, %v2771
    %v2783 = vrot.slane %v2763, 1
    %v2784 = vrot.slane %v2764, 1
    %v2785 = vsel %vm2389, %v2783, %v2784
    %v2786 = vrot.slane %v2765, 1
    %v2787 = vsel %vm2389, %v2784, %v2786
    %v2788 = vrot.slane %v2766, 1
    %v2789 = vsel %vm2389, %v2786, %v2788
    %v2794 = vsel %vm2389, %v2788, 0.0
    %v2795 = vsel %vm2406, %v2782, 0.0
    %v2796 = vsel %vm2407, %v2773, 0.0
    %v2797 = vsel %vm2408, %v2775, 0.0
    %v2798 = vsel %vm2409, %v2777, 0.0
    %v2799 = vsel %vm2418, %v2785, 0.0
    %v2800 = vsel %vm2419, %v2787, 0.0
    %v2801 = vsel %vm2420, %v2789, 0.0
    %v2802 = vsel %vm2421, %v2794, 0.0
    %v2803 = vld [vmem:[#allocation10] sm:$0xff]
    %v2804 = vld [vmem:[#allocation10 + $0x8] sm:$0xff]
    %v2805 = vld [vmem:[#allocation10 + $0x10] sm:$0xff]
    %v2806 = vld [vmem:[#allocation10 + $0x18] sm:$0xff]
    %v2807 = vld [vmem:[#allocation10 + $0x20] sm:$0xff]
    %v2808 = vld [vmem:[#allocation10 + $0x28] sm:$0xff]
    %v2809 = vld [vmem:[#allocation10 + $0x30] sm:$0xff]
    %v2810 = vld [vmem:[#allocation10 + $0x38] sm:$0xff]
    %v2811 = vld [vmem:[#allocation10 + $0x40] sm:$0xff]
    %v2812 = vld [vmem:[#allocation10 + $0x48] sm:$0xff]
    %v2813 = vld [vmem:[#allocation10 + $0x50] sm:$0xff]
    %v2814 = vld [vmem:[#allocation10 + $0x58] sm:$0xff]
    %v2815 = vld [vmem:[#allocation10 + $0x60] sm:$0xff]
    %v2816 = vld [vmem:[#allocation10 + $0x68] sm:$0xff]
    %v2817 = vld [vmem:[#allocation10 + $0x70] sm:$0xff]
    %v2818 = vld [vmem:[#allocation10 + $0x78] sm:$0xff]
    %v2819 = vld [vmem:[#allocation10 + $0x80] sm:$0xff]
    %v2820 = vld [vmem:[#allocation10 + $0x88] sm:$0xff]
    %v2821 = vld [vmem:[#allocation10 + $0x90] sm:$0xff]
    %v2822 = vld [vmem:[#allocation10 + $0x98] sm:$0xff]
    %v2823 = vld [vmem:[#allocation10 + $0xa0] sm:$0xff]
    %v2824 = vld [vmem:[#allocation10 + $0xa8] sm:$0xff]
    %v2825 = vld [vmem:[#allocation10 + $0xb0] sm:$0xff]
    %v2826 = vld [vmem:[#allocation10 + $0xb8] sm:$0xff]
    %v2827 = vld [vmem:[#allocation10 + $0xc0] sm:$0xff]
    %v2828 = vld [vmem:[#allocation10 + $0xc8] sm:$0xff]
    %v2829 = vld [vmem:[#allocation10 + $0xd0] sm:$0xff]
    %v2830 = vld [vmem:[#allocation10 + $0xd8] sm:$0xff]
    %v2831 = vld [vmem:[#allocation10 + $0xe0] sm:$0xff]
    %v2832 = vld [vmem:[#allocation10 + $0xe8] sm:$0xff]
    %v2833 = vld [vmem:[#allocation10 + $0xf0] sm:$0xff]
    %v2834 = vld [vmem:[#allocation10 + $0xf8] sm:$0xff]
    %v2835 = vld [vmem:[#allocation10 + $0x100] sm:$0xff]
    %v2836 = vld [vmem:[#allocation10 + $0x108] sm:$0xff]
    %v2837 = vld [vmem:[#allocation10 + $0x110] sm:$0xff]
    %v2838 = vld [vmem:[#allocation10 + $0x118] sm:$0xff]
    %v2839 = vld [vmem:[#allocation10 + $0x120] sm:$0xff]
    %v2840 = vld [vmem:[#allocation10 + $0x128] sm:$0xff]
    %v2841 = vld [vmem:[#allocation10 + $0x130] sm:$0xff]
    %v2842 = vld [vmem:[#allocation10 + $0x138] sm:$0xff]
    %v2843 = vld [vmem:[#allocation10 + $0x140] sm:$0xff]
    %v2844 = vld [vmem:[#allocation10 + $0x148] sm:$0xff]
    %v2845 = vld [vmem:[#allocation10 + $0x150] sm:$0xff]
    %v2846 = vld [vmem:[#allocation10 + $0x158] sm:$0xff]
    %v2847 = vld [vmem:[#allocation10 + $0x160] sm:$0xff]
    %v2848 = vld [vmem:[#allocation10 + $0x168] sm:$0xff]
    %v2849 = vld [vmem:[#allocation10 + $0x170] sm:$0xff]
    %v2850 = vld [vmem:[#allocation10 + $0x178] sm:$0xff]
    %v2851 = vld [vmem:[%s12] sm:$0x1]
    %v2853 = vlaneseq
    %v2854 = vshrl.u32 %v2853, 7
    %v2855 = vsub.s32 0, %v2854
    %v2856 = vrot.slane %v2851, %v2855
    %2858 = vmatprep.subr.mxu0 0.0
    %2859 = vmatpush1.msra.mxu0 %v2803
    %2860 = vmatprep.subr.mxu0 0.0
    %2861 = vmatpush1.msra.mxu0 %v2804
    %2862 = vmatprep.subr.mxu0 0.0
    %2863 = vmatpush1.msra.mxu0 %v2805
    %2864 = vmatprep.subr.mxu0 0.0
    %2865 = vmatpush1.msra.mxu0 %v2806
    %2866 = vmatprep.subr.mxu0 0.0
    %2867 = vmatpush1.msra.mxu0 %v2807
    %2868 = vmatprep.subr.mxu0 0.0
    %2869 = vmatpush1.msra.mxu0 %v2808
    %2870 = vmatprep.subr.mxu0 0.0
    %2871 = vmatpush1.msra.mxu0 %v2809
    %2872 = vmatprep.subr.mxu0 0.0
    %2873 = vmatpush1.msra.mxu0 %v2810
    %2874 = vmatprep.subr.mxu0 0.0
    %2875 = vmatpush1.msra.mxu0 %v2811
    %2876 = vmatprep.subr.mxu0 0.0
    %2877 = vmatpush1.msra.mxu0 %v2812
    %2878 = vmatprep.subr.mxu0 0.0
    %2879 = vmatpush1.msra.mxu0 %v2813
    %2880 = vmatprep.subr.mxu0 0.0
    %2881 = vmatpush1.msra.mxu0 %v2814
    %2882 = vmatprep.subr.mxu0 0.0
    %2883 = vmatpush1.msra.mxu0 %v2815
    %2884 = vmatprep.subr.mxu0 0.0
    %2885 = vmatpush1.msra.mxu0 %v2816
    %2886 = vmatprep.subr.mxu0 0.0
    %2887 = vmatpush1.msra.mxu0 %v2817
    %2888 = vmatprep.subr.mxu0 0.0
    %2889 = vmatpush1.msra.mxu0 %v2818
    %2890 = vmatprep.subr.mxu0 0.0
    %2891 = vmatpush1.msra.mxu0 %v2819
    %2892 = vmatprep.subr.mxu0 0.0
    %2893 = vmatpush1.msra.mxu0 %v2820
    %2894 = vmatprep.subr.mxu0 0.0
    %2895 = vmatpush1.msra.mxu0 %v2821
    %2896 = vmatprep.subr.mxu0 0.0
    %2897 = vmatpush1.msra.mxu0 %v2822
    %2898 = vmatprep.subr.mxu0 0.0
    %2899 = vmatpush1.msra.mxu0 %v2823
    %2900 = vmatprep.subr.mxu0 0.0
    %2901 = vmatpush1.msra.mxu0 %v2824
    %2902 = vmatprep.subr.mxu0 0.0
    %2903 = vmatpush1.msra.mxu0 %v2825
    %2904 = vmatprep.subr.mxu0 0.0
    %2905 = vmatpush1.msra.mxu0 %v2826
    %2906 = vmatprep.subr.mxu0 0.0
    %2907 = vmatpush1.msra.mxu0 %v2827
    %2908 = vmatprep.subr.mxu0 0.0
    %2909 = vmatpush1.msra.mxu0 %v2828
    %2910 = vmatprep.subr.mxu0 0.0
    %2911 = vmatpush1.msra.mxu0 %v2829
    %2912 = vmatprep.subr.mxu0 0.0
    %2913 = vmatpush1.msra.mxu0 %v2830
    %2914 = vmatprep.subr.mxu0 0.0
    %2915 = vmatpush1.msra.mxu0 %v2831
    %2916 = vmatprep.subr.mxu0 0.0
    %2917 = vmatpush1.msra.mxu0 %v2832
    %2918 = vmatprep.subr.mxu0 0.0
    %2919 = vmatpush1.msra.mxu0 %v2833
    %2920 = vmatprep.subr.mxu0 0.0
    %2921 = vmatpush1.msra.mxu0 %v2834
    %2922 = vmatprep.mubr.f32.mxu0 %v2763
    %2923 = vmatmul.mubr.f32.gmra.mrb[0].mxu0 %v2795
    %v2924 = vpop.f32.mrb[0].mxu0
    %v2925 = vadd.f32 %v2856, %v2924
    %v2926 = vpop.f32.mrb[0].mxu0
    %2927 = vmatprep.mubr.f32.mxu0 %v2764
    %2928 = vmatmul.mubr.f32.gmra.mrb[0].mxu0 %v2796
    %v2929 = vpop.f32.mrb[0].mxu0
    %v2930 = vadd.f32 %v2856, %v2929
    %v2931 = vpop.f32.mrb[0].mxu0
    %2932 = vmatprep.mubr.f32.mxu0 %v2765
    %2933 = vmatmul.mubr.f32.gmra.mrb[0].mxu0 %v2797
    %v2934 = vpop.f32.mrb[0].mxu0
    %v2935 = vadd.f32 %v2856, %v2934
    %v2936 = vpop.f32.mrb[0].mxu0
    %2937 = vmatprep.mubr.f32.mxu0 %v2766
    %2938 = vmatmul.mubr.f32.gmra.mrb[0].mxu0 %v2798
    %v2939 = vpop.f32.mrb[0].mxu0
    %v2940 = vadd.f32 %v2856, %v2939
    %v2941 = vpop.f32.mrb[0].mxu0
    %2942 = vdwg.mxu0
    %2943 = vmatprep.subr.mxu0 0.0
    %2944 = vmatpush1.msra.mxu0 %v2835
    %2945 = vmatprep.subr.mxu0 0.0
    %2946 = vmatpush1.msra.mxu0 %v2836
    %2947 = vmatprep.subr.mxu0 0.0
    %2948 = vmatpush1.msra.mxu0 %v2837
    %2949 = vmatprep.subr.mxu0 0.0
    %2950 = vmatpush1.msra.mxu0 %v2838
    %2951 = vmatprep.subr.mxu0 0.0
    %2952 = vmatpush1.msra.mxu0 %v2839
    %2953 = vmatprep.subr.mxu0 0.0
    %2954 = vmatpush1.msra.mxu0 %v2840
    %2955 = vmatprep.subr.mxu0 0.0
    %2956 = vmatpush1.msra.mxu0 %v2841
    %2957 = vmatprep.subr.mxu0 0.0
    %2958 = vmatpush1.msra.mxu0 %v2842
    %2959 = vmatprep.subr.mxu0 0.0
    %2960 = vmatpush1.msra.mxu0 %v2843
    %2961 = vmatprep.subr.mxu0 0.0
    %2962 = vmatpush1.msra.mxu0 %v2844
    %2963 = vmatprep.subr.mxu0 0.0
    %2964 = vmatpush1.msra.mxu0 %v2845
    %2965 = vmatprep.subr.mxu0 0.0
    %2966 = vmatpush1.msra.mxu0 %v2846
    %2967 = vmatprep.subr.mxu0 0.0
    %2968 = vmatpush1.msra.mxu0 %v2847
    %2969 = vmatprep.subr.mxu0 0.0
    %2970 = vmatpush1.msra.mxu0 %v2848
    %2971 = vmatprep.subr.mxu0 0.0
    %2972 = vmatpush1.msra.mxu0 %v2849
    %2973 = vmatprep.subr.mxu0 0.0
    %2974 = vmatpush1.msra.mxu0 %v2850
    %2975 = vmatprep.subr.mxu0 0.0
    %2976 = vmatpush1.msra.mxu0 0.0
    %2977 = vmatprep.subr.mxu0 0.0
    %2978 = vmatpush1.msra.mxu0 0.0
    %2979 = vmatprep.subr.mxu0 0.0
    %2980 = vmatpush1.msra.mxu0 0.0
    %2981 = vmatprep.subr.mxu0 0.0
    %2982 = vmatpush1.msra.mxu0 0.0
    %2983 = vmatprep.subr.mxu0 0.0
    %2984 = vmatpush1.msra.mxu0 0.0
    %2985 = vmatprep.subr.mxu0 0.0
    %2986 = vmatpush1.msra.mxu0 0.0
    %2987 = vmatprep.subr.mxu0 0.0
    %2988 = vmatpush1.msra.mxu0 0.0
    %2989 = vmatprep.subr.mxu0 0.0
    %2990 = vmatpush1.msra.mxu0 0.0
    %2991 = vmatprep.subr.mxu0 0.0
    %2992 = vmatpush1.msra.mxu0 0.0
    %2993 = vmatprep.subr.mxu0 0.0
    %2994 = vmatpush1.msra.mxu0 0.0
    %2995 = vmatprep.subr.mxu0 0.0
    %2996 = vmatpush1.msra.mxu0 0.0
    %2997 = vmatprep.subr.mxu0 0.0
    %2998 = vmatpush1.msra.mxu0 0.0
    %2999 = vmatprep.subr.mxu0 0.0
    %3000 = vmatpush1.msra.mxu0 0.0
    %3001 = vmatprep.subr.mxu0 0.0
    %3002 = vmatpush1.msra.mxu0 0.0
    %3003 = vmatprep.subr.mxu0 0.0
    %3004 = vmatpush1.msra.mxu0 0.0
    %3005 = vmatprep.subr.mxu0 0.0
    %3006 = vmatpush1.msra.mxu0 0.0
    %3007 = vmatprep.mubr.f32.mxu0 0.0
    %3008 = vmatmul.mubr.f32.gmra.mrb[0].mxu0 %v2799
    %v3009 = vpop.f32.mrb[0].mxu0
    %v3010 = vadd.f32 %v2925, %v3009
    %v3011 = vpop.f32.mrb[0].mxu0
    %3012 = vmatprep.mubr.f32.mxu0 0.0
    %3013 = vmatmul.mubr.f32.gmra.mrb[0].mxu0 %v2800
    %v3014 = vpop.f32.mrb[0].mxu0
    %v3015 = vadd.f32 %v2930, %v3014
    %v3016 = vpop.f32.mrb[0].mxu0
    %3017 = vmatprep.mubr.f32.mxu0 0.0
    %3018 = vmatmul.mubr.f32.gmra.mrb[0].mxu0 %v2801
    %v3019 = vpop.f32.mrb[0].mxu0
    %v3020 = vadd.f32 %v2935, %v3019
    %v3021 = vpop.f32.mrb[0].mxu0
    %3022 = vmatprep.mubr.f32.mxu0 0.0
    %3023 = vmatmul.mubr.f32.gmra.mrb[0].mxu0 %v2802
    %v3024 = vpop.f32.mrb[0].mxu0
    %v3025 = vadd.f32 %v2940, %v3024
    %v3026 = vpop.f32.mrb[0].mxu0
    %3027 = vdwg.mxu0
    %v3028 = vmul.f32 %v3010, 0.5
    %v3029 = vmul.f32 %v3015, 0.5
    %v3030 = vmul.f32 %v3020, 0.5
    %v3031 = vmul.f32 %v3025, 0.5
    %v3032 = vmul.f32 %v3010, 0.70710677
    %v3033 = vmul.f32 %v3015, 0.70710677
    %v3034 = vmul.f32 %v3020, 0.70710677
    %v3035 = vmul.f32 %v3025, 0.70710677
    %vm3036 = vcmp.ge.f32.partialorder %v3032, 0.0
    %vm3037 = vcmp.ge.f32.partialorder %v3033, 0.0
    %vm3038 = vcmp.ge.f32.partialorder %v3034, 0.0
    %vm3039 = vcmp.ge.f32.partialorder %v3035, 0.0
    %v3040 = vsel %vm3036, 1.0, -1.0
    %v3041 = vsel %vm3037, 1.0, -1.0
    %v3042 = vsel %vm3038, 1.0, -1.0
    %v3043 = vsel %vm3039, 1.0, -1.0
    %v3044 = vand.u32 2147483647, %v3032
    %v3045 = vand.u32 2147483647, %v3033
    %v3046 = vand.u32 2147483647, %v3034
    %v3047 = vand.u32 2147483647, %v3035
    %v3048 = vmul.f32 %v3044, 0.3275911
    %v3049 = vmul.f32 %v3045, 0.3275911
    %v3050 = vmul.f32 %v3046, 0.3275911
    %v3051 = vmul.f32 %v3047, 0.3275911
    %v3052 = vadd.f32 %v3048, 1.0
    %v3053 = vadd.f32 %v3049, 1.0
    %v3054 = vadd.f32 %v3050, 1.0
    %v3055 = vadd.f32 %v3051, 1.0
    %v3056 = vrcp.pop %v3052
    %v3057 = vrcp.pop %v3053
    %v3058 = vrcp.pop %v3054
    %v3059 = vrcp.pop %v3055
    %v3060 = vmul.f32 %v3052, %v3056
    %v3061 = vmul.f32 %v3053, %v3057
    %v3062 = vmul.f32 %v3054, %v3058
    %v3063 = vmul.f32 %v3055, %v3059
    %v3064 = vsub.f32 2.0, %v3060
    %v3065 = vsub.f32 2.0, %v3061
    %v3066 = vsub.f32 2.0, %v3062
    %v3067 = vsub.f32 2.0, %v3063
    %v3068 = vmul.f32 %v3056, %v3064
    %v3069 = vmul.f32 %v3057, %v3065
    %v3070 = vmul.f32 %v3058, %v3066
    %v3071 = vmul.f32 %v3059, %v3067
    %v3072 = vmul.f32 %v3068, 1.0614054
    %v3073 = vmul.f32 %v3069, 1.0614054
    %v3074 = vmul.f32 %v3070, 1.0614054
    %v3075 = vmul.f32 %v3071, 1.0614054
    %v3076 = vadd.f32 %v3072, -1.4531521
    %v3077 = vadd.f32 %v3073, -1.4531521
    %v3078 = vadd.f32 %v3074, -1.4531521
    %v3079 = vadd.f32 %v3075, -1.4531521
    %v3080 = vmul.f32 %v3076, %v3068
    %v3081 = vmul.f32 %v3077, %v3069
    %v3082 = vmul.f32 %v3078, %v3070
    %v3083 = vmul.f32 %v3079, %v3071
    %v3084 = vadd.f32 %v3080, 1.4214138
    %v3085 = vadd.f32 %v3081, 1.4214138
    %v3086 = vadd.f32 %v3082, 1.4214138
    %v3087 = vadd.f32 %v3083, 1.4214138
    %v3088 = vmul.f32 %v3084, %v3068
    %v3089 = vmul.f32 %v3085, %v3069
    %v3090 = vmul.f32 %v3086, %v3070
    %v3091 = vmul.f32 %v3087, %v3071
    %v3092 = vadd.f32 %v3088, -0.28449672
    %v3093 = vadd.f32 %v3089, -0.28449672
    %v3094 = vadd.f32 %v3090, -0.28449672
    %v3095 = vadd.f32 %v3091, -0.28449672
    %v3096 = vmul.f32 %v3092, %v3068
    %v3097 = vmul.f32 %v3093, %v3069
    %v3098 = vmul.f32 %v3094, %v3070
    %v3099 = vmul.f32 %v3095, %v3071
    %v3100 = vadd.f32 %v3096, 0.2548296
    %v3101 = vadd.f32 %v3097, 0.2548296
    %v3102 = vadd.f32 %v3098, 0.2548296
    %v3103 = vadd.f32 %v3099, 0.2548296
    %v3104 = vmul.f32 %v3100, %v3068
    %v3105 = vmul.f32 %v3101, %v3069
    %v3106 = vmul.f32 %v3102, %v3070
    %v3107 = vmul.f32 %v3103, %v3071
    %v3108 = vsub.f32 0.0, %v3044
    %v3109 = vsub.f32 0.0, %v3045
    %v3110 = vsub.f32 0.0, %v3046
    %v3111 = vsub.f32 0.0, %v3047
    %v3112 = vmul.f32 %v3108, %v3044
    %v3113 = vmul.f32 %v3109, %v3045
    %v3114 = vmul.f32 %v3110, %v3046
    %v3115 = vmul.f32 %v3111, %v3047
    %v3116 = vmul.f32 %v3112, 1.442695
    %v3117 = vpow.pop %v3116
    %v3118 = vmul.f32 %v3113, 1.442695
    %v3119 = vpow.pop %v3118
    %v3120 = vmul.f32 %v3114, 1.442695
    %v3121 = vpow.pop %v3120
    %v3122 = vmul.f32 %v3115, 1.442695
    %v3123 = vpow.pop %v3122
    %v3124 = vmul.f32 %v3104, %v3117
    %v3125 = vmul.f32 %v3105, %v3119
    %v3126 = vmul.f32 %v3106, %v3121
    %v3127 = vmul.f32 %v3107, %v3123
    %v3128 = vsub.f32 1.0, %v3124
    %v3129 = vsub.f32 1.0, %v3125
    %v3130 = vsub.f32 1.0, %v3126
    %v3131 = vsub.f32 1.0, %v3127
    %v3132 = vmul.f32 %v3040, %v3128
    %v3133 = vmul.f32 %v3041, %v3129
    %v3134 = vmul.f32 %v3042, %v3130
    %v3135 = vmul.f32 %v3043, %v3131
    %v3136 = vadd.f32 %v3132, 1.0
    %v3137 = vadd.f32 %v3133, 1.0
    %v3138 = vadd.f32 %v3134, 1.0
    %v3139 = vadd.f32 %v3135, 1.0
    %v3140 = vmul.f32 %v3028, %v3136
    %v3141 = vmul.f32 %v3029, %v3137
    %v3142 = vmul.f32 %v3030, %v3138
    %v3143 = vmul.f32 %v3031, %v3139
    %v3144 = vadd.f32 %v3140, %v2268
    %v3145 = vadd.f32 %v3141, %v2269
    %v3146 = vadd.f32 %v3142, %v2270
    %v3147 = vadd.f32 %v3143, %v2271
    %3148 = vst [vmem:[#allocation11] sm:$0xff] %v3144
    %3149 = vst [vmem:[#allocation11 + $0x8] sm:$0xff] %v3145
    %3150 = vst [vmem:[#allocation11 + $0x10] sm:$0xff] %v3146
    %3151 = vst [vmem:[#allocation11 + $0x18] sm:$0xff] %v3147
    // Predicated region
    $region74: #{tpu_custom_call.1} parent=1 // pred_check
      _
    $region75: #{tpu_custom_call.1} parent=1 // pred_check_branch
      %3153 = sbr.rel (0) target = $region77
    $region76: #{tpu_custom_call.1} parent=1 // pred_region
      %s3155 = ssub.s32 512, 512
      %3156 = vsyncadd [#allocation4], %s3155
      %s3157 = sshll.u32 [#allocation11], 4
      %s3158 = int_to_ptr.vmem [resolvable:$true] %s3157
      %3163 = dma.vmem_to_hbm [thread:$0]  %s3158, 512, %s13, [#allocation4], 128, 128, 8
    $region77: #{tpu_custom_call.1} parent=1 // pred_fallthru
      _
    // Predicated region
    $region78: #{tpu_custom_call.1} parent=1 // pred_check
      _
    $region79: #{tpu_custom_call.1} parent=1 // pred_check_branch
      %3165 = sbr.rel (0) target = $region81
    $region80: #{tpu_custom_call.1} parent=1 // pred_region
      %3166 = dma.done [#allocation4], 512
    $region81: #{tpu_custom_call.1} parent=1 // pred_fallthru
      _
    %3167 = vsyncpa [#allocation3], 1
    %3168 = vsyncpa [#allocation6], 1
    %3169 = vsyncpa [#allocation9], 1
    %3170 = vsyncpa [#allocation4], 1

</llo_original>
